<compile_context>
chip_gen: v7x
topology: tpu7x:2x2x1
jax: 0.10.0
libtpu: 0.0.40
codegen_flags: <defaults>
</compile_context>

<pallas_src>
import jax
import jax.numpy as jnp
import numpy as np
from jax import lax
from jax.experimental import pallas as pl
from jax.experimental.pallas import tpu as pltpu


def dblock_kernel(x_ref, w1_ref, b1_ref, w2_ref, b2_ref, out_ref):
    """Single invocation: runs all R ResBlocks on the VMEM-resident weights."""
    H, L = out_ref.shape
    R = w1_ref.shape[0]
    md = w1_ref.dtype                                  # MXU operand dtype

    # Hoisted once: edge masks for the H-direction shifts.
    row = lax.broadcasted_iota(jnp.int32, (H, L), 0)
    not_top = row != 0
    not_bot = row != H - 1

    x = x_ref[...].astype(jnp.float32)                 # f32 carry, (H, L)

    # R = 8 is small; a static unrolled loop keeps all weight indices static.
    # TODO(synk): for large R switch to lax.fori_loop to bound live ranges.
    for r in range(R):
        h = jnp.maximum(x, 0.0)                        # ReLU (VPU, f32)

        # H-direction shifts via XLU rolls + edge masks.  The W/kx direction
        # and its zero padding are folded into the banded weights.
        h_up = jnp.where(not_top, pltpu.roll(h, shift=1, axis=0),
                         jnp.zeros_like(h))            # h[i-1]
        h_dn = jnp.where(not_bot, pltpu.roll(h, shift=H - 1, axis=0),
                         jnp.zeros_like(h))            # h[i+1]

        # 3x3 conv as three accumulating (L, L) matmuls — no im2col staging.
        acc = jnp.dot(h_up.astype(md), w1_ref[r, 0],
                      preferred_element_type=jnp.float32)
        acc = acc + jnp.dot(h.astype(md), w1_ref[r, 1],
                            preferred_element_type=jnp.float32)
        acc = acc + jnp.dot(h_dn.astype(md), w1_ref[r, 2],
                            preferred_element_type=jnp.float32)
        h1 = jnp.maximum(acc + b1_ref[r], 0.0)         # f32

        # 1x1 conv (block-diagonal weight) + residual add.
        h2 = jnp.dot(h1.astype(md), w2_ref[r],
                     preferred_element_type=jnp.float32) + b2_ref[r]
        x = x + h2

    out_ref[...] = x.astype(out_ref.dtype)


def _band_over_w(tap, W):
    """(3, C, C) ky-tap -> banded (W*C, W*C) matrix folding the kx loop + padding."""
    C = tap.shape[-1]
    M = np.zeros((W, C, W, C), np.float32)
    for w_out in range(W):
        for kx in range(3):
            w_in = w_out + kx - 1
            if 0 <= w_in < W:
                M[w_in, :, w_out, :] = tap[kx]
    return M.reshape(W * C, W * C)


def fold_params(params, N, W, mxu_dtype=jnp.bfloat16):
    """Host-side (numpy) expansion of ResBlock weights to the folded
    (H, N*W*C) lane layout.  Run ONCE at parameter-load time, not per call."""
    w1, b1, w2, b2 = (np.asarray(p) for p in params)  # (R,3,3,C,C) (R,1,C) (R,C,C) (R,1,C)
    R = w1.shape[0]
    eye_n = np.eye(N, dtype=np.float32)
    eye_nw = np.eye(N * W, dtype=np.float32)

    w1_f = np.stack([
        np.stack([np.kron(eye_n, _band_over_w(w1[r, ky], W)) for ky in range(3)])
        for r in range(R)])                                        # (R, 3, L, L)
    w2_f = np.stack([np.kron(eye_nw, w2[r]) for r in range(R)])    # (R, L, L)
    b1_f = np.stack([np.tile(b1[r, 0], N * W) for r in range(R)])[:, None, :]  # (R,1,L)
    b2_f = np.stack([np.tile(b2[r, 0], N * W) for r in range(R)])[:, None, :]  # (R,1,L)

    return (jnp.asarray(w1_f, mxu_dtype), jnp.asarray(b1_f, jnp.float32),
            jnp.asarray(w2_f, mxu_dtype), jnp.asarray(b2_f, jnp.float32))


@jax.jit
def dblock_forward(x_nchw, w1_f, b1_f, w2_f, b2_f):
    """x_nchw: (N, C, H, W) float32.  (w1_f, b1_f, w2_f, b2_f) from fold_params."""
    N, C, H, W = x_nchw.shape
    L = N * W * C

    # NCHW -> folded lane-dense (H, N*W*C) layout.
    x_fold = jnp.transpose(x_nchw, (2, 0, 3, 1)).reshape(H, L)

    vmem = pl.BlockSpec(memory_space=pltpu.MemorySpace.VMEM)
    out = pl.pallas_call(
        dblock_kernel,
        out_shape=jax.ShapeDtypeStruct((H, L), jnp.float32),
        in_specs=[vmem, vmem, vmem, vmem, vmem],   # everything VMEM-resident
        out_specs=vmem,
    )(x_fold, w1_f, b1_f, w2_f, b2_f)

    return jnp.transpose(out.reshape(H, N, W, C), (1, 3, 0, 2))   # -> NCHW


def dblock_reference(x_nchw, params):
    """Pure-JAX reference for correctness checking."""
    w1, b1, w2, b2 = params
    x = jnp.transpose(x_nchw, (0, 2, 3, 1))
    for r in range(w1.shape[0]):
        h = jax.nn.relu(x)
        h = lax.conv_general_dilated(
            h, w1[r], window_strides=(1, 1), padding="SAME",
            dimension_numbers=("NHWC", "HWIO", "NHWC")) + b1[r, 0]
        h = jax.nn.relu(h)
        h = jnp.einsum("nhwc,co->nhwo", h, w2[r]) + b2[r, 0]
        x = x + h
    return jnp.transpose(x, (0, 3, 1, 2))


def make_params(key, channel, num_res):
    k1, k2, k3, k4 = jax.random.split(key, 4)
    w1 = jax.random.normal(k1, (num_res, 3, 3, channel, channel), jnp.float32) * 0.1
    b1 = jax.random.normal(k2, (num_res, 1, channel), jnp.float32) * 0.01
    w2 = jax.random.normal(k3, (num_res, channel, channel), jnp.float32) * 0.1
    b2 = jax.random.normal(k4, (num_res, 1, channel), jnp.float32) * 0.01
    return w1, b1, w2, b2


if __name__ == "__main__":
    N, C, H, W = 2, 4, 16, 16
    NUM_RES = 8

    key = jax.random.PRNGKey(0)
    kx, kp = jax.random.split(key)
    x = jax.random.normal(kx, (N, C, H, W), jnp.float32)
    params = make_params(kp, C, NUM_RES)

    y_ref = jax.block_until_ready(dblock_reference(x, params))

    # f32 MXU operands: tight tolerance validation of the kernel math.
    folded_f32 = fold_params(params, N, W, mxu_dtype=jnp.float32)
    y32 = jax.block_until_ready(dblock_forward(x, *folded_f32))
    assert y32.shape == (N, C, H, W)
    assert jnp.allclose(y32, y_ref, rtol=1e-4, atol=1e-4), (
        float(jnp.max(jnp.abs(y32 - y_ref))))

    # Default bf16 MXU operands (f32 accumulation + f32 carry): loose tolerance
    # to absorb bf16 rounding across 8 stacked residual blocks.
    folded_bf16 = fold_params(params, N, W)          # mxu_dtype=bfloat16 default
    y16 = jax.block_until_ready(dblock_forward(x, *folded_bf16))
    assert jnp.allclose(y16, y_ref, rtol=1e-1, atol=1e-1), (
        float(jnp.max(jnp.abs(y16 - y_ref))))

    print("KERNEL_OK")
</pallas_src>

<mosaic_0001>
module attributes {stable_mosaic.version = 11 : i64} {
  func.func @dblock_kernel(%arg0: memref<16x128xf32, #tpu.memory_space<vmem>>, %arg1: memref<8x3x128x128xf32, #tpu.memory_space<vmem>>, %arg2: memref<8x1x128xf32, #tpu.memory_space<vmem>>, %arg3: memref<8x128x128xf32, #tpu.memory_space<vmem>>, %arg4: memref<8x1x128xf32, #tpu.memory_space<vmem>>, %arg5: memref<16x128xf32, #tpu.memory_space<vmem>>) attributes {dimension_semantics = [], scalar_prefetch = 0 : i64, scratch_operands = 0 : i64, tpu.core_type = #tpu.core_type<tc>} {
    %0 = tpu.iota {dimensions = array<i32: 0>} : vector<16x128xi32>
    %c0_i32 = arith.constant 0 : i32
    %1 = vector.broadcast %c0_i32 : i32 to vector<16x128xi32>
    %2 = arith.cmpi ne, %0, %1 : vector<16x128xi32>
    %c15_i32 = arith.constant 15 : i32
    %3 = vector.broadcast %c15_i32 : i32 to vector<16x128xi32>
    %4 = arith.cmpi ne, %0, %3 : vector<16x128xi32>
    %c0 = arith.constant 0 : index
    %c0_0 = arith.constant 0 : index
    %5 = vector.load %arg0[%c0, %c0_0] : memref<16x128xf32, #tpu.memory_space<vmem>>, vector<16x128xf32>
    %cst = arith.constant 0.000000e+00 : f32
    %6 = vector.broadcast %cst : f32 to vector<16x128xf32>
    %7 = arith.maximumf %5, %6 : vector<16x128xf32>
    %c1_i32 = arith.constant 1 : i32
    %8 = tpu.dynamic_rotate %7 by %c1_i32 dim 0 : vector<16x128xf32>, i32 -> vector<16x128xf32>
    %cst_1 = arith.constant 0.000000e+00 : f32
    %9 = vector.broadcast %cst_1 : f32 to vector<16x128xf32>
    %10 = arith.select %2, %8, %9 : vector<16x128xi1>, vector<16x128xf32>
    %c15_i32_2 = arith.constant 15 : i32
    %11 = tpu.dynamic_rotate %7 by %c15_i32_2 dim 0 : vector<16x128xf32>, i32 -> vector<16x128xf32>
    %cst_3 = arith.constant 0.000000e+00 : f32
    %12 = vector.broadcast %cst_3 : f32 to vector<16x128xf32>
    %13 = arith.select %4, %11, %12 : vector<16x128xi1>, vector<16x128xf32>
    %c0_4 = arith.constant 0 : index
    %c0_5 = arith.constant 0 : index
    %c0_6 = arith.constant 0 : index
    %c0_7 = arith.constant 0 : index
    %14 = vector.load %arg1[%c0_4, %c0_5, %c0_6, %c0_7] : memref<8x3x128x128xf32, #tpu.memory_space<vmem>>, vector<1x1x128x128xf32>
    %15 = vector.shape_cast %14 : vector<1x1x128x128xf32> to vector<128x128xf32>
    %cst_8 = arith.constant dense<0.000000e+00> : vector<16x128xf32>
    %16 = tpu.matmul %10, %15, %cst_8 {dimension_numbers = #tpu.dot_dimension_numbers<[1], [0], [0], [1], [0, 0, 1, 1], [], []>} : vector<16x128xf32>, vector<128x128xf32>, vector<16x128xf32> -> vector<16x128xf32>
    %c0_9 = arith.constant 0 : index
    %c1 = arith.constant 1 : index
    %c0_10 = arith.constant 0 : index
    %c0_11 = arith.constant 0 : index
    %17 = vector.load %arg1[%c0_9, %c1, %c0_10, %c0_11] : memref<8x3x128x128xf32, #tpu.memory_space<vmem>>, vector<1x1x128x128xf32>
    %18 = vector.shape_cast %17 : vector<1x1x128x128xf32> to vector<128x128xf32>
    %cst_12 = arith.constant dense<0.000000e+00> : vector<16x128xf32>
    %19 = tpu.matmul %7, %18, %cst_12 {dimension_numbers = #tpu.dot_dimension_numbers<[1], [0], [0], [1], [0, 0, 1, 1], [], []>} : vector<16x128xf32>, vector<128x128xf32>, vector<16x128xf32> -> vector<16x128xf32>
    %20 = arith.addf %16, %19 : vector<16x128xf32>
    %c0_13 = arith.constant 0 : index
    %c2 = arith.constant 2 : index
    %c0_14 = arith.constant 0 : index
    %c0_15 = arith.constant 0 : index
    %21 = vector.load %arg1[%c0_13, %c2, %c0_14, %c0_15] : memref<8x3x128x128xf32, #tpu.memory_space<vmem>>, vector<1x1x128x128xf32>
    %22 = vector.shape_cast %21 : vector<1x1x128x128xf32> to vector<128x128xf32>
    %cst_16 = arith.constant dense<0.000000e+00> : vector<16x128xf32>
    %23 = tpu.matmul %13, %22, %cst_16 {dimension_numbers = #tpu.dot_dimension_numbers<[1], [0], [0], [1], [0, 0, 1, 1], [], []>} : vector<16x128xf32>, vector<128x128xf32>, vector<16x128xf32> -> vector<16x128xf32>
    %24 = arith.addf %20, %23 : vector<16x128xf32>
    %c0_17 = arith.constant 0 : index
    %c0_18 = arith.constant 0 : index
    %c0_19 = arith.constant 0 : index
    %25 = vector.load %arg2[%c0_17, %c0_18, %c0_19] : memref<8x1x128xf32, #tpu.memory_space<vmem>>, vector<1x1x128xf32>
    %26 = vector.shape_cast %25 : vector<1x1x128xf32> to vector<1x128xf32>
    %27 = vector.broadcast %26 : vector<1x128xf32> to vector<16x128xf32>
    %28 = arith.addf %24, %27 : vector<16x128xf32>
    %cst_20 = arith.constant 0.000000e+00 : f32
    %29 = vector.broadcast %cst_20 : f32 to vector<16x128xf32>
    %30 = arith.maximumf %28, %29 : vector<16x128xf32>
    %c0_21 = arith.constant 0 : index
    %c0_22 = arith.constant 0 : index
    %c0_23 = arith.constant 0 : index
    %31 = vector.load %arg3[%c0_21, %c0_22, %c0_23] : memref<8x128x128xf32, #tpu.memory_space<vmem>>, vector<1x128x128xf32>
    %32 = vector.shape_cast %31 : vector<1x128x128xf32> to vector<128x128xf32>
    %cst_24 = arith.constant dense<0.000000e+00> : vector<16x128xf32>
    %33 = tpu.matmul %30, %32, %cst_24 {dimension_numbers = #tpu.dot_dimension_numbers<[1], [0], [0], [1], [0, 0, 1, 1], [], []>} : vector<16x128xf32>, vector<128x128xf32>, vector<16x128xf32> -> vector<16x128xf32>
    %c0_25 = arith.constant 0 : index
    %c0_26 = arith.constant 0 : index
    %c0_27 = arith.constant 0 : index
    %34 = vector.load %arg4[%c0_25, %c0_26, %c0_27] : memref<8x1x128xf32, #tpu.memory_space<vmem>>, vector<1x1x128xf32>
    %35 = vector.shape_cast %34 : vector<1x1x128xf32> to vector<1x128xf32>
    %36 = vector.broadcast %35 : vector<1x128xf32> to vector<16x128xf32>
    %37 = arith.addf %33, %36 : vector<16x128xf32>
    %38 = arith.addf %5, %37 : vector<16x128xf32>
    %cst_28 = arith.constant 0.000000e+00 : f32
    %39 = vector.broadcast %cst_28 : f32 to vector<16x128xf32>
    %40 = arith.maximumf %38, %39 : vector<16x128xf32>
    %c1_i32_29 = arith.constant 1 : i32
    %41 = tpu.dynamic_rotate %40 by %c1_i32_29 dim 0 : vector<16x128xf32>, i32 -> vector<16x128xf32>
    %cst_30 = arith.constant 0.000000e+00 : f32
    %42 = vector.broadcast %cst_30 : f32 to vector<16x128xf32>
    %43 = arith.select %2, %41, %42 : vector<16x128xi1>, vector<16x128xf32>
    %c15_i32_31 = arith.constant 15 : i32
    %44 = tpu.dynamic_rotate %40 by %c15_i32_31 dim 0 : vector<16x128xf32>, i32 -> vector<16x128xf32>
    %cst_32 = arith.constant 0.000000e+00 : f32
    %45 = vector.broadcast %cst_32 : f32 to vector<16x128xf32>
    %46 = arith.select %4, %44, %45 : vector<16x128xi1>, vector<16x128xf32>
    %c1_33 = arith.constant 1 : index
    %c0_34 = arith.constant 0 : index
    %c0_35 = arith.constant 0 : index
    %c0_36 = arith.constant 0 : index
    %47 = vector.load %arg1[%c1_33, %c0_34, %c0_35, %c0_36] : memref<8x3x128x128xf32, #tpu.memory_space<vmem>>, vector<1x1x128x128xf32>
    %48 = vector.shape_cast %47 : vector<1x1x128x128xf32> to vector<128x128xf32>
    %cst_37 = arith.constant dense<0.000000e+00> : vector<16x128xf32>
    %49 = tpu.matmul %43, %48, %cst_37 {dimension_numbers = #tpu.dot_dimension_numbers<[1], [0], [0], [1], [0, 0, 1, 1], [], []>} : vector<16x128xf32>, vector<128x128xf32>, vector<16x128xf32> -> vector<16x128xf32>
    %c1_38 = arith.constant 1 : index
    %c1_39 = arith.constant 1 : index
    %c0_40 = arith.constant 0 : index
    %c0_41 = arith.constant 0 : index
    %50 = vector.load %arg1[%c1_38, %c1_39, %c0_40, %c0_41] : memref<8x3x128x128xf32, #tpu.memory_space<vmem>>, vector<1x1x128x128xf32>
    %51 = vector.shape_cast %50 : vector<1x1x128x128xf32> to vector<128x128xf32>
    %cst_42 = arith.constant dense<0.000000e+00> : vector<16x128xf32>
    %52 = tpu.matmul %40, %51, %cst_42 {dimension_numbers = #tpu.dot_dimension_numbers<[1], [0], [0], [1], [0, 0, 1, 1], [], []>} : vector<16x128xf32>, vector<128x128xf32>, vector<16x128xf32> -> vector<16x128xf32>
    %53 = arith.addf %49, %52 : vector<16x128xf32>
    %c1_43 = arith.constant 1 : index
    %c2_44 = arith.constant 2 : index
    %c0_45 = arith.constant 0 : index
    %c0_46 = arith.constant 0 : index
    %54 = vector.load %arg1[%c1_43, %c2_44, %c0_45, %c0_46] : memref<8x3x128x128xf32, #tpu.memory_space<vmem>>, vector<1x1x128x128xf32>
    %55 = vector.shape_cast %54 : vector<1x1x128x128xf32> to vector<128x128xf32>
    %cst_47 = arith.constant dense<0.000000e+00> : vector<16x128xf32>
    %56 = tpu.matmul %46, %55, %cst_47 {dimension_numbers = #tpu.dot_dimension_numbers<[1], [0], [0], [1], [0, 0, 1, 1], [], []>} : vector<16x128xf32>, vector<128x128xf32>, vector<16x128xf32> -> vector<16x128xf32>
    %57 = arith.addf %53, %56 : vector<16x128xf32>
    %c1_48 = arith.constant 1 : index
    %c0_49 = arith.constant 0 : index
    %c0_50 = arith.constant 0 : index
    %58 = vector.load %arg2[%c1_48, %c0_49, %c0_50] : memref<8x1x128xf32, #tpu.memory_space<vmem>>, vector<1x1x128xf32>
    %59 = vector.shape_cast %58 : vector<1x1x128xf32> to vector<1x128xf32>
    %60 = vector.broadcast %59 : vector<1x128xf32> to vector<16x128xf32>
    %61 = arith.addf %57, %60 : vector<16x128xf32>
    %cst_51 = arith.constant 0.000000e+00 : f32
    %62 = vector.broadcast %cst_51 : f32 to vector<16x128xf32>
    %63 = arith.maximumf %61, %62 : vector<16x128xf32>
    %c1_52 = arith.constant 1 : index
    %c0_53 = arith.constant 0 : index
    %c0_54 = arith.constant 0 : index
    %64 = vector.load %arg3[%c1_52, %c0_53, %c0_54] : memref<8x128x128xf32, #tpu.memory_space<vmem>>, vector<1x128x128xf32>
    %65 = vector.shape_cast %64 : vector<1x128x128xf32> to vector<128x128xf32>
    %cst_55 = arith.constant dense<0.000000e+00> : vector<16x128xf32>
    %66 = tpu.matmul %63, %65, %cst_55 {dimension_numbers = #tpu.dot_dimension_numbers<[1], [0], [0], [1], [0, 0, 1, 1], [], []>} : vector<16x128xf32>, vector<128x128xf32>, vector<16x128xf32> -> vector<16x128xf32>
    %c1_56 = arith.constant 1 : index
    %c0_57 = arith.constant 0 : index
    %c0_58 = arith.constant 0 : index
    %67 = vector.load %arg4[%c1_56, %c0_57, %c0_58] : memref<8x1x128xf32, #tpu.memory_space<vmem>>, vector<1x1x128xf32>
    %68 = vector.shape_cast %67 : vector<1x1x128xf32> to vector<1x128xf32>
    %69 = vector.broadcast %68 : vector<1x128xf32> to vector<16x128xf32>
    %70 = arith.addf %66, %69 : vector<16x128xf32>
    %71 = arith.addf %38, %70 : vector<16x128xf32>
    %cst_59 = arith.constant 0.000000e+00 : f32
    %72 = vector.broadcast %cst_59 : f32 to vector<16x128xf32>
    %73 = arith.maximumf %71, %72 : vector<16x128xf32>
    %c1_i32_60 = arith.constant 1 : i32
    %74 = tpu.dynamic_rotate %73 by %c1_i32_60 dim 0 : vector<16x128xf32>, i32 -> vector<16x128xf32>
    %cst_61 = arith.constant 0.000000e+00 : f32
    %75 = vector.broadcast %cst_61 : f32 to vector<16x128xf32>
    %76 = arith.select %2, %74, %75 : vector<16x128xi1>, vector<16x128xf32>
    %c15_i32_62 = arith.constant 15 : i32
    %77 = tpu.dynamic_rotate %73 by %c15_i32_62 dim 0 : vector<16x128xf32>, i32 -> vector<16x128xf32>
    %cst_63 = arith.constant 0.000000e+00 : f32
    %78 = vector.broadcast %cst_63 : f32 to vector<16x128xf32>
    %79 = arith.select %4, %77, %78 : vector<16x128xi1>, vector<16x128xf32>
    %c2_64 = arith.constant 2 : index
    %c0_65 = arith.constant 0 : index
    %c0_66 = arith.constant 0 : index
    %c0_67 = arith.constant 0 : index
    %80 = vector.load %arg1[%c2_64, %c0_65, %c0_66, %c0_67] : memref<8x3x128x128xf32, #tpu.memory_space<vmem>>, vector<1x1x128x128xf32>
    %81 = vector.shape_cast %80 : vector<1x1x128x128xf32> to vector<128x128xf32>
    %cst_68 = arith.constant dense<0.000000e+00> : vector<16x128xf32>
    %82 = tpu.matmul %76, %81, %cst_68 {dimension_numbers = #tpu.dot_dimension_numbers<[1], [0], [0], [1], [0, 0, 1, 1], [], []>} : vector<16x128xf32>, vector<128x128xf32>, vector<16x128xf32> -> vector<16x128xf32>
    %c2_69 = arith.constant 2 : index
    %c1_70 = arith.constant 1 : index
    %c0_71 = arith.constant 0 : index
    %c0_72 = arith.constant 0 : index
    %83 = vector.load %arg1[%c2_69, %c1_70, %c0_71, %c0_72] : memref<8x3x128x128xf32, #tpu.memory_space<vmem>>, vector<1x1x128x128xf32>
    %84 = vector.shape_cast %83 : vector<1x1x128x128xf32> to vector<128x128xf32>
    %cst_73 = arith.constant dense<0.000000e+00> : vector<16x128xf32>
    %85 = tpu.matmul %73, %84, %cst_73 {dimension_numbers = #tpu.dot_dimension_numbers<[1], [0], [0], [1], [0, 0, 1, 1], [], []>} : vector<16x128xf32>, vector<128x128xf32>, vector<16x128xf32> -> vector<16x128xf32>
    %86 = arith.addf %82, %85 : vector<16x128xf32>
    %c2_74 = arith.constant 2 : index
    %c2_75 = arith.constant 2 : index
    %c0_76 = arith.constant 0 : index
    %c0_77 = arith.constant 0 : index
    %87 = vector.load %arg1[%c2_74, %c2_75, %c0_76, %c0_77] : memref<8x3x128x128xf32, #tpu.memory_space<vmem>>, vector<1x1x128x128xf32>
    %88 = vector.shape_cast %87 : vector<1x1x128x128xf32> to vector<128x128xf32>
    %cst_78 = arith.constant dense<0.000000e+00> : vector<16x128xf32>
    %89 = tpu.matmul %79, %88, %cst_78 {dimension_numbers = #tpu.dot_dimension_numbers<[1], [0], [0], [1], [0, 0, 1, 1], [], []>} : vector<16x128xf32>, vector<128x128xf32>, vector<16x128xf32> -> vector<16x128xf32>
    %90 = arith.addf %86, %89 : vector<16x128xf32>
    %c2_79 = arith.constant 2 : index
    %c0_80 = arith.constant 0 : index
    %c0_81 = arith.constant 0 : index
    %91 = vector.load %arg2[%c2_79, %c0_80, %c0_81] : memref<8x1x128xf32, #tpu.memory_space<vmem>>, vector<1x1x128xf32>
    %92 = vector.shape_cast %91 : vector<1x1x128xf32> to vector<1x128xf32>
    %93 = vector.broadcast %92 : vector<1x128xf32> to vector<16x128xf32>
    %94 = arith.addf %90, %93 : vector<16x128xf32>
    %cst_82 = arith.constant 0.000000e+00 : f32
    %95 = vector.broadcast %cst_82 : f32 to vector<16x128xf32>
    %96 = arith.maximumf %94, %95 : vector<16x128xf32>
    %c2_83 = arith.constant 2 : index
    %c0_84 = arith.constant 0 : index
    %c0_85 = arith.constant 0 : index
    %97 = vector.load %arg3[%c2_83, %c0_84, %c0_85] : memref<8x128x128xf32, #tpu.memory_space<vmem>>, vector<1x128x128xf32>
    %98 = vector.shape_cast %97 : vector<1x128x128xf32> to vector<128x128xf32>
    %cst_86 = arith.constant dense<0.000000e+00> : vector<16x128xf32>
    %99 = tpu.matmul %96, %98, %cst_86 {dimension_numbers = #tpu.dot_dimension_numbers<[1], [0], [0], [1], [0, 0, 1, 1], [], []>} : vector<16x128xf32>, vector<128x128xf32>, vector<16x128xf32> -> vector<16x128xf32>
    %c2_87 = arith.constant 2 : index
    %c0_88 = arith.constant 0 : index
    %c0_89 = arith.constant 0 : index
    %100 = vector.load %arg4[%c2_87, %c0_88, %c0_89] : memref<8x1x128xf32, #tpu.memory_space<vmem>>, vector<1x1x128xf32>
    %101 = vector.shape_cast %100 : vector<1x1x128xf32> to vector<1x128xf32>
    %102 = vector.broadcast %101 : vector<1x128xf32> to vector<16x128xf32>
    %103 = arith.addf %99, %102 : vector<16x128xf32>
    %104 = arith.addf %71, %103 : vector<16x128xf32>
    %cst_90 = arith.constant 0.000000e+00 : f32
    %105 = vector.broadcast %cst_90 : f32 to vector<16x128xf32>
    %106 = arith.maximumf %104, %105 : vector<16x128xf32>
    %c1_i32_91 = arith.constant 1 : i32
    %107 = tpu.dynamic_rotate %106 by %c1_i32_91 dim 0 : vector<16x128xf32>, i32 -> vector<16x128xf32>
    %cst_92 = arith.constant 0.000000e+00 : f32
    %108 = vector.broadcast %cst_92 : f32 to vector<16x128xf32>
    %109 = arith.select %2, %107, %108 : vector<16x128xi1>, vector<16x128xf32>
    %c15_i32_93 = arith.constant 15 : i32
    %110 = tpu.dynamic_rotate %106 by %c15_i32_93 dim 0 : vector<16x128xf32>, i32 -> vector<16x128xf32>
    %cst_94 = arith.constant 0.000000e+00 : f32
    %111 = vector.broadcast %cst_94 : f32 to vector<16x128xf32>
    %112 = arith.select %4, %110, %111 : vector<16x128xi1>, vector<16x128xf32>
    %c3 = arith.constant 3 : index
    %c0_95 = arith.constant 0 : index
    %c0_96 = arith.constant 0 : index
    %c0_97 = arith.constant 0 : index
    %113 = vector.load %arg1[%c3, %c0_95, %c0_96, %c0_97] : memref<8x3x128x128xf32, #tpu.memory_space<vmem>>, vector<1x1x128x128xf32>
    %114 = vector.shape_cast %113 : vector<1x1x128x128xf32> to vector<128x128xf32>
    %cst_98 = arith.constant dense<0.000000e+00> : vector<16x128xf32>
    %115 = tpu.matmul %109, %114, %cst_98 {dimension_numbers = #tpu.dot_dimension_numbers<[1], [0], [0], [1], [0, 0, 1, 1], [], []>} : vector<16x128xf32>, vector<128x128xf32>, vector<16x128xf32> -> vector<16x128xf32>
    %c3_99 = arith.constant 3 : index
    %c1_100 = arith.constant 1 : index
    %c0_101 = arith.constant 0 : index
    %c0_102 = arith.constant 0 : index
    %116 = vector.load %arg1[%c3_99, %c1_100, %c0_101, %c0_102] : memref<8x3x128x128xf32, #tpu.memory_space<vmem>>, vector<1x1x128x128xf32>
    %117 = vector.shape_cast %116 : vector<1x1x128x128xf32> to vector<128x128xf32>
    %cst_103 = arith.constant dense<0.000000e+00> : vector<16x128xf32>
    %118 = tpu.matmul %106, %117, %cst_103 {dimension_numbers = #tpu.dot_dimension_numbers<[1], [0], [0], [1], [0, 0, 1, 1], [], []>} : vector<16x128xf32>, vector<128x128xf32>, vector<16x128xf32> -> vector<16x128xf32>
    %119 = arith.addf %115, %118 : vector<16x128xf32>
    %c3_104 = arith.constant 3 : index
    %c2_105 = arith.constant 2 : index
    %c0_106 = arith.constant 0 : index
    %c0_107 = arith.constant 0 : index
    %120 = vector.load %arg1[%c3_104, %c2_105, %c0_106, %c0_107] : memref<8x3x128x128xf32, #tpu.memory_space<vmem>>, vector<1x1x128x128xf32>
    %121 = vector.shape_cast %120 : vector<1x1x128x128xf32> to vector<128x128xf32>
    %cst_108 = arith.constant dense<0.000000e+00> : vector<16x128xf32>
    %122 = tpu.matmul %112, %121, %cst_108 {dimension_numbers = #tpu.dot_dimension_numbers<[1], [0], [0], [1], [0, 0, 1, 1], [], []>} : vector<16x128xf32>, vector<128x128xf32>, vector<16x128xf32> -> vector<16x128xf32>
    %123 = arith.addf %119, %122 : vector<16x128xf32>
    %c3_109 = arith.constant 3 : index
    %c0_110 = arith.constant 0 : index
    %c0_111 = arith.constant 0 : index
    %124 = vector.load %arg2[%c3_109, %c0_110, %c0_111] : memref<8x1x128xf32, #tpu.memory_space<vmem>>, vector<1x1x128xf32>
    %125 = vector.shape_cast %124 : vector<1x1x128xf32> to vector<1x128xf32>
    %126 = vector.broadcast %125 : vector<1x128xf32> to vector<16x128xf32>
    %127 = arith.addf %123, %126 : vector<16x128xf32>
    %cst_112 = arith.constant 0.000000e+00 : f32
    %128 = vector.broadcast %cst_112 : f32 to vector<16x128xf32>
    %129 = arith.maximumf %127, %128 : vector<16x128xf32>
    %c3_113 = arith.constant 3 : index
    %c0_114 = arith.constant 0 : index
    %c0_115 = arith.constant 0 : index
    %130 = vector.load %arg3[%c3_113, %c0_114, %c0_115] : memref<8x128x128xf32, #tpu.memory_space<vmem>>, vector<1x128x128xf32>
    %131 = vector.shape_cast %130 : vector<1x128x128xf32> to vector<128x128xf32>
    %cst_116 = arith.constant dense<0.000000e+00> : vector<16x128xf32>
    %132 = tpu.matmul %129, %131, %cst_116 {dimension_numbers = #tpu.dot_dimension_numbers<[1], [0], [0], [1], [0, 0, 1, 1], [], []>} : vector<16x128xf32>, vector<128x128xf32>, vector<16x128xf32> -> vector<16x128xf32>
    %c3_117 = arith.constant 3 : index
    %c0_118 = arith.constant 0 : index
    %c0_119 = arith.constant 0 : index
    %133 = vector.load %arg4[%c3_117, %c0_118, %c0_119] : memref<8x1x128xf32, #tpu.memory_space<vmem>>, vector<1x1x128xf32>
    %134 = vector.shape_cast %133 : vector<1x1x128xf32> to vector<1x128xf32>
    %135 = vector.broadcast %134 : vector<1x128xf32> to vector<16x128xf32>
    %136 = arith.addf %132, %135 : vector<16x128xf32>
    %137 = arith.addf %104, %136 : vector<16x128xf32>
    %cst_120 = arith.constant 0.000000e+00 : f32
    %138 = vector.broadcast %cst_120 : f32 to vector<16x128xf32>
    %139 = arith.maximumf %137, %138 : vector<16x128xf32>
    %c1_i32_121 = arith.constant 1 : i32
    %140 = tpu.dynamic_rotate %139 by %c1_i32_121 dim 0 : vector<16x128xf32>, i32 -> vector<16x128xf32>
    %cst_122 = arith.constant 0.000000e+00 : f32
    %141 = vector.broadcast %cst_122 : f32 to vector<16x128xf32>
    %142 = arith.select %2, %140, %141 : vector<16x128xi1>, vector<16x128xf32>
    %c15_i32_123 = arith.constant 15 : i32
    %143 = tpu.dynamic_rotate %139 by %c15_i32_123 dim 0 : vector<16x128xf32>, i32 -> vector<16x128xf32>
    %cst_124 = arith.constant 0.000000e+00 : f32
    %144 = vector.broadcast %cst_124 : f32 to vector<16x128xf32>
    %145 = arith.select %4, %143, %144 : vector<16x128xi1>, vector<16x128xf32>
    %c4 = arith.constant 4 : index
    %c0_125 = arith.constant 0 : index
    %c0_126 = arith.constant 0 : index
    %c0_127 = arith.constant 0 : index
    %146 = vector.load %arg1[%c4, %c0_125, %c0_126, %c0_127] : memref<8x3x128x128xf32, #tpu.memory_space<vmem>>, vector<1x1x128x128xf32>
    %147 = vector.shape_cast %146 : vector<1x1x128x128xf32> to vector<128x128xf32>
    %cst_128 = arith.constant dense<0.000000e+00> : vector<16x128xf32>
    %148 = tpu.matmul %142, %147, %cst_128 {dimension_numbers = #tpu.dot_dimension_numbers<[1], [0], [0], [1], [0, 0, 1, 1], [], []>} : vector<16x128xf32>, vector<128x128xf32>, vector<16x128xf32> -> vector<16x128xf32>
    %c4_129 = arith.constant 4 : index
    %c1_130 = arith.constant 1 : index
    %c0_131 = arith.constant 0 : index
    %c0_132 = arith.constant 0 : index
    %149 = vector.load %arg1[%c4_129, %c1_130, %c0_131, %c0_132] : memref<8x3x128x128xf32, #tpu.memory_space<vmem>>, vector<1x1x128x128xf32>
    %150 = vector.shape_cast %149 : vector<1x1x128x128xf32> to vector<128x128xf32>
    %cst_133 = arith.constant dense<0.000000e+00> : vector<16x128xf32>
    %151 = tpu.matmul %139, %150, %cst_133 {dimension_numbers = #tpu.dot_dimension_numbers<[1], [0], [0], [1], [0, 0, 1, 1], [], []>} : vector<16x128xf32>, vector<128x128xf32>, vector<16x128xf32> -> vector<16x128xf32>
    %152 = arith.addf %148, %151 : vector<16x128xf32>
    %c4_134 = arith.constant 4 : index
    %c2_135 = arith.constant 2 : index
    %c0_136 = arith.constant 0 : index
    %c0_137 = arith.constant 0 : index
    %153 = vector.load %arg1[%c4_134, %c2_135, %c0_136, %c0_137] : memref<8x3x128x128xf32, #tpu.memory_space<vmem>>, vector<1x1x128x128xf32>
    %154 = vector.shape_cast %153 : vector<1x1x128x128xf32> to vector<128x128xf32>
    %cst_138 = arith.constant dense<0.000000e+00> : vector<16x128xf32>
    %155 = tpu.matmul %145, %154, %cst_138 {dimension_numbers = #tpu.dot_dimension_numbers<[1], [0], [0], [1], [0, 0, 1, 1], [], []>} : vector<16x128xf32>, vector<128x128xf32>, vector<16x128xf32> -> vector<16x128xf32>
    %156 = arith.addf %152, %155 : vector<16x128xf32>
    %c4_139 = arith.constant 4 : index
    %c0_140 = arith.constant 0 : index
    %c0_141 = arith.constant 0 : index
    %157 = vector.load %arg2[%c4_139, %c0_140, %c0_141] : memref<8x1x128xf32, #tpu.memory_space<vmem>>, vector<1x1x128xf32>
    %158 = vector.shape_cast %157 : vector<1x1x128xf32> to vector<1x128xf32>
    %159 = vector.broadcast %158 : vector<1x128xf32> to vector<16x128xf32>
    %160 = arith.addf %156, %159 : vector<16x128xf32>
    %cst_142 = arith.constant 0.000000e+00 : f32
    %161 = vector.broadcast %cst_142 : f32 to vector<16x128xf32>
    %162 = arith.maximumf %160, %161 : vector<16x128xf32>
    %c4_143 = arith.constant 4 : index
    %c0_144 = arith.constant 0 : index
    %c0_145 = arith.constant 0 : index
    %163 = vector.load %arg3[%c4_143, %c0_144, %c0_145] : memref<8x128x128xf32, #tpu.memory_space<vmem>>, vector<1x128x128xf32>
    %164 = vector.shape_cast %163 : vector<1x128x128xf32> to vector<128x128xf32>
    %cst_146 = arith.constant dense<0.000000e+00> : vector<16x128xf32>
    %165 = tpu.matmul %162, %164, %cst_146 {dimension_numbers = #tpu.dot_dimension_numbers<[1], [0], [0], [1], [0, 0, 1, 1], [], []>} : vector<16x128xf32>, vector<128x128xf32>, vector<16x128xf32> -> vector<16x128xf32>
    %c4_147 = arith.constant 4 : index
    %c0_148 = arith.constant 0 : index
    %c0_149 = arith.constant 0 : index
    %166 = vector.load %arg4[%c4_147, %c0_148, %c0_149] : memref<8x1x128xf32, #tpu.memory_space<vmem>>, vector<1x1x128xf32>
    %167 = vector.shape_cast %166 : vector<1x1x128xf32> to vector<1x128xf32>
    %168 = vector.broadcast %167 : vector<1x128xf32> to vector<16x128xf32>
    %169 = arith.addf %165, %168 : vector<16x128xf32>
    %170 = arith.addf %137, %169 : vector<16x128xf32>
    %cst_150 = arith.constant 0.000000e+00 : f32
    %171 = vector.broadcast %cst_150 : f32 to vector<16x128xf32>
    %172 = arith.maximumf %170, %171 : vector<16x128xf32>
    %c1_i32_151 = arith.constant 1 : i32
    %173 = tpu.dynamic_rotate %172 by %c1_i32_151 dim 0 : vector<16x128xf32>, i32 -> vector<16x128xf32>
    %cst_152 = arith.constant 0.000000e+00 : f32
    %174 = vector.broadcast %cst_152 : f32 to vector<16x128xf32>
    %175 = arith.select %2, %173, %174 : vector<16x128xi1>, vector<16x128xf32>
    %c15_i32_153 = arith.constant 15 : i32
    %176 = tpu.dynamic_rotate %172 by %c15_i32_153 dim 0 : vector<16x128xf32>, i32 -> vector<16x128xf32>
    %cst_154 = arith.constant 0.000000e+00 : f32
    %177 = vector.broadcast %cst_154 : f32 to vector<16x128xf32>
    %178 = arith.select %4, %176, %177 : vector<16x128xi1>, vector<16x128xf32>
    %c5 = arith.constant 5 : index
    %c0_155 = arith.constant 0 : index
    %c0_156 = arith.constant 0 : index
    %c0_157 = arith.constant 0 : index
    %179 = vector.load %arg1[%c5, %c0_155, %c0_156, %c0_157] : memref<8x3x128x128xf32, #tpu.memory_space<vmem>>, vector<1x1x128x128xf32>
    %180 = vector.shape_cast %179 : vector<1x1x128x128xf32> to vector<128x128xf32>
    %cst_158 = arith.constant dense<0.000000e+00> : vector<16x128xf32>
    %181 = tpu.matmul %175, %180, %cst_158 {dimension_numbers = #tpu.dot_dimension_numbers<[1], [0], [0], [1], [0, 0, 1, 1], [], []>} : vector<16x128xf32>, vector<128x128xf32>, vector<16x128xf32> -> vector<16x128xf32>
    %c5_159 = arith.constant 5 : index
    %c1_160 = arith.constant 1 : index
    %c0_161 = arith.constant 0 : index
    %c0_162 = arith.constant 0 : index
    %182 = vector.load %arg1[%c5_159, %c1_160, %c0_161, %c0_162] : memref<8x3x128x128xf32, #tpu.memory_space<vmem>>, vector<1x1x128x128xf32>
    %183 = vector.shape_cast %182 : vector<1x1x128x128xf32> to vector<128x128xf32>
    %cst_163 = arith.constant dense<0.000000e+00> : vector<16x128xf32>
    %184 = tpu.matmul %172, %183, %cst_163 {dimension_numbers = #tpu.dot_dimension_numbers<[1], [0], [0], [1], [0, 0, 1, 1], [], []>} : vector<16x128xf32>, vector<128x128xf32>, vector<16x128xf32> -> vector<16x128xf32>
    %185 = arith.addf %181, %184 : vector<16x128xf32>
    %c5_164 = arith.constant 5 : index
    %c2_165 = arith.constant 2 : index
    %c0_166 = arith.constant 0 : index
    %c0_167 = arith.constant 0 : index
    %186 = vector.load %arg1[%c5_164, %c2_165, %c0_166, %c0_167] : memref<8x3x128x128xf32, #tpu.memory_space<vmem>>, vector<1x1x128x128xf32>
    %187 = vector.shape_cast %186 : vector<1x1x128x128xf32> to vector<128x128xf32>
    %cst_168 = arith.constant dense<0.000000e+00> : vector<16x128xf32>
    %188 = tpu.matmul %178, %187, %cst_168 {dimension_numbers = #tpu.dot_dimension_numbers<[1], [0], [0], [1], [0, 0, 1, 1], [], []>} : vector<16x128xf32>, vector<128x128xf32>, vector<16x128xf32> -> vector<16x128xf32>
    %189 = arith.addf %185, %188 : vector<16x128xf32>
    %c5_169 = arith.constant 5 : index
    %c0_170 = arith.constant 0 : index
    %c0_171 = arith.constant 0 : index
    %190 = vector.load %arg2[%c5_169, %c0_170, %c0_171] : memref<8x1x128xf32, #tpu.memory_space<vmem>>, vector<1x1x128xf32>
    %191 = vector.shape_cast %190 : vector<1x1x128xf32> to vector<1x128xf32>
    %192 = vector.broadcast %191 : vector<1x128xf32> to vector<16x128xf32>
    %193 = arith.addf %189, %192 : vector<16x128xf32>
    %cst_172 = arith.constant 0.000000e+00 : f32
    %194 = vector.broadcast %cst_172 : f32 to vector<16x128xf32>
    %195 = arith.maximumf %193, %194 : vector<16x128xf32>
    %c5_173 = arith.constant 5 : index
    %c0_174 = arith.constant 0 : index
    %c0_175 = arith.constant 0 : index
    %196 = vector.load %arg3[%c5_173, %c0_174, %c0_175] : memref<8x128x128xf32, #tpu.memory_space<vmem>>, vector<1x128x128xf32>
    %197 = vector.shape_cast %196 : vector<1x128x128xf32> to vector<128x128xf32>
    %cst_176 = arith.constant dense<0.000000e+00> : vector<16x128xf32>
    %198 = tpu.matmul %195, %197, %cst_176 {dimension_numbers = #tpu.dot_dimension_numbers<[1], [0], [0], [1], [0, 0, 1, 1], [], []>} : vector<16x128xf32>, vector<128x128xf32>, vector<16x128xf32> -> vector<16x128xf32>
    %c5_177 = arith.constant 5 : index
    %c0_178 = arith.constant 0 : index
    %c0_179 = arith.constant 0 : index
    %199 = vector.load %arg4[%c5_177, %c0_178, %c0_179] : memref<8x1x128xf32, #tpu.memory_space<vmem>>, vector<1x1x128xf32>
    %200 = vector.shape_cast %199 : vector<1x1x128xf32> to vector<1x128xf32>
    %201 = vector.broadcast %200 : vector<1x128xf32> to vector<16x128xf32>
    %202 = arith.addf %198, %201 : vector<16x128xf32>
    %203 = arith.addf %170, %202 : vector<16x128xf32>
    %cst_180 = arith.constant 0.000000e+00 : f32
    %204 = vector.broadcast %cst_180 : f32 to vector<16x128xf32>
    %205 = arith.maximumf %203, %204 : vector<16x128xf32>
    %c1_i32_181 = arith.constant 1 : i32
    %206 = tpu.dynamic_rotate %205 by %c1_i32_181 dim 0 : vector<16x128xf32>, i32 -> vector<16x128xf32>
    %cst_182 = arith.constant 0.000000e+00 : f32
    %207 = vector.broadcast %cst_182 : f32 to vector<16x128xf32>
    %208 = arith.select %2, %206, %207 : vector<16x128xi1>, vector<16x128xf32>
    %c15_i32_183 = arith.constant 15 : i32
    %209 = tpu.dynamic_rotate %205 by %c15_i32_183 dim 0 : vector<16x128xf32>, i32 -> vector<16x128xf32>
    %cst_184 = arith.constant 0.000000e+00 : f32
    %210 = vector.broadcast %cst_184 : f32 to vector<16x128xf32>
    %211 = arith.select %4, %209, %210 : vector<16x128xi1>, vector<16x128xf32>
    %c6 = arith.constant 6 : index
    %c0_185 = arith.constant 0 : index
    %c0_186 = arith.constant 0 : index
    %c0_187 = arith.constant 0 : index
    %212 = vector.load %arg1[%c6, %c0_185, %c0_186, %c0_187] : memref<8x3x128x128xf32, #tpu.memory_space<vmem>>, vector<1x1x128x128xf32>
    %213 = vector.shape_cast %212 : vector<1x1x128x128xf32> to vector<128x128xf32>
    %cst_188 = arith.constant dense<0.000000e+00> : vector<16x128xf32>
    %214 = tpu.matmul %208, %213, %cst_188 {dimension_numbers = #tpu.dot_dimension_numbers<[1], [0], [0], [1], [0, 0, 1, 1], [], []>} : vector<16x128xf32>, vector<128x128xf32>, vector<16x128xf32> -> vector<16x128xf32>
    %c6_189 = arith.constant 6 : index
    %c1_190 = arith.constant 1 : index
    %c0_191 = arith.constant 0 : index
    %c0_192 = arith.constant 0 : index
    %215 = vector.load %arg1[%c6_189, %c1_190, %c0_191, %c0_192] : memref<8x3x128x128xf32, #tpu.memory_space<vmem>>, vector<1x1x128x128xf32>
    %216 = vector.shape_cast %215 : vector<1x1x128x128xf32> to vector<128x128xf32>
    %cst_193 = arith.constant dense<0.000000e+00> : vector<16x128xf32>
    %217 = tpu.matmul %205, %216, %cst_193 {dimension_numbers = #tpu.dot_dimension_numbers<[1], [0], [0], [1], [0, 0, 1, 1], [], []>} : vector<16x128xf32>, vector<128x128xf32>, vector<16x128xf32> -> vector<16x128xf32>
    %218 = arith.addf %214, %217 : vector<16x128xf32>
    %c6_194 = arith.constant 6 : index
    %c2_195 = arith.constant 2 : index
    %c0_196 = arith.constant 0 : index
    %c0_197 = arith.constant 0 : index
    %219 = vector.load %arg1[%c6_194, %c2_195, %c0_196, %c0_197] : memref<8x3x128x128xf32, #tpu.memory_space<vmem>>, vector<1x1x128x128xf32>
    %220 = vector.shape_cast %219 : vector<1x1x128x128xf32> to vector<128x128xf32>
    %cst_198 = arith.constant dense<0.000000e+00> : vector<16x128xf32>
    %221 = tpu.matmul %211, %220, %cst_198 {dimension_numbers = #tpu.dot_dimension_numbers<[1], [0], [0], [1], [0, 0, 1, 1], [], []>} : vector<16x128xf32>, vector<128x128xf32>, vector<16x128xf32> -> vector<16x128xf32>
    %222 = arith.addf %218, %221 : vector<16x128xf32>
    %c6_199 = arith.constant 6 : index
    %c0_200 = arith.constant 0 : index
    %c0_201 = arith.constant 0 : index
    %223 = vector.load %arg2[%c6_199, %c0_200, %c0_201] : memref<8x1x128xf32, #tpu.memory_space<vmem>>, vector<1x1x128xf32>
    %224 = vector.shape_cast %223 : vector<1x1x128xf32> to vector<1x128xf32>
    %225 = vector.broadcast %224 : vector<1x128xf32> to vector<16x128xf32>
    %226 = arith.addf %222, %225 : vector<16x128xf32>
    %cst_202 = arith.constant 0.000000e+00 : f32
    %227 = vector.broadcast %cst_202 : f32 to vector<16x128xf32>
    %228 = arith.maximumf %226, %227 : vector<16x128xf32>
    %c6_203 = arith.constant 6 : index
    %c0_204 = arith.constant 0 : index
    %c0_205 = arith.constant 0 : index
    %229 = vector.load %arg3[%c6_203, %c0_204, %c0_205] : memref<8x128x128xf32, #tpu.memory_space<vmem>>, vector<1x128x128xf32>
    %230 = vector.shape_cast %229 : vector<1x128x128xf32> to vector<128x128xf32>
    %cst_206 = arith.constant dense<0.000000e+00> : vector<16x128xf32>
    %231 = tpu.matmul %228, %230, %cst_206 {dimension_numbers = #tpu.dot_dimension_numbers<[1], [0], [0], [1], [0, 0, 1, 1], [], []>} : vector<16x128xf32>, vector<128x128xf32>, vector<16x128xf32> -> vector<16x128xf32>
    %c6_207 = arith.constant 6 : index
    %c0_208 = arith.constant 0 : index
    %c0_209 = arith.constant 0 : index
    %232 = vector.load %arg4[%c6_207, %c0_208, %c0_209] : memref<8x1x128xf32, #tpu.memory_space<vmem>>, vector<1x1x128xf32>
    %233 = vector.shape_cast %232 : vector<1x1x128xf32> to vector<1x128xf32>
    %234 = vector.broadcast %233 : vector<1x128xf32> to vector<16x128xf32>
    %235 = arith.addf %231, %234 : vector<16x128xf32>
    %236 = arith.addf %203, %235 : vector<16x128xf32>
    %cst_210 = arith.constant 0.000000e+00 : f32
    %237 = vector.broadcast %cst_210 : f32 to vector<16x128xf32>
    %238 = arith.maximumf %236, %237 : vector<16x128xf32>
    %c1_i32_211 = arith.constant 1 : i32
    %239 = tpu.dynamic_rotate %238 by %c1_i32_211 dim 0 : vector<16x128xf32>, i32 -> vector<16x128xf32>
    %cst_212 = arith.constant 0.000000e+00 : f32
    %240 = vector.broadcast %cst_212 : f32 to vector<16x128xf32>
    %241 = arith.select %2, %239, %240 : vector<16x128xi1>, vector<16x128xf32>
    %c15_i32_213 = arith.constant 15 : i32
    %242 = tpu.dynamic_rotate %238 by %c15_i32_213 dim 0 : vector<16x128xf32>, i32 -> vector<16x128xf32>
    %cst_214 = arith.constant 0.000000e+00 : f32
    %243 = vector.broadcast %cst_214 : f32 to vector<16x128xf32>
    %244 = arith.select %4, %242, %243 : vector<16x128xi1>, vector<16x128xf32>
    %c7 = arith.constant 7 : index
    %c0_215 = arith.constant 0 : index
    %c0_216 = arith.constant 0 : index
    %c0_217 = arith.constant 0 : index
    %245 = vector.load %arg1[%c7, %c0_215, %c0_216, %c0_217] : memref<8x3x128x128xf32, #tpu.memory_space<vmem>>, vector<1x1x128x128xf32>
    %246 = vector.shape_cast %245 : vector<1x1x128x128xf32> to vector<128x128xf32>
    %cst_218 = arith.constant dense<0.000000e+00> : vector<16x128xf32>
    %247 = tpu.matmul %241, %246, %cst_218 {dimension_numbers = #tpu.dot_dimension_numbers<[1], [0], [0], [1], [0, 0, 1, 1], [], []>} : vector<16x128xf32>, vector<128x128xf32>, vector<16x128xf32> -> vector<16x128xf32>
    %c7_219 = arith.constant 7 : index
    %c1_220 = arith.constant 1 : index
    %c0_221 = arith.constant 0 : index
    %c0_222 = arith.constant 0 : index
    %248 = vector.load %arg1[%c7_219, %c1_220, %c0_221, %c0_222] : memref<8x3x128x128xf32, #tpu.memory_space<vmem>>, vector<1x1x128x128xf32>
    %249 = vector.shape_cast %248 : vector<1x1x128x128xf32> to vector<128x128xf32>
    %cst_223 = arith.constant dense<0.000000e+00> : vector<16x128xf32>
    %250 = tpu.matmul %238, %249, %cst_223 {dimension_numbers = #tpu.dot_dimension_numbers<[1], [0], [0], [1], [0, 0, 1, 1], [], []>} : vector<16x128xf32>, vector<128x128xf32>, vector<16x128xf32> -> vector<16x128xf32>
    %251 = arith.addf %247, %250 : vector<16x128xf32>
    %c7_224 = arith.constant 7 : index
    %c2_225 = arith.constant 2 : index
    %c0_226 = arith.constant 0 : index
    %c0_227 = arith.constant 0 : index
    %252 = vector.load %arg1[%c7_224, %c2_225, %c0_226, %c0_227] : memref<8x3x128x128xf32, #tpu.memory_space<vmem>>, vector<1x1x128x128xf32>
    %253 = vector.shape_cast %252 : vector<1x1x128x128xf32> to vector<128x128xf32>
    %cst_228 = arith.constant dense<0.000000e+00> : vector<16x128xf32>
    %254 = tpu.matmul %244, %253, %cst_228 {dimension_numbers = #tpu.dot_dimension_numbers<[1], [0], [0], [1], [0, 0, 1, 1], [], []>} : vector<16x128xf32>, vector<128x128xf32>, vector<16x128xf32> -> vector<16x128xf32>
    %255 = arith.addf %251, %254 : vector<16x128xf32>
    %c7_229 = arith.constant 7 : index
    %c0_230 = arith.constant 0 : index
    %c0_231 = arith.constant 0 : index
    %256 = vector.load %arg2[%c7_229, %c0_230, %c0_231] : memref<8x1x128xf32, #tpu.memory_space<vmem>>, vector<1x1x128xf32>
    %257 = vector.shape_cast %256 : vector<1x1x128xf32> to vector<1x128xf32>
    %258 = vector.broadcast %257 : vector<1x128xf32> to vector<16x128xf32>
    %259 = arith.addf %255, %258 : vector<16x128xf32>
    %cst_232 = arith.constant 0.000000e+00 : f32
    %260 = vector.broadcast %cst_232 : f32 to vector<16x128xf32>
    %261 = arith.maximumf %259, %260 : vector<16x128xf32>
    %c7_233 = arith.constant 7 : index
    %c0_234 = arith.constant 0 : index
    %c0_235 = arith.constant 0 : index
    %262 = vector.load %arg3[%c7_233, %c0_234, %c0_235] : memref<8x128x128xf32, #tpu.memory_space<vmem>>, vector<1x128x128xf32>
    %263 = vector.shape_cast %262 : vector<1x128x128xf32> to vector<128x128xf32>
    %cst_236 = arith.constant dense<0.000000e+00> : vector<16x128xf32>
    %264 = tpu.matmul %261, %263, %cst_236 {dimension_numbers = #tpu.dot_dimension_numbers<[1], [0], [0], [1], [0, 0, 1, 1], [], []>} : vector<16x128xf32>, vector<128x128xf32>, vector<16x128xf32> -> vector<16x128xf32>
    %c7_237 = arith.constant 7 : index
    %c0_238 = arith.constant 0 : index
    %c0_239 = arith.constant 0 : index
    %265 = vector.load %arg4[%c7_237, %c0_238, %c0_239] : memref<8x1x128xf32, #tpu.memory_space<vmem>>, vector<1x1x128xf32>
    %266 = vector.shape_cast %265 : vector<1x1x128xf32> to vector<1x128xf32>
    %267 = vector.broadcast %266 : vector<1x128xf32> to vector<16x128xf32>
    %268 = arith.addf %264, %267 : vector<16x128xf32>
    %269 = arith.addf %236, %268 : vector<16x128xf32>
    %c0_240 = arith.constant 0 : index
    %c0_241 = arith.constant 0 : index
    %270 = vector.load %arg5[%c0_240, %c0_241] : memref<16x128xf32, #tpu.memory_space<vmem>>, vector<16x128xf32>
    tpu.vector_store %arg5[%c0_240, %c0_241], %269 {strides = array<i32>} : memref<16x128xf32, #tpu.memory_space<vmem>>, vector<16x128xf32>,
    return
  }
}

</mosaic_0001>

<llo_original>
// kernel: dblock_forward.1
$region0: #{dblock_forward.1}
  #allocation0 [shape = 'u32[]', space=smem, size = 0x4, offset = 0x4, fixed_abs, tag = 'smem constant byte address 0x4 - core index']
  #allocation1 [shape = 'u32[144,128]{1,0:T(1,128)}', space=vmem, size = 0x12000, scoped, tag = 'internal scratch']
  %s0 = inlined_call_operand.vmem [shape: f32[16,128], index: 0, kind: input, shape index: {}]
  %s1 = inlined_call_operand.hbm [shape: f32[8,3,128,128], index: 1, kind: input, shape index: {}]
  %s2 = inlined_call_operand.hbm [shape: f32[8,1,128], index: 2, kind: input, shape index: {}]
  %s3 = inlined_call_operand.hbm [shape: f32[8,128,128], index: 3, kind: input, shape index: {}]
  %s4 = inlined_call_operand.hbm [shape: f32[8,1,128], index: 4, kind: input, shape index: {}]
  %s5 = inlined_call_operand.vmem [shape: f32[16,128], index: 5, kind: output, shape index: {}]
  %s6 = sld [smem:[#allocation0]]
  $region46: #{dblock_forward.1} parent=0
    _
  %s8 = ssub.s32 1, %s6
  %s9 = scalar_select 0, %s8, %s6
  $region1: #{dblock_forward.1} parent=0
    #allocation2 [shape = 'u8[1572864]{0}', space=vmem, size = 0x180000, scoped, tag = 'input window, operand 1, single buffered']
    #allocation3 [shape = 's32[1]{0}', space=sflag, size = 0x4, scoped, tag = 'scoped memory for dblock_forward.1']
    #allocation4 [shape = 'u8[4096]{0}', space=vmem, size = 0x1000, scoped, tag = 'input window, operand 2, single buffered']
    #allocation5 [shape = 's32[1]{0}', space=sflag, size = 0x4, scoped, tag = 'scoped memory for dblock_forward.1']
    #allocation6 [shape = 'u8[524288]{0}', space=vmem, size = 0x80000, scoped, tag = 'input window, operand 3, single buffered']
    #allocation7 [shape = 'u8[4096]{0}', space=vmem, size = 0x1000, scoped, tag = 'input window, operand 4, single buffered']
    #allocation8 [shape = 's32[1]{0}', space=sflag, size = 0x4, scoped, tag = 'scoped memory for dblock_forward.1']
    %10 = vsyncpa [#allocation3], 0
    %11 = vsyncpa [#allocation5], 0
    %12 = vsyncpa [#allocation8], 0
    // Predicated region
    $region2: #{dblock_forward.1} parent=1 // pred_check
      _
    $region3: #{dblock_forward.1} parent=1 // pred_check_branch
      %14 = sbr.rel (0) target = $region5
    $region4: #{dblock_forward.1} parent=1 // pred_region
      _
    $region5: #{dblock_forward.1} parent=1 // pred_fallthru
      _
    // Predicated region
    $region6: #{dblock_forward.1} parent=1 // pred_check
      _
    $region7: #{dblock_forward.1} parent=1 // pred_check_branch
      %16 = sbr.rel (0) target = $region9
    $region8: #{dblock_forward.1} parent=1 // pred_region
      %s18 = ssub.s32 49152, 49152
      %19 = vsyncadd [#allocation3], %s18
      %s20 = sshll.u32 [#allocation2], 4
      %s21 = int_to_ptr.vmem [resolvable:$true] %s20
      %26 = dma.hbm_to_vmem [thread:$0]  %s1, 49152, %s21, [#allocation3], 128, 128, 8
    $region9: #{dblock_forward.1} parent=1 // pred_fallthru
      _
    // Predicated region
    $region10: #{dblock_forward.1} parent=1 // pred_check
      _
    $region11: #{dblock_forward.1} parent=1 // pred_check_branch
      %28 = sbr.rel (0) target = $region13
    $region12: #{dblock_forward.1} parent=1 // pred_region
      %s30 = ssub.s32 128, 128
      %31 = vsyncadd [#allocation5], %s30
      %s32 = sshll.u32 [#allocation4], 4
      %s33 = int_to_ptr.vmem [resolvable:$true] %s32
      %38 = dma.hbm_to_vmem [thread:$0]  %s2, 128, %s33, [#allocation5], 16, 16, 1
    $region13: #{dblock_forward.1} parent=1 // pred_fallthru
      _
    // Predicated region
    $region14: #{dblock_forward.1} parent=1 // pred_check
      _
    $region15: #{dblock_forward.1} parent=1 // pred_check_branch
      %40 = sbr.rel (0) target = $region17
    $region16: #{dblock_forward.1} parent=1 // pred_region
      %s42 = ssub.s32 16384, 16384
      %43 = vsyncadd [#allocation5], %s42
      %s44 = sshll.u32 [#allocation6], 4
      %s45 = int_to_ptr.vmem [resolvable:$true] %s44
      %50 = dma.hbm_to_vmem [thread:$0]  %s3, 16384, %s45, [#allocation5], 128, 128, 8
    $region17: #{dblock_forward.1} parent=1 // pred_fallthru
      _
    // Predicated region
    $region18: #{dblock_forward.1} parent=1 // pred_check
      _
    $region19: #{dblock_forward.1} parent=1 // pred_check_branch
      %52 = sbr.rel (0) target = $region21
    $region20: #{dblock_forward.1} parent=1 // pred_region
      %s54 = ssub.s32 128, 128
      %55 = vsyncadd [#allocation8], %s54
      %s56 = sshll.u32 [#allocation7], 4
      %s57 = int_to_ptr.vmem [resolvable:$true] %s56
      %62 = dma.hbm_to_vmem [thread:$0]  %s4, 128, %s57, [#allocation8], 16, 16, 1
    $region21: #{dblock_forward.1} parent=1 // pred_fallthru
      _
    // Predicated region
    $region22: #{dblock_forward.1} parent=1 // pred_check
      _
    $region23: #{dblock_forward.1} parent=1 // pred_check_branch
      %64 = sbr.rel (0) target = $region25
    $region24: #{dblock_forward.1} parent=1 // pred_region
      %65 = dma.done [#allocation3], 49152
    $region25: #{dblock_forward.1} parent=1 // pred_fallthru
      _
    // Predicated region
    $region26: #{dblock_forward.1} parent=1 // pred_check
      _
    $region27: #{dblock_forward.1} parent=1 // pred_check_branch
      %67 = sbr.rel (0) target = $region29
    $region28: #{dblock_forward.1} parent=1 // pred_region
      %68 = dma.done [#allocation5], 128
    $region29: #{dblock_forward.1} parent=1 // pred_fallthru
      _
    // Predicated region
    $region30: #{dblock_forward.1} parent=1 // pred_check
      _
    $region31: #{dblock_forward.1} parent=1 // pred_check_branch
      %70 = sbr.rel (0) target = $region33
    $region32: #{dblock_forward.1} parent=1 // pred_region
      %71 = dma.done [#allocation5], 16384
    $region33: #{dblock_forward.1} parent=1 // pred_fallthru
      _
    // Predicated region
    $region34: #{dblock_forward.1} parent=1 // pred_check
      _
    $region35: #{dblock_forward.1} parent=1 // pred_check_branch
      %73 = sbr.rel (0) target = $region37
    $region36: #{dblock_forward.1} parent=1 // pred_region
      %74 = dma.done [#allocation8], 128
    $region37: #{dblock_forward.1} parent=1 // pred_fallthru
      _
    %v75 = vlaneseq
    %v76 = vshrl.u32 %v75, 7
    %v77 = vadd.s32 %v76, 8
    %vm78 = vcmp.ne.s32.totalorder %v76, 0
    %vm79 = vcmp.ne.s32.totalorder %v77, 0
    %vm80 = vcmp.ne.s32.totalorder %v76, 15
    %vm81 = vcmp.ne.s32.totalorder %v77, 15
    %v82 = vld [vmem:[%s0] sm:$0xff]
    %v83 = vld [vmem:[%s0 + $0x8] sm:$0xff]
    %v84 = vmax.f32 %v82, 0.0
    %v85 = vmax.f32 %v83, 0.0
    %v86 = vrot.slane %v84, 7
    %v87 = vrot.slane %v85, 7
    %vm88 = vcmp.lt.s32.totalorder %v76, 1
    %v89 = vsel %vm88, %v86, %v87
    %v90 = vsel %vm88, %v87, %v86
    %v91 = vsel %vm78, %v90, 0.0
    %v92 = vsel %vm79, %v89, 0.0
    %v93 = vrot.slane %v84, 1
    %v94 = vrot.slane %v85, 1
    %vm95 = vcmp.lt.s32.totalorder %v76, 7
    %v96 = vsel %vm95, %v93, %v94
    %v97 = vsel %vm95, %v94, %v93
    %v98 = vsel %vm80, %v96, 0.0
    %v99 = vsel %vm81, %v97, 0.0
    %v100 = vld [vmem:[#allocation2] sm:$0xff]
    %v101 = vld [vmem:[#allocation2 + $0x8] sm:$0xff]
    %v102 = vld [vmem:[#allocation2 + $0x10] sm:$0xff]
    %v103 = vld [vmem:[#allocation2 + $0x18] sm:$0xff]
    %v104 = vld [vmem:[#allocation2 + $0x20] sm:$0xff]
    %v105 = vld [vmem:[#allocation2 + $0x28] sm:$0xff]
    %v106 = vld [vmem:[#allocation2 + $0x30] sm:$0xff]
    %v107 = vld [vmem:[#allocation2 + $0x38] sm:$0xff]
    %v108 = vld [vmem:[#allocation2 + $0x40] sm:$0xff]
    %v109 = vld [vmem:[#allocation2 + $0x48] sm:$0xff]
    %v110 = vld [vmem:[#allocation2 + $0x50] sm:$0xff]
    %v111 = vld [vmem:[#allocation2 + $0x58] sm:$0xff]
    %v112 = vld [vmem:[#allocation2 + $0x60] sm:$0xff]
    %v113 = vld [vmem:[#allocation2 + $0x68] sm:$0xff]
    %v114 = vld [vmem:[#allocation2 + $0x70] sm:$0xff]
    %v115 = vld [vmem:[#allocation2 + $0x78] sm:$0xff]
    %s116 = scalar_lea.vmem [#allocation2], 128
    %v117 = vld [vmem:[%s116] sm:$0xff]
    %v118 = vld [vmem:[%s116 + $0x8] sm:$0xff]
    %v119 = vld [vmem:[%s116 + $0x10] sm:$0xff]
    %v120 = vld [vmem:[%s116 + $0x18] sm:$0xff]
    %v121 = vld [vmem:[%s116 + $0x20] sm:$0xff]
    %v122 = vld [vmem:[%s116 + $0x28] sm:$0xff]
    %v123 = vld [vmem:[%s116 + $0x30] sm:$0xff]
    %v124 = vld [vmem:[%s116 + $0x38] sm:$0xff]
    %v125 = vld [vmem:[%s116 + $0x40] sm:$0xff]
    %v126 = vld [vmem:[%s116 + $0x48] sm:$0xff]
    %v127 = vld [vmem:[%s116 + $0x50] sm:$0xff]
    %v128 = vld [vmem:[%s116 + $0x58] sm:$0xff]
    %v129 = vld [vmem:[%s116 + $0x60] sm:$0xff]
    %v130 = vld [vmem:[%s116 + $0x68] sm:$0xff]
    %v131 = vld [vmem:[%s116 + $0x70] sm:$0xff]
    %v132 = vld [vmem:[%s116 + $0x78] sm:$0xff]
    %133 = vmatprep.subr.mxu0 0.0
    %134 = vmatpush1.msra.mxu0 %v117
    %135 = vmatprep.subr.mxu0 0.0
    %136 = vmatpush1.msra.mxu0 %v118
    %137 = vmatprep.subr.mxu0 0.0
    %138 = vmatpush1.msra.mxu0 %v119
    %139 = vmatprep.subr.mxu0 0.0
    %140 = vmatpush1.msra.mxu0 %v120
    %141 = vmatprep.subr.mxu0 0.0
    %142 = vmatpush1.msra.mxu0 %v121
    %143 = vmatprep.subr.mxu0 0.0
    %144 = vmatpush1.msra.mxu0 %v122
    %145 = vmatprep.subr.mxu0 0.0
    %146 = vmatpush1.msra.mxu0 %v123
    %147 = vmatprep.subr.mxu0 0.0
    %148 = vmatpush1.msra.mxu0 %v124
    %149 = vmatprep.subr.mxu0 0.0
    %150 = vmatpush1.msra.mxu0 %v125
    %151 = vmatprep.subr.mxu0 0.0
    %152 = vmatpush1.msra.mxu0 %v126
    %153 = vmatprep.subr.mxu0 0.0
    %154 = vmatpush1.msra.mxu0 %v127
    %155 = vmatprep.subr.mxu0 0.0
    %156 = vmatpush1.msra.mxu0 %v128
    %157 = vmatprep.subr.mxu0 0.0
    %158 = vmatpush1.msra.mxu0 %v129
    %159 = vmatprep.subr.mxu0 0.0
    %160 = vmatpush1.msra.mxu0 %v130
    %161 = vmatprep.subr.mxu0 0.0
    %162 = vmatpush1.msra.mxu0 %v131
    %163 = vmatprep.subr.mxu0 0.0
    %164 = vmatpush1.msra.mxu0 %v132
    %165 = vmatprep.subr.mxu0 0.0
    %166 = vmatpush1.msra.mxu0 0.0
    %167 = vmatprep.subr.mxu0 0.0
    %168 = vmatpush1.msra.mxu0 0.0
    %169 = vmatprep.subr.mxu0 0.0
    %170 = vmatpush1.msra.mxu0 0.0
    %171 = vmatprep.subr.mxu0 0.0
    %172 = vmatpush1.msra.mxu0 0.0
    %173 = vmatprep.subr.mxu0 0.0
    %174 = vmatpush1.msra.mxu0 0.0
    %175 = vmatprep.subr.mxu0 0.0
    %176 = vmatpush1.msra.mxu0 0.0
    %177 = vmatprep.subr.mxu0 0.0
    %178 = vmatpush1.msra.mxu0 0.0
    %179 = vmatprep.subr.mxu0 0.0
    %180 = vmatpush1.msra.mxu0 0.0
    %181 = vmatprep.subr.mxu0 0.0
    %182 = vmatpush1.msra.mxu0 0.0
    %183 = vmatprep.subr.mxu0 0.0
    %184 = vmatpush1.msra.mxu0 0.0
    %185 = vmatprep.subr.mxu0 0.0
    %186 = vmatpush1.msra.mxu0 0.0
    %187 = vmatprep.subr.mxu0 0.0
    %188 = vmatpush1.msra.mxu0 0.0
    %189 = vmatprep.subr.mxu0 0.0
    %190 = vmatpush1.msra.mxu0 0.0
    %191 = vmatprep.subr.mxu0 0.0
    %192 = vmatpush1.msra.mxu0 0.0
    %193 = vmatprep.subr.mxu0 0.0
    %194 = vmatpush1.msra.mxu0 0.0
    %195 = vmatprep.subr.mxu0 0.0
    %196 = vmatpush1.msra.mxu0 0.0
    %197 = vmatprep.mubr.f32.mxu0 0.0
    %198 = vmatmul.mubr.f32.gmra.mrb[0].mxu0 %v84
    %v199 = vpop.f32.mrb[0].mxu0
    %v200 = vadd.f32 0.0, %v199
    %v201 = vpop.f32.mrb[0].mxu0
    %202 = vmatprep.mubr.f32.mxu0 0.0
    %203 = vmatmul.mubr.f32.gmra.mrb[0].mxu0 %v85
    %v204 = vpop.f32.mrb[0].mxu0
    %v205 = vadd.f32 0.0, %v204
    %v206 = vpop.f32.mrb[0].mxu0
    %207 = vdwg.mxu0
    %208 = vmatprep.subr.mxu0 0.0
    %209 = vmatpush1.msra.mxu0 %v100
    %210 = vmatprep.subr.mxu0 0.0
    %211 = vmatpush1.msra.mxu0 %v101
    %212 = vmatprep.subr.mxu0 0.0
    %213 = vmatpush1.msra.mxu0 %v102
    %214 = vmatprep.subr.mxu0 0.0
    %215 = vmatpush1.msra.mxu0 %v103
    %216 = vmatprep.subr.mxu0 0.0
    %217 = vmatpush1.msra.mxu0 %v104
    %218 = vmatprep.subr.mxu0 0.0
    %219 = vmatpush1.msra.mxu0 %v105
    %220 = vmatprep.subr.mxu0 0.0
    %221 = vmatpush1.msra.mxu0 %v106
    %222 = vmatprep.subr.mxu0 0.0
    %223 = vmatpush1.msra.mxu0 %v107
    %224 = vmatprep.subr.mxu0 0.0
    %225 = vmatpush1.msra.mxu0 %v108
    %226 = vmatprep.subr.mxu0 0.0
    %227 = vmatpush1.msra.mxu0 %v109
    %228 = vmatprep.subr.mxu0 0.0
    %229 = vmatpush1.msra.mxu0 %v110
    %230 = vmatprep.subr.mxu0 0.0
    %231 = vmatpush1.msra.mxu0 %v111
    %232 = vmatprep.subr.mxu0 0.0
    %233 = vmatpush1.msra.mxu0 %v112
    %234 = vmatprep.subr.mxu0 0.0
    %235 = vmatpush1.msra.mxu0 %v113
    %236 = vmatprep.subr.mxu0 0.0
    %237 = vmatpush1.msra.mxu0 %v114
    %238 = vmatprep.subr.mxu0 0.0
    %239 = vmatpush1.msra.mxu0 %v115
    %240 = vmatprep.subr.mxu0 0.0
    %241 = vmatpush1.msra.mxu0 0.0
    %242 = vmatprep.subr.mxu0 0.0
    %243 = vmatpush1.msra.mxu0 0.0
    %244 = vmatprep.subr.mxu0 0.0
    %245 = vmatpush1.msra.mxu0 0.0
    %246 = vmatprep.subr.mxu0 0.0
    %247 = vmatpush1.msra.mxu0 0.0
    %248 = vmatprep.subr.mxu0 0.0
    %249 = vmatpush1.msra.mxu0 0.0
    %250 = vmatprep.subr.mxu0 0.0
    %251 = vmatpush1.msra.mxu0 0.0
    %252 = vmatprep.subr.mxu0 0.0
    %253 = vmatpush1.msra.mxu0 0.0
    %254 = vmatprep.subr.mxu0 0.0
    %255 = vmatpush1.msra.mxu0 0.0
    %256 = vmatprep.subr.mxu0 0.0
    %257 = vmatpush1.msra.mxu0 0.0
    %258 = vmatprep.subr.mxu0 0.0
    %259 = vmatpush1.msra.mxu0 0.0
    %260 = vmatprep.subr.mxu0 0.0
    %261 = vmatpush1.msra.mxu0 0.0
    %262 = vmatprep.subr.mxu0 0.0
    %263 = vmatpush1.msra.mxu0 0.0
    %264 = vmatprep.subr.mxu0 0.0
    %265 = vmatpush1.msra.mxu0 0.0
    %266 = vmatprep.subr.mxu0 0.0
    %267 = vmatpush1.msra.mxu0 0.0
    %268 = vmatprep.subr.mxu0 0.0
    %269 = vmatpush1.msra.mxu0 0.0
    %270 = vmatprep.subr.mxu0 0.0
    %271 = vmatpush1.msra.mxu0 0.0
    %272 = vmatprep.mubr.f32.mxu0 0.0
    %273 = vmatmul.mubr.f32.gmra.mrb[0].mxu0 %v91
    %v274 = vpop.f32.mrb[0].mxu0
    %v275 = vadd.f32 %v200, %v274
    %v276 = vpop.f32.mrb[0].mxu0
    %277 = vmatprep.mubr.f32.mxu0 0.0
    %278 = vmatmul.mubr.f32.gmra.mrb[0].mxu0 %v92
    %v279 = vpop.f32.mrb[0].mxu0
    %v280 = vadd.f32 %v205, %v279
    %v281 = vpop.f32.mrb[0].mxu0
    %282 = vdwg.mxu0
    %s283 = scalar_lea.vmem [#allocation2], 256
    %v284 = vld [vmem:[%s283] sm:$0xff]
    %v285 = vld [vmem:[%s283 + $0x8] sm:$0xff]
    %v286 = vld [vmem:[%s283 + $0x10] sm:$0xff]
    %v287 = vld [vmem:[%s283 + $0x18] sm:$0xff]
    %v288 = vld [vmem:[%s283 + $0x20] sm:$0xff]
    %v289 = vld [vmem:[%s283 + $0x28] sm:$0xff]
    %v290 = vld [vmem:[%s283 + $0x30] sm:$0xff]
    %v291 = vld [vmem:[%s283 + $0x38] sm:$0xff]
    %v292 = vld [vmem:[%s283 + $0x40] sm:$0xff]
    %v293 = vld [vmem:[%s283 + $0x48] sm:$0xff]
    %v294 = vld [vmem:[%s283 + $0x50] sm:$0xff]
    %v295 = vld [vmem:[%s283 + $0x58] sm:$0xff]
    %v296 = vld [vmem:[%s283 + $0x60] sm:$0xff]
    %v297 = vld [vmem:[%s283 + $0x68] sm:$0xff]
    %v298 = vld [vmem:[%s283 + $0x70] sm:$0xff]
    %v299 = vld [vmem:[%s283 + $0x78] sm:$0xff]
    %300 = vmatprep.subr.mxu0 0.0
    %301 = vmatpush1.msra.mxu0 %v284
    %302 = vmatprep.subr.mxu0 0.0
    %303 = vmatpush1.msra.mxu0 %v285
    %304 = vmatprep.subr.mxu0 0.0
    %305 = vmatpush1.msra.mxu0 %v286
    %306 = vmatprep.subr.mxu0 0.0
    %307 = vmatpush1.msra.mxu0 %v287
    %308 = vmatprep.subr.mxu0 0.0
    %309 = vmatpush1.msra.mxu0 %v288
    %310 = vmatprep.subr.mxu0 0.0
    %311 = vmatpush1.msra.mxu0 %v289
    %312 = vmatprep.subr.mxu0 0.0
    %313 = vmatpush1.msra.mxu0 %v290
    %314 = vmatprep.subr.mxu0 0.0
    %315 = vmatpush1.msra.mxu0 %v291
    %316 = vmatprep.subr.mxu0 0.0
    %317 = vmatpush1.msra.mxu0 %v292
    %318 = vmatprep.subr.mxu0 0.0
    %319 = vmatpush1.msra.mxu0 %v293
    %320 = vmatprep.subr.mxu0 0.0
    %321 = vmatpush1.msra.mxu0 %v294
    %322 = vmatprep.subr.mxu0 0.0
    %323 = vmatpush1.msra.mxu0 %v295
    %324 = vmatprep.subr.mxu0 0.0
    %325 = vmatpush1.msra.mxu0 %v296
    %326 = vmatprep.subr.mxu0 0.0
    %327 = vmatpush1.msra.mxu0 %v297
    %328 = vmatprep.subr.mxu0 0.0
    %329 = vmatpush1.msra.mxu0 %v298
    %330 = vmatprep.subr.mxu0 0.0
    %331 = vmatpush1.msra.mxu0 %v299
    %332 = vmatprep.subr.mxu0 0.0
    %333 = vmatpush1.msra.mxu0 0.0
    %334 = vmatprep.subr.mxu0 0.0
    %335 = vmatpush1.msra.mxu0 0.0
    %336 = vmatprep.subr.mxu0 0.0
    %337 = vmatpush1.msra.mxu0 0.0
    %338 = vmatprep.subr.mxu0 0.0
    %339 = vmatpush1.msra.mxu0 0.0
    %340 = vmatprep.subr.mxu0 0.0
    %341 = vmatpush1.msra.mxu0 0.0
    %342 = vmatprep.subr.mxu0 0.0
    %343 = vmatpush1.msra.mxu0 0.0
    %344 = vmatprep.subr.mxu0 0.0
    %345 = vmatpush1.msra.mxu0 0.0
    %346 = vmatprep.subr.mxu0 0.0
    %347 = vmatpush1.msra.mxu0 0.0
    %348 = vmatprep.subr.mxu0 0.0
    %349 = vmatpush1.msra.mxu0 0.0
    %350 = vmatprep.subr.mxu0 0.0
    %351 = vmatpush1.msra.mxu0 0.0
    %352 = vmatprep.subr.mxu0 0.0
    %353 = vmatpush1.msra.mxu0 0.0
    %354 = vmatprep.subr.mxu0 0.0
    %355 = vmatpush1.msra.mxu0 0.0
    %356 = vmatprep.subr.mxu0 0.0
    %357 = vmatpush1.msra.mxu0 0.0
    %358 = vmatprep.subr.mxu0 0.0
    %359 = vmatpush1.msra.mxu0 0.0
    %360 = vmatprep.subr.mxu0 0.0
    %361 = vmatpush1.msra.mxu0 0.0
    %362 = vmatprep.subr.mxu0 0.0
    %363 = vmatpush1.msra.mxu0 0.0
    %364 = vmatprep.mubr.f32.mxu0 0.0
    %365 = vmatmul.mubr.f32.gmra.mrb[0].mxu0 %v98
    %v366 = vpop.f32.mrb[0].mxu0
    %v367 = vadd.f32 0.0, %v366
    %v368 = vpop.f32.mrb[0].mxu0
    %369 = vmatprep.mubr.f32.mxu0 0.0
    %370 = vmatmul.mubr.f32.gmra.mrb[0].mxu0 %v99
    %v371 = vpop.f32.mrb[0].mxu0
    %v372 = vadd.f32 0.0, %v371
    %v373 = vpop.f32.mrb[0].mxu0
    %374 = vdwg.mxu0
    %v375 = vadd.f32 %v275, %v367
    %v376 = vadd.f32 %v280, %v372
    %v377 = vld [vmem:[#allocation4] sm:$0x1]
    %v379 = vlaneseq
    %v380 = vshrl.u32 %v379, 7
    %v381 = vsub.s32 0, %v380
    %v382 = vrot.slane %v377, %v381
    %v384 = vadd.f32 %v375, %v382
    %v385 = vadd.f32 %v376, %v382
    %v386 = vmax.f32 %v384, 0.0
    %v387 = vmax.f32 %v385, 0.0
    %v388 = vld [vmem:[#allocation6] sm:$0xff]
    %v389 = vld [vmem:[#allocation6 + $0x8] sm:$0xff]
    %v390 = vld [vmem:[#allocation6 + $0x10] sm:$0xff]
    %v391 = vld [vmem:[#allocation6 + $0x18] sm:$0xff]
    %v392 = vld [vmem:[#allocation6 + $0x20] sm:$0xff]
    %v393 = vld [vmem:[#allocation6 + $0x28] sm:$0xff]
    %v394 = vld [vmem:[#allocation6 + $0x30] sm:$0xff]
    %v395 = vld [vmem:[#allocation6 + $0x38] sm:$0xff]
    %v396 = vld [vmem:[#allocation6 + $0x40] sm:$0xff]
    %v397 = vld [vmem:[#allocation6 + $0x48] sm:$0xff]
    %v398 = vld [vmem:[#allocation6 + $0x50] sm:$0xff]
    %v399 = vld [vmem:[#allocation6 + $0x58] sm:$0xff]
    %v400 = vld [vmem:[#allocation6 + $0x60] sm:$0xff]
    %v401 = vld [vmem:[#allocation6 + $0x68] sm:$0xff]
    %v402 = vld [vmem:[#allocation6 + $0x70] sm:$0xff]
    %v403 = vld [vmem:[#allocation6 + $0x78] sm:$0xff]
    %v404 = vld [vmem:[#allocation7] sm:$0x1]
    %v406 = vlaneseq
    %v407 = vshrl.u32 %v406, 7
    %v408 = vsub.s32 0, %v407
    %v409 = vrot.slane %v404, %v408
    %411 = vmatprep.subr.mxu0 0.0
    %412 = vmatpush1.msra.mxu0 %v388
    %413 = vmatprep.subr.mxu0 0.0
    %414 = vmatpush1.msra.mxu0 %v389
    %415 = vmatprep.subr.mxu0 0.0
    %416 = vmatpush1.msra.mxu0 %v390
    %417 = vmatprep.subr.mxu0 0.0
    %418 = vmatpush1.msra.mxu0 %v391
    %419 = vmatprep.subr.mxu0 0.0
    %420 = vmatpush1.msra.mxu0 %v392
    %421 = vmatprep.subr.mxu0 0.0
    %422 = vmatpush1.msra.mxu0 %v393
    %423 = vmatprep.subr.mxu0 0.0
    %424 = vmatpush1.msra.mxu0 %v394
    %425 = vmatprep.subr.mxu0 0.0
    %426 = vmatpush1.msra.mxu0 %v395
    %427 = vmatprep.subr.mxu0 0.0
    %428 = vmatpush1.msra.mxu0 %v396
    %429 = vmatprep.subr.mxu0 0.0
    %430 = vmatpush1.msra.mxu0 %v397
    %431 = vmatprep.subr.mxu0 0.0
    %432 = vmatpush1.msra.mxu0 %v398
    %433 = vmatprep.subr.mxu0 0.0
    %434 = vmatpush1.msra.mxu0 %v399
    %435 = vmatprep.subr.mxu0 0.0
    %436 = vmatpush1.msra.mxu0 %v400
    %437 = vmatprep.subr.mxu0 0.0
    %438 = vmatpush1.msra.mxu0 %v401
    %439 = vmatprep.subr.mxu0 0.0
    %440 = vmatpush1.msra.mxu0 %v402
    %441 = vmatprep.subr.mxu0 0.0
    %442 = vmatpush1.msra.mxu0 %v403
    %443 = vmatprep.subr.mxu0 0.0
    %444 = vmatpush1.msra.mxu0 0.0
    %445 = vmatprep.subr.mxu0 0.0
    %446 = vmatpush1.msra.mxu0 0.0
    %447 = vmatprep.subr.mxu0 0.0
    %448 = vmatpush1.msra.mxu0 0.0
    %449 = vmatprep.subr.mxu0 0.0
    %450 = vmatpush1.msra.mxu0 0.0
    %451 = vmatprep.subr.mxu0 0.0
    %452 = vmatpush1.msra.mxu0 0.0
    %453 = vmatprep.subr.mxu0 0.0
    %454 = vmatpush1.msra.mxu0 0.0
    %455 = vmatprep.subr.mxu0 0.0
    %456 = vmatpush1.msra.mxu0 0.0
    %457 = vmatprep.subr.mxu0 0.0
    %458 = vmatpush1.msra.mxu0 0.0
    %459 = vmatprep.subr.mxu0 0.0
    %460 = vmatpush1.msra.mxu0 0.0
    %461 = vmatprep.subr.mxu0 0.0
    %462 = vmatpush1.msra.mxu0 0.0
    %463 = vmatprep.subr.mxu0 0.0
    %464 = vmatpush1.msra.mxu0 0.0
    %465 = vmatprep.subr.mxu0 0.0
    %466 = vmatpush1.msra.mxu0 0.0
    %467 = vmatprep.subr.mxu0 0.0
    %468 = vmatpush1.msra.mxu0 0.0
    %469 = vmatprep.subr.mxu0 0.0
    %470 = vmatpush1.msra.mxu0 0.0
    %471 = vmatprep.subr.mxu0 0.0
    %472 = vmatpush1.msra.mxu0 0.0
    %473 = vmatprep.subr.mxu0 0.0
    %474 = vmatpush1.msra.mxu0 0.0
    %475 = vmatprep.mubr.f32.mxu0 0.0
    %476 = vmatmul.mubr.f32.gmra.mrb[0].mxu0 %v386
    %v477 = vpop.f32.mrb[0].mxu0
    %v478 = vadd.f32 %v409, %v477
    %v479 = vpop.f32.mrb[0].mxu0
    %480 = vmatprep.mubr.f32.mxu0 0.0
    %481 = vmatmul.mubr.f32.gmra.mrb[0].mxu0 %v387
    %v482 = vpop.f32.mrb[0].mxu0
    %v483 = vadd.f32 %v409, %v482
    %v484 = vpop.f32.mrb[0].mxu0
    %485 = vdwg.mxu0
    %v486 = vadd.f32 %v82, %v478
    %v487 = vadd.f32 %v83, %v483
    %v488 = vmax.f32 %v486, 0.0
    %v489 = vmax.f32 %v487, 0.0
    %v490 = vrot.slane %v488, 7
    %v491 = vrot.slane %v489, 7
    %v492 = vsel %vm88, %v490, %v491
    %v493 = vsel %vm88, %v491, %v490
    %v494 = vsel %vm78, %v493, 0.0
    %v495 = vsel %vm79, %v492, 0.0
    %v496 = vrot.slane %v488, 1
    %v497 = vrot.slane %v489, 1
    %v498 = vsel %vm95, %v496, %v497
    %v499 = vsel %vm95, %v497, %v496
    %v500 = vsel %vm80, %v498, 0.0
    %v501 = vsel %vm81, %v499, 0.0
    %s502 = scalar_lea.vmem [#allocation2], 384
    %v503 = vld [vmem:[%s502] sm:$0xff]
    %v504 = vld [vmem:[%s502 + $0x8] sm:$0xff]
    %v505 = vld [vmem:[%s502 + $0x10] sm:$0xff]
    %v506 = vld [vmem:[%s502 + $0x18] sm:$0xff]
    %v507 = vld [vmem:[%s502 + $0x20] sm:$0xff]
    %v508 = vld [vmem:[%s502 + $0x28] sm:$0xff]
    %v509 = vld [vmem:[%s502 + $0x30] sm:$0xff]
    %v510 = vld [vmem:[%s502 + $0x38] sm:$0xff]
    %v511 = vld [vmem:[%s502 + $0x40] sm:$0xff]
    %v512 = vld [vmem:[%s502 + $0x48] sm:$0xff]
    %v513 = vld [vmem:[%s502 + $0x50] sm:$0xff]
    %v514 = vld [vmem:[%s502 + $0x58] sm:$0xff]
    %v515 = vld [vmem:[%s502 + $0x60] sm:$0xff]
    %v516 = vld [vmem:[%s502 + $0x68] sm:$0xff]
    %v517 = vld [vmem:[%s502 + $0x70] sm:$0xff]
    %v518 = vld [vmem:[%s502 + $0x78] sm:$0xff]
    %s519 = scalar_lea.vmem [#allocation2], 512
    %v520 = vld [vmem:[%s519] sm:$0xff]
    %v521 = vld [vmem:[%s519 + $0x8] sm:$0xff]
    %v522 = vld [vmem:[%s519 + $0x10] sm:$0xff]
    %v523 = vld [vmem:[%s519 + $0x18] sm:$0xff]
    %v524 = vld [vmem:[%s519 + $0x20] sm:$0xff]
    %v525 = vld [vmem:[%s519 + $0x28] sm:$0xff]
    %v526 = vld [vmem:[%s519 + $0x30] sm:$0xff]
    %v527 = vld [vmem:[%s519 + $0x38] sm:$0xff]
    %v528 = vld [vmem:[%s519 + $0x40] sm:$0xff]
    %v529 = vld [vmem:[%s519 + $0x48] sm:$0xff]
    %v530 = vld [vmem:[%s519 + $0x50] sm:$0xff]
    %v531 = vld [vmem:[%s519 + $0x58] sm:$0xff]
    %v532 = vld [vmem:[%s519 + $0x60] sm:$0xff]
    %v533 = vld [vmem:[%s519 + $0x68] sm:$0xff]
    %v534 = vld [vmem:[%s519 + $0x70] sm:$0xff]
    %v535 = vld [vmem:[%s519 + $0x78] sm:$0xff]
    %536 = vmatprep.subr.mxu0 0.0
    %537 = vmatpush1.msra.mxu0 %v520
    %538 = vmatprep.subr.mxu0 0.0
    %539 = vmatpush1.msra.mxu0 %v521
    %540 = vmatprep.subr.mxu0 0.0
    %541 = vmatpush1.msra.mxu0 %v522
    %542 = vmatprep.subr.mxu0 0.0
    %543 = vmatpush1.msra.mxu0 %v523
    %544 = vmatprep.subr.mxu0 0.0
    %545 = vmatpush1.msra.mxu0 %v524
    %546 = vmatprep.subr.mxu0 0.0
    %547 = vmatpush1.msra.mxu0 %v525
    %548 = vmatprep.subr.mxu0 0.0
    %549 = vmatpush1.msra.mxu0 %v526
    %550 = vmatprep.subr.mxu0 0.0
    %551 = vmatpush1.msra.mxu0 %v527
    %552 = vmatprep.subr.mxu0 0.0
    %553 = vmatpush1.msra.mxu0 %v528
    %554 = vmatprep.subr.mxu0 0.0
    %555 = vmatpush1.msra.mxu0 %v529
    %556 = vmatprep.subr.mxu0 0.0
    %557 = vmatpush1.msra.mxu0 %v530
    %558 = vmatprep.subr.mxu0 0.0
    %559 = vmatpush1.msra.mxu0 %v531
    %560 = vmatprep.subr.mxu0 0.0
    %561 = vmatpush1.msra.mxu0 %v532
    %562 = vmatprep.subr.mxu0 0.0
    %563 = vmatpush1.msra.mxu0 %v533
    %564 = vmatprep.subr.mxu0 0.0
    %565 = vmatpush1.msra.mxu0 %v534
    %566 = vmatprep.subr.mxu0 0.0
    %567 = vmatpush1.msra.mxu0 %v535
    %568 = vmatprep.subr.mxu0 0.0
    %569 = vmatpush1.msra.mxu0 0.0
    %570 = vmatprep.subr.mxu0 0.0
    %571 = vmatpush1.msra.mxu0 0.0
    %572 = vmatprep.subr.mxu0 0.0
    %573 = vmatpush1.msra.mxu0 0.0
    %574 = vmatprep.subr.mxu0 0.0
    %575 = vmatpush1.msra.mxu0 0.0
    %576 = vmatprep.subr.mxu0 0.0
    %577 = vmatpush1.msra.mxu0 0.0
    %578 = vmatprep.subr.mxu0 0.0
    %579 = vmatpush1.msra.mxu0 0.0
    %580 = vmatprep.subr.mxu0 0.0
    %581 = vmatpush1.msra.mxu0 0.0
    %582 = vmatprep.subr.mxu0 0.0
    %583 = vmatpush1.msra.mxu0 0.0
    %584 = vmatprep.subr.mxu0 0.0
    %585 = vmatpush1.msra.mxu0 0.0
    %586 = vmatprep.subr.mxu0 0.0
    %587 = vmatpush1.msra.mxu0 0.0
    %588 = vmatprep.subr.mxu0 0.0
    %589 = vmatpush1.msra.mxu0 0.0
    %590 = vmatprep.subr.mxu0 0.0
    %591 = vmatpush1.msra.mxu0 0.0
    %592 = vmatprep.subr.mxu0 0.0
    %593 = vmatpush1.msra.mxu0 0.0
    %594 = vmatprep.subr.mxu0 0.0
    %595 = vmatpush1.msra.mxu0 0.0
    %596 = vmatprep.subr.mxu0 0.0
    %597 = vmatpush1.msra.mxu0 0.0
    %598 = vmatprep.subr.mxu0 0.0
    %599 = vmatpush1.msra.mxu0 0.0
    %600 = vmatprep.mubr.f32.mxu0 0.0
    %601 = vmatmul.mubr.f32.gmra.mrb[0].mxu0 %v488
    %v602 = vpop.f32.mrb[0].mxu0
    %v603 = vadd.f32 0.0, %v602
    %v604 = vpop.f32.mrb[0].mxu0
    %605 = vmatprep.mubr.f32.mxu0 0.0
    %606 = vmatmul.mubr.f32.gmra.mrb[0].mxu0 %v489
    %v607 = vpop.f32.mrb[0].mxu0
    %v608 = vadd.f32 0.0, %v607
    %v609 = vpop.f32.mrb[0].mxu0
    %610 = vdwg.mxu0
    %611 = vmatprep.subr.mxu0 0.0
    %612 = vmatpush1.msra.mxu0 %v503
    %613 = vmatprep.subr.mxu0 0.0
    %614 = vmatpush1.msra.mxu0 %v504
    %615 = vmatprep.subr.mxu0 0.0
    %616 = vmatpush1.msra.mxu0 %v505
    %617 = vmatprep.subr.mxu0 0.0
    %618 = vmatpush1.msra.mxu0 %v506
    %619 = vmatprep.subr.mxu0 0.0
    %620 = vmatpush1.msra.mxu0 %v507
    %621 = vmatprep.subr.mxu0 0.0
    %622 = vmatpush1.msra.mxu0 %v508
    %623 = vmatprep.subr.mxu0 0.0
    %624 = vmatpush1.msra.mxu0 %v509
    %625 = vmatprep.subr.mxu0 0.0
    %626 = vmatpush1.msra.mxu0 %v510
    %627 = vmatprep.subr.mxu0 0.0
    %628 = vmatpush1.msra.mxu0 %v511
    %629 = vmatprep.subr.mxu0 0.0
    %630 = vmatpush1.msra.mxu0 %v512
    %631 = vmatprep.subr.mxu0 0.0
    %632 = vmatpush1.msra.mxu0 %v513
    %633 = vmatprep.subr.mxu0 0.0
    %634 = vmatpush1.msra.mxu0 %v514
    %635 = vmatprep.subr.mxu0 0.0
    %636 = vmatpush1.msra.mxu0 %v515
    %637 = vmatprep.subr.mxu0 0.0
    %638 = vmatpush1.msra.mxu0 %v516
    %639 = vmatprep.subr.mxu0 0.0
    %640 = vmatpush1.msra.mxu0 %v517
    %641 = vmatprep.subr.mxu0 0.0
    %642 = vmatpush1.msra.mxu0 %v518
    %643 = vmatprep.subr.mxu0 0.0
    %644 = vmatpush1.msra.mxu0 0.0
    %645 = vmatprep.subr.mxu0 0.0
    %646 = vmatpush1.msra.mxu0 0.0
    %647 = vmatprep.subr.mxu0 0.0
    %648 = vmatpush1.msra.mxu0 0.0
    %649 = vmatprep.subr.mxu0 0.0
    %650 = vmatpush1.msra.mxu0 0.0
    %651 = vmatprep.subr.mxu0 0.0
    %652 = vmatpush1.msra.mxu0 0.0
    %653 = vmatprep.subr.mxu0 0.0
    %654 = vmatpush1.msra.mxu0 0.0
    %655 = vmatprep.subr.mxu0 0.0
    %656 = vmatpush1.msra.mxu0 0.0
    %657 = vmatprep.subr.mxu0 0.0
    %658 = vmatpush1.msra.mxu0 0.0
    %659 = vmatprep.subr.mxu0 0.0
    %660 = vmatpush1.msra.mxu0 0.0
    %661 = vmatprep.subr.mxu0 0.0
    %662 = vmatpush1.msra.mxu0 0.0
    %663 = vmatprep.subr.mxu0 0.0
    %664 = vmatpush1.msra.mxu0 0.0
    %665 = vmatprep.subr.mxu0 0.0
    %666 = vmatpush1.msra.mxu0 0.0
    %667 = vmatprep.subr.mxu0 0.0
    %668 = vmatpush1.msra.mxu0 0.0
    %669 = vmatprep.subr.mxu0 0.0
    %670 = vmatpush1.msra.mxu0 0.0
    %671 = vmatprep.subr.mxu0 0.0
    %672 = vmatpush1.msra.mxu0 0.0
    %673 = vmatprep.subr.mxu0 0.0
    %674 = vmatpush1.msra.mxu0 0.0
    %675 = vmatprep.mubr.f32.mxu0 0.0
    %676 = vmatmul.mubr.f32.gmra.mrb[0].mxu0 %v494
    %v677 = vpop.f32.mrb[0].mxu0
    %v678 = vadd.f32 %v603, %v677
    %v679 = vpop.f32.mrb[0].mxu0
    %680 = vmatprep.mubr.f32.mxu0 0.0
    %681 = vmatmul.mubr.f32.gmra.mrb[0].mxu0 %v495
    %v682 = vpop.f32.mrb[0].mxu0
    %v683 = vadd.f32 %v608, %v682
    %v684 = vpop.f32.mrb[0].mxu0
    %685 = vdwg.mxu0
    %s686 = scalar_lea.vmem [#allocation2], 640
    %v687 = vld [vmem:[%s686] sm:$0xff]
    %v688 = vld [vmem:[%s686 + $0x8] sm:$0xff]
    %v689 = vld [vmem:[%s686 + $0x10] sm:$0xff]
    %v690 = vld [vmem:[%s686 + $0x18] sm:$0xff]
    %v691 = vld [vmem:[%s686 + $0x20] sm:$0xff]
    %v692 = vld [vmem:[%s686 + $0x28] sm:$0xff]
    %v693 = vld [vmem:[%s686 + $0x30] sm:$0xff]
    %v694 = vld [vmem:[%s686 + $0x38] sm:$0xff]
    %v695 = vld [vmem:[%s686 + $0x40] sm:$0xff]
    %v696 = vld [vmem:[%s686 + $0x48] sm:$0xff]
    %v697 = vld [vmem:[%s686 + $0x50] sm:$0xff]
    %v698 = vld [vmem:[%s686 + $0x58] sm:$0xff]
    %v699 = vld [vmem:[%s686 + $0x60] sm:$0xff]
    %v700 = vld [vmem:[%s686 + $0x68] sm:$0xff]
    %v701 = vld [vmem:[%s686 + $0x70] sm:$0xff]
    %v702 = vld [vmem:[%s686 + $0x78] sm:$0xff]
    %703 = vmatprep.subr.mxu0 0.0
    %704 = vmatpush1.msra.mxu0 %v687
    %705 = vmatprep.subr.mxu0 0.0
    %706 = vmatpush1.msra.mxu0 %v688
    %707 = vmatprep.subr.mxu0 0.0
    %708 = vmatpush1.msra.mxu0 %v689
    %709 = vmatprep.subr.mxu0 0.0
    %710 = vmatpush1.msra.mxu0 %v690
    %711 = vmatprep.subr.mxu0 0.0
    %712 = vmatpush1.msra.mxu0 %v691
    %713 = vmatprep.subr.mxu0 0.0
    %714 = vmatpush1.msra.mxu0 %v692
    %715 = vmatprep.subr.mxu0 0.0
    %716 = vmatpush1.msra.mxu0 %v693
    %717 = vmatprep.subr.mxu0 0.0
    %718 = vmatpush1.msra.mxu0 %v694
    %719 = vmatprep.subr.mxu0 0.0
    %720 = vmatpush1.msra.mxu0 %v695
    %721 = vmatprep.subr.mxu0 0.0
    %722 = vmatpush1.msra.mxu0 %v696
    %723 = vmatprep.subr.mxu0 0.0
    %724 = vmatpush1.msra.mxu0 %v697
    %725 = vmatprep.subr.mxu0 0.0
    %726 = vmatpush1.msra.mxu0 %v698
    %727 = vmatprep.subr.mxu0 0.0
    %728 = vmatpush1.msra.mxu0 %v699
    %729 = vmatprep.subr.mxu0 0.0
    %730 = vmatpush1.msra.mxu0 %v700
    %731 = vmatprep.subr.mxu0 0.0
    %732 = vmatpush1.msra.mxu0 %v701
    %733 = vmatprep.subr.mxu0 0.0
    %734 = vmatpush1.msra.mxu0 %v702
    %735 = vmatprep.subr.mxu0 0.0
    %736 = vmatpush1.msra.mxu0 0.0
    %737 = vmatprep.subr.mxu0 0.0
    %738 = vmatpush1.msra.mxu0 0.0
    %739 = vmatprep.subr.mxu0 0.0
    %740 = vmatpush1.msra.mxu0 0.0
    %741 = vmatprep.subr.mxu0 0.0
    %742 = vmatpush1.msra.mxu0 0.0
    %743 = vmatprep.subr.mxu0 0.0
    %744 = vmatpush1.msra.mxu0 0.0
    %745 = vmatprep.subr.mxu0 0.0
    %746 = vmatpush1.msra.mxu0 0.0
    %747 = vmatprep.subr.mxu0 0.0
    %748 = vmatpush1.msra.mxu0 0.0
    %749 = vmatprep.subr.mxu0 0.0
    %750 = vmatpush1.msra.mxu0 0.0
    %751 = vmatprep.subr.mxu0 0.0
    %752 = vmatpush1.msra.mxu0 0.0
    %753 = vmatprep.subr.mxu0 0.0
    %754 = vmatpush1.msra.mxu0 0.0
    %755 = vmatprep.subr.mxu0 0.0
    %756 = vmatpush1.msra.mxu0 0.0
    %757 = vmatprep.subr.mxu0 0.0
    %758 = vmatpush1.msra.mxu0 0.0
    %759 = vmatprep.subr.mxu0 0.0
    %760 = vmatpush1.msra.mxu0 0.0
    %761 = vmatprep.subr.mxu0 0.0
    %762 = vmatpush1.msra.mxu0 0.0
    %763 = vmatprep.subr.mxu0 0.0
    %764 = vmatpush1.msra.mxu0 0.0
    %765 = vmatprep.subr.mxu0 0.0
    %766 = vmatpush1.msra.mxu0 0.0
    %767 = vmatprep.mubr.f32.mxu0 0.0
    %768 = vmatmul.mubr.f32.gmra.mrb[0].mxu0 %v500
    %v769 = vpop.f32.mrb[0].mxu0
    %v770 = vadd.f32 0.0, %v769
    %v771 = vpop.f32.mrb[0].mxu0
    %772 = vmatprep.mubr.f32.mxu0 0.0
    %773 = vmatmul.mubr.f32.gmra.mrb[0].mxu0 %v501
    %v774 = vpop.f32.mrb[0].mxu0
    %v775 = vadd.f32 0.0, %v774
    %v776 = vpop.f32.mrb[0].mxu0
    %777 = vdwg.mxu0
    %v778 = vadd.f32 %v678, %v770
    %v779 = vadd.f32 %v683, %v775
    %s780 = scalar_lea.vmem [#allocation4], 1
    %v781 = vld [vmem:[%s780] sm:$0x1]
    %v783 = vlaneseq
    %v784 = vshrl.u32 %v783, 7
    %v785 = vsub.s32 0, %v784
    %v786 = vrot.slane %v781, %v785
    %v788 = vadd.f32 %v778, %v786
    %v789 = vadd.f32 %v779, %v786
    %v790 = vmax.f32 %v788, 0.0
    %v791 = vmax.f32 %v789, 0.0
    %s792 = scalar_lea.vmem [#allocation6], 128
    %v793 = vld [vmem:[%s792] sm:$0xff]
    %v794 = vld [vmem:[%s792 + $0x8] sm:$0xff]
    %v795 = vld [vmem:[%s792 + $0x10] sm:$0xff]
    %v796 = vld [vmem:[%s792 + $0x18] sm:$0xff]
    %v797 = vld [vmem:[%s792 + $0x20] sm:$0xff]
    %v798 = vld [vmem:[%s792 + $0x28] sm:$0xff]
    %v799 = vld [vmem:[%s792 + $0x30] sm:$0xff]
    %v800 = vld [vmem:[%s792 + $0x38] sm:$0xff]
    %v801 = vld [vmem:[%s792 + $0x40] sm:$0xff]
    %v802 = vld [vmem:[%s792 + $0x48] sm:$0xff]
    %v803 = vld [vmem:[%s792 + $0x50] sm:$0xff]
    %v804 = vld [vmem:[%s792 + $0x58] sm:$0xff]
    %v805 = vld [vmem:[%s792 + $0x60] sm:$0xff]
    %v806 = vld [vmem:[%s792 + $0x68] sm:$0xff]
    %v807 = vld [vmem:[%s792 + $0x70] sm:$0xff]
    %v808 = vld [vmem:[%s792 + $0x78] sm:$0xff]
    %s809 = scalar_lea.vmem [#allocation7], 1
    %v810 = vld [vmem:[%s809] sm:$0x1]
    %v812 = vlaneseq
    %v813 = vshrl.u32 %v812, 7
    %v814 = vsub.s32 0, %v813
    %v815 = vrot.slane %v810, %v814
    %817 = vmatprep.subr.mxu0 0.0
    %818 = vmatpush1.msra.mxu0 %v793
    %819 = vmatprep.subr.mxu0 0.0
    %820 = vmatpush1.msra.mxu0 %v794
    %821 = vmatprep.subr.mxu0 0.0
    %822 = vmatpush1.msra.mxu0 %v795
    %823 = vmatprep.subr.mxu0 0.0
    %824 = vmatpush1.msra.mxu0 %v796
    %825 = vmatprep.subr.mxu0 0.0
    %826 = vmatpush1.msra.mxu0 %v797
    %827 = vmatprep.subr.mxu0 0.0
    %828 = vmatpush1.msra.mxu0 %v798
    %829 = vmatprep.subr.mxu0 0.0
    %830 = vmatpush1.msra.mxu0 %v799
    %831 = vmatprep.subr.mxu0 0.0
    %832 = vmatpush1.msra.mxu0 %v800
    %833 = vmatprep.subr.mxu0 0.0
    %834 = vmatpush1.msra.mxu0 %v801
    %835 = vmatprep.subr.mxu0 0.0
    %836 = vmatpush1.msra.mxu0 %v802
    %837 = vmatprep.subr.mxu0 0.0
    %838 = vmatpush1.msra.mxu0 %v803
    %839 = vmatprep.subr.mxu0 0.0
    %840 = vmatpush1.msra.mxu0 %v804
    %841 = vmatprep.subr.mxu0 0.0
    %842 = vmatpush1.msra.mxu0 %v805
    %843 = vmatprep.subr.mxu0 0.0
    %844 = vmatpush1.msra.mxu0 %v806
    %845 = vmatprep.subr.mxu0 0.0
    %846 = vmatpush1.msra.mxu0 %v807
    %847 = vmatprep.subr.mxu0 0.0
    %848 = vmatpush1.msra.mxu0 %v808
    %849 = vmatprep.subr.mxu0 0.0
    %850 = vmatpush1.msra.mxu0 0.0
    %851 = vmatprep.subr.mxu0 0.0
    %852 = vmatpush1.msra.mxu0 0.0
    %853 = vmatprep.subr.mxu0 0.0
    %854 = vmatpush1.msra.mxu0 0.0
    %855 = vmatprep.subr.mxu0 0.0
    %856 = vmatpush1.msra.mxu0 0.0
    %857 = vmatprep.subr.mxu0 0.0
    %858 = vmatpush1.msra.mxu0 0.0
    %859 = vmatprep.subr.mxu0 0.0
    %860 = vmatpush1.msra.mxu0 0.0
    %861 = vmatprep.subr.mxu0 0.0
    %862 = vmatpush1.msra.mxu0 0.0
    %863 = vmatprep.subr.mxu0 0.0
    %864 = vmatpush1.msra.mxu0 0.0
    %865 = vmatprep.subr.mxu0 0.0
    %866 = vmatpush1.msra.mxu0 0.0
    %867 = vmatprep.subr.mxu0 0.0
    %868 = vmatpush1.msra.mxu0 0.0
    %869 = vmatprep.subr.mxu0 0.0
    %870 = vmatpush1.msra.mxu0 0.0
    %871 = vmatprep.subr.mxu0 0.0
    %872 = vmatpush1.msra.mxu0 0.0
    %873 = vmatprep.subr.mxu0 0.0
    %874 = vmatpush1.msra.mxu0 0.0
    %875 = vmatprep.subr.mxu0 0.0
    %876 = vmatpush1.msra.mxu0 0.0
    %877 = vmatprep.subr.mxu0 0.0
    %878 = vmatpush1.msra.mxu0 0.0
    %879 = vmatprep.subr.mxu0 0.0
    %880 = vmatpush1.msra.mxu0 0.0
    %881 = vmatprep.mubr.f32.mxu0 0.0
    %882 = vmatmul.mubr.f32.gmra.mrb[0].mxu0 %v790
    %v883 = vpop.f32.mrb[0].mxu0
    %v884 = vadd.f32 %v815, %v883
    %v885 = vpop.f32.mrb[0].mxu0
    %886 = vmatprep.mubr.f32.mxu0 0.0
    %887 = vmatmul.mubr.f32.gmra.mrb[0].mxu0 %v791
    %v888 = vpop.f32.mrb[0].mxu0
    %v889 = vadd.f32 %v815, %v888
    %v890 = vpop.f32.mrb[0].mxu0
    %891 = vdwg.mxu0
    %v892 = vadd.f32 %v486, %v884
    %v893 = vadd.f32 %v487, %v889
    %v894 = vmax.f32 %v892, 0.0
    %v895 = vmax.f32 %v893, 0.0
    %v896 = vrot.slane %v894, 7
    %v897 = vrot.slane %v895, 7
    %v898 = vsel %vm88, %v896, %v897
    %v899 = vsel %vm88, %v897, %v896
    %v900 = vsel %vm78, %v899, 0.0
    %v901 = vsel %vm79, %v898, 0.0
    %v902 = vrot.slane %v894, 1
    %v903 = vrot.slane %v895, 1
    %v904 = vsel %vm95, %v902, %v903
    %v905 = vsel %vm95, %v903, %v902
    %v906 = vsel %vm80, %v904, 0.0
    %v907 = vsel %vm81, %v905, 0.0
    %s908 = scalar_lea.vmem [#allocation2], 768
    %v909 = vld [vmem:[%s908] sm:$0xff]
    %v910 = vld [vmem:[%s908 + $0x8] sm:$0xff]
    %v911 = vld [vmem:[%s908 + $0x10] sm:$0xff]
    %v912 = vld [vmem:[%s908 + $0x18] sm:$0xff]
    %v913 = vld [vmem:[%s908 + $0x20] sm:$0xff]
    %v914 = vld [vmem:[%s908 + $0x28] sm:$0xff]
    %v915 = vld [vmem:[%s908 + $0x30] sm:$0xff]
    %v916 = vld [vmem:[%s908 + $0x38] sm:$0xff]
    %v917 = vld [vmem:[%s908 + $0x40] sm:$0xff]
    %v918 = vld [vmem:[%s908 + $0x48] sm:$0xff]
    %v919 = vld [vmem:[%s908 + $0x50] sm:$0xff]
    %v920 = vld [vmem:[%s908 + $0x58] sm:$0xff]
    %v921 = vld [vmem:[%s908 + $0x60] sm:$0xff]
    %v922 = vld [vmem:[%s908 + $0x68] sm:$0xff]
    %v923 = vld [vmem:[%s908 + $0x70] sm:$0xff]
    %v924 = vld [vmem:[%s908 + $0x78] sm:$0xff]
    %s925 = scalar_lea.vmem [#allocation2], 896
    %v926 = vld [vmem:[%s925] sm:$0xff]
    %v927 = vld [vmem:[%s925 + $0x8] sm:$0xff]
    %v928 = vld [vmem:[%s925 + $0x10] sm:$0xff]
    %v929 = vld [vmem:[%s925 + $0x18] sm:$0xff]
    %v930 = vld [vmem:[%s925 + $0x20] sm:$0xff]
    %v931 = vld [vmem:[%s925 + $0x28] sm:$0xff]
    %v932 = vld [vmem:[%s925 + $0x30] sm:$0xff]
    %v933 = vld [vmem:[%s925 + $0x38] sm:$0xff]
    %v934 = vld [vmem:[%s925 + $0x40] sm:$0xff]
    %v935 = vld [vmem:[%s925 + $0x48] sm:$0xff]
    %v936 = vld [vmem:[%s925 + $0x50] sm:$0xff]
    %v937 = vld [vmem:[%s925 + $0x58] sm:$0xff]
    %v938 = vld [vmem:[%s925 + $0x60] sm:$0xff]
    %v939 = vld [vmem:[%s925 + $0x68] sm:$0xff]
    %v940 = vld [vmem:[%s925 + $0x70] sm:$0xff]
    %v941 = vld [vmem:[%s925 + $0x78] sm:$0xff]
    %942 = vmatprep.subr.mxu0 0.0
    %943 = vmatpush1.msra.mxu0 %v926
    %944 = vmatprep.subr.mxu0 0.0
    %945 = vmatpush1.msra.mxu0 %v927
    %946 = vmatprep.subr.mxu0 0.0
    %947 = vmatpush1.msra.mxu0 %v928
    %948 = vmatprep.subr.mxu0 0.0
    %949 = vmatpush1.msra.mxu0 %v929
    %950 = vmatprep.subr.mxu0 0.0
    %951 = vmatpush1.msra.mxu0 %v930
    %952 = vmatprep.subr.mxu0 0.0
    %953 = vmatpush1.msra.mxu0 %v931
    %954 = vmatprep.subr.mxu0 0.0
    %955 = vmatpush1.msra.mxu0 %v932
    %956 = vmatprep.subr.mxu0 0.0
    %957 = vmatpush1.msra.mxu0 %v933
    %958 = vmatprep.subr.mxu0 0.0
    %959 = vmatpush1.msra.mxu0 %v934
    %960 = vmatprep.subr.mxu0 0.0
    %961 = vmatpush1.msra.mxu0 %v935
    %962 = vmatprep.subr.mxu0 0.0
    %963 = vmatpush1.msra.mxu0 %v936
    %964 = vmatprep.subr.mxu0 0.0
    %965 = vmatpush1.msra.mxu0 %v937
    %966 = vmatprep.subr.mxu0 0.0
    %967 = vmatpush1.msra.mxu0 %v938
    %968 = vmatprep.subr.mxu0 0.0
    %969 = vmatpush1.msra.mxu0 %v939
    %970 = vmatprep.subr.mxu0 0.0
    %971 = vmatpush1.msra.mxu0 %v940
    %972 = vmatprep.subr.mxu0 0.0
    %973 = vmatpush1.msra.mxu0 %v941
    %974 = vmatprep.subr.mxu0 0.0
    %975 = vmatpush1.msra.mxu0 0.0
    %976 = vmatprep.subr.mxu0 0.0
    %977 = vmatpush1.msra.mxu0 0.0
    %978 = vmatprep.subr.mxu0 0.0
    %979 = vmatpush1.msra.mxu0 0.0
    %980 = vmatprep.subr.mxu0 0.0
    %981 = vmatpush1.msra.mxu0 0.0
    %982 = vmatprep.subr.mxu0 0.0
    %983 = vmatpush1.msra.mxu0 0.0
    %984 = vmatprep.subr.mxu0 0.0
    %985 = vmatpush1.msra.mxu0 0.0
    %986 = vmatprep.subr.mxu0 0.0
    %987 = vmatpush1.msra.mxu0 0.0
    %988 = vmatprep.subr.mxu0 0.0
    %989 = vmatpush1.msra.mxu0 0.0
    %990 = vmatprep.subr.mxu0 0.0
    %991 = vmatpush1.msra.mxu0 0.0
    %992 = vmatprep.subr.mxu0 0.0
    %993 = vmatpush1.msra.mxu0 0.0
    %994 = vmatprep.subr.mxu0 0.0
    %995 = vmatpush1.msra.mxu0 0.0
    %996 = vmatprep.subr.mxu0 0.0
    %997 = vmatpush1.msra.mxu0 0.0
    %998 = vmatprep.subr.mxu0 0.0
    %999 = vmatpush1.msra.mxu0 0.0
    %1000 = vmatprep.subr.mxu0 0.0
    %1001 = vmatpush1.msra.mxu0 0.0
    %1002 = vmatprep.subr.mxu0 0.0
    %1003 = vmatpush1.msra.mxu0 0.0
    %1004 = vmatprep.subr.mxu0 0.0
    %1005 = vmatpush1.msra.mxu0 0.0
    %1006 = vmatprep.mubr.f32.mxu0 0.0
    %1007 = vmatmul.mubr.f32.gmra.mrb[0].mxu0 %v894
    %v1008 = vpop.f32.mrb[0].mxu0
    %v1009 = vadd.f32 0.0, %v1008
    %v1010 = vpop.f32.mrb[0].mxu0
    %1011 = vmatprep.mubr.f32.mxu0 0.0
    %1012 = vmatmul.mubr.f32.gmra.mrb[0].mxu0 %v895
    %v1013 = vpop.f32.mrb[0].mxu0
    %v1014 = vadd.f32 0.0, %v1013
    %v1015 = vpop.f32.mrb[0].mxu0
    %1016 = vdwg.mxu0
    %1017 = vmatprep.subr.mxu0 0.0
    %1018 = vmatpush1.msra.mxu0 %v909
    %1019 = vmatprep.subr.mxu0 0.0
    %1020 = vmatpush1.msra.mxu0 %v910
    %1021 = vmatprep.subr.mxu0 0.0
    %1022 = vmatpush1.msra.mxu0 %v911
    %1023 = vmatprep.subr.mxu0 0.0
    %1024 = vmatpush1.msra.mxu0 %v912
    %1025 = vmatprep.subr.mxu0 0.0
    %1026 = vmatpush1.msra.mxu0 %v913
    %1027 = vmatprep.subr.mxu0 0.0
    %1028 = vmatpush1.msra.mxu0 %v914
    %1029 = vmatprep.subr.mxu0 0.0
    %1030 = vmatpush1.msra.mxu0 %v915
    %1031 = vmatprep.subr.mxu0 0.0
    %1032 = vmatpush1.msra.mxu0 %v916
    %1033 = vmatprep.subr.mxu0 0.0
    %1034 = vmatpush1.msra.mxu0 %v917
    %1035 = vmatprep.subr.mxu0 0.0
    %1036 = vmatpush1.msra.mxu0 %v918
    %1037 = vmatprep.subr.mxu0 0.0
    %1038 = vmatpush1.msra.mxu0 %v919
    %1039 = vmatprep.subr.mxu0 0.0
    %1040 = vmatpush1.msra.mxu0 %v920
    %1041 = vmatprep.subr.mxu0 0.0
    %1042 = vmatpush1.msra.mxu0 %v921
    %1043 = vmatprep.subr.mxu0 0.0
    %1044 = vmatpush1.msra.mxu0 %v922
    %1045 = vmatprep.subr.mxu0 0.0
    %1046 = vmatpush1.msra.mxu0 %v923
    %1047 = vmatprep.subr.mxu0 0.0
    %1048 = vmatpush1.msra.mxu0 %v924
    %1049 = vmatprep.subr.mxu0 0.0
    %1050 = vmatpush1.msra.mxu0 0.0
    %1051 = vmatprep.subr.mxu0 0.0
    %1052 = vmatpush1.msra.mxu0 0.0
    %1053 = vmatprep.subr.mxu0 0.0
    %1054 = vmatpush1.msra.mxu0 0.0
    %1055 = vmatprep.subr.mxu0 0.0
    %1056 = vmatpush1.msra.mxu0 0.0
    %1057 = vmatprep.subr.mxu0 0.0
    %1058 = vmatpush1.msra.mxu0 0.0
    %1059 = vmatprep.subr.mxu0 0.0
    %1060 = vmatpush1.msra.mxu0 0.0
    %1061 = vmatprep.subr.mxu0 0.0
    %1062 = vmatpush1.msra.mxu0 0.0
    %1063 = vmatprep.subr.mxu0 0.0
    %1064 = vmatpush1.msra.mxu0 0.0
    %1065 = vmatprep.subr.mxu0 0.0
    %1066 = vmatpush1.msra.mxu0 0.0
    %1067 = vmatprep.subr.mxu0 0.0
    %1068 = vmatpush1.msra.mxu0 0.0
    %1069 = vmatprep.subr.mxu0 0.0
    %1070 = vmatpush1.msra.mxu0 0.0
    %1071 = vmatprep.subr.mxu0 0.0
    %1072 = vmatpush1.msra.mxu0 0.0
    %1073 = vmatprep.subr.mxu0 0.0
    %1074 = vmatpush1.msra.mxu0 0.0
    %1075 = vmatprep.subr.mxu0 0.0
    %1076 = vmatpush1.msra.mxu0 0.0
    %1077 = vmatprep.subr.mxu0 0.0
    %1078 = vmatpush1.msra.mxu0 0.0
    %1079 = vmatprep.subr.mxu0 0.0
    %1080 = vmatpush1.msra.mxu0 0.0
    %1081 = vmatprep.mubr.f32.mxu0 0.0
    %1082 = vmatmul.mubr.f32.gmra.mrb[0].mxu0 %v900
    %v1083 = vpop.f32.mrb[0].mxu0
    %v1084 = vadd.f32 %v1009, %v1083
    %v1085 = vpop.f32.mrb[0].mxu0
    %1086 = vmatprep.mubr.f32.mxu0 0.0
    %1087 = vmatmul.mubr.f32.gmra.mrb[0].mxu0 %v901
    %v1088 = vpop.f32.mrb[0].mxu0
    %v1089 = vadd.f32 %v1014, %v1088
    %v1090 = vpop.f32.mrb[0].mxu0
    %1091 = vdwg.mxu0
    %s1092 = scalar_lea.vmem [#allocation2], 1024
    %v1093 = vld [vmem:[%s1092] sm:$0xff]
    %v1094 = vld [vmem:[%s1092 + $0x8] sm:$0xff]
    %v1095 = vld [vmem:[%s1092 + $0x10] sm:$0xff]
    %v1096 = vld [vmem:[%s1092 + $0x18] sm:$0xff]
    %v1097 = vld [vmem:[%s1092 + $0x20] sm:$0xff]
    %v1098 = vld [vmem:[%s1092 + $0x28] sm:$0xff]
    %v1099 = vld [vmem:[%s1092 + $0x30] sm:$0xff]
    %v1100 = vld [vmem:[%s1092 + $0x38] sm:$0xff]
    %v1101 = vld [vmem:[%s1092 + $0x40] sm:$0xff]
    %v1102 = vld [vmem:[%s1092 + $0x48] sm:$0xff]
    %v1103 = vld [vmem:[%s1092 + $0x50] sm:$0xff]
    %v1104 = vld [vmem:[%s1092 + $0x58] sm:$0xff]
    %v1105 = vld [vmem:[%s1092 + $0x60] sm:$0xff]
    %v1106 = vld [vmem:[%s1092 + $0x68] sm:$0xff]
    %v1107 = vld [vmem:[%s1092 + $0x70] sm:$0xff]
    %v1108 = vld [vmem:[%s1092 + $0x78] sm:$0xff]
    %1109 = vmatprep.subr.mxu0 0.0
    %1110 = vmatpush1.msra.mxu0 %v1093
    %1111 = vmatprep.subr.mxu0 0.0
    %1112 = vmatpush1.msra.mxu0 %v1094
    %1113 = vmatprep.subr.mxu0 0.0
    %1114 = vmatpush1.msra.mxu0 %v1095
    %1115 = vmatprep.subr.mxu0 0.0
    %1116 = vmatpush1.msra.mxu0 %v1096
    %1117 = vmatprep.subr.mxu0 0.0
    %1118 = vmatpush1.msra.mxu0 %v1097
    %1119 = vmatprep.subr.mxu0 0.0
    %1120 = vmatpush1.msra.mxu0 %v1098
    %1121 = vmatprep.subr.mxu0 0.0
    %1122 = vmatpush1.msra.mxu0 %v1099
    %1123 = vmatprep.subr.mxu0 0.0
    %1124 = vmatpush1.msra.mxu0 %v1100
    %1125 = vmatprep.subr.mxu0 0.0
    %1126 = vmatpush1.msra.mxu0 %v1101
    %1127 = vmatprep.subr.mxu0 0.0
    %1128 = vmatpush1.msra.mxu0 %v1102
    %1129 = vmatprep.subr.mxu0 0.0
    %1130 = vmatpush1.msra.mxu0 %v1103
    %1131 = vmatprep.subr.mxu0 0.0
    %1132 = vmatpush1.msra.mxu0 %v1104
    %1133 = vmatprep.subr.mxu0 0.0
    %1134 = vmatpush1.msra.mxu0 %v1105
    %1135 = vmatprep.subr.mxu0 0.0
    %1136 = vmatpush1.msra.mxu0 %v1106
    %1137 = vmatprep.subr.mxu0 0.0
    %1138 = vmatpush1.msra.mxu0 %v1107
    %1139 = vmatprep.subr.mxu0 0.0
    %1140 = vmatpush1.msra.mxu0 %v1108
    %1141 = vmatprep.subr.mxu0 0.0
    %1142 = vmatpush1.msra.mxu0 0.0
    %1143 = vmatprep.subr.mxu0 0.0
    %1144 = vmatpush1.msra.mxu0 0.0
    %1145 = vmatprep.subr.mxu0 0.0
    %1146 = vmatpush1.msra.mxu0 0.0
    %1147 = vmatprep.subr.mxu0 0.0
    %1148 = vmatpush1.msra.mxu0 0.0
    %1149 = vmatprep.subr.mxu0 0.0
    %1150 = vmatpush1.msra.mxu0 0.0
    %1151 = vmatprep.subr.mxu0 0.0
    %1152 = vmatpush1.msra.mxu0 0.0
    %1153 = vmatprep.subr.mxu0 0.0
    %1154 = vmatpush1.msra.mxu0 0.0
    %1155 = vmatprep.subr.mxu0 0.0
    %1156 = vmatpush1.msra.mxu0 0.0
    %1157 = vmatprep.subr.mxu0 0.0
    %1158 = vmatpush1.msra.mxu0 0.0
    %1159 = vmatprep.subr.mxu0 0.0
    %1160 = vmatpush1.msra.mxu0 0.0
    %1161 = vmatprep.subr.mxu0 0.0
    %1162 = vmatpush1.msra.mxu0 0.0
    %1163 = vmatprep.subr.mxu0 0.0
    %1164 = vmatpush1.msra.mxu0 0.0
    %1165 = vmatprep.subr.mxu0 0.0
    %1166 = vmatpush1.msra.mxu0 0.0
    %1167 = vmatprep.subr.mxu0 0.0
    %1168 = vmatpush1.msra.mxu0 0.0
    %1169 = vmatprep.subr.mxu0 0.0
    %1170 = vmatpush1.msra.mxu0 0.0
    %1171 = vmatprep.subr.mxu0 0.0
    %1172 = vmatpush1.msra.mxu0 0.0
    %1173 = vmatprep.mubr.f32.mxu0 0.0
    %1174 = vmatmul.mubr.f32.gmra.mrb[0].mxu0 %v906
    %v1175 = vpop.f32.mrb[0].mxu0
    %v1176 = vadd.f32 0.0, %v1175
    %v1177 = vpop.f32.mrb[0].mxu0
    %1178 = vmatprep.mubr.f32.mxu0 0.0
    %1179 = vmatmul.mubr.f32.gmra.mrb[0].mxu0 %v907
    %v1180 = vpop.f32.mrb[0].mxu0
    %v1181 = vadd.f32 0.0, %v1180
    %v1182 = vpop.f32.mrb[0].mxu0
    %1183 = vdwg.mxu0
    %v1184 = vadd.f32 %v1084, %v1176
    %v1185 = vadd.f32 %v1089, %v1181
    %s1186 = scalar_lea.vmem [#allocation4], 2
    %v1187 = vld [vmem:[%s1186] sm:$0x1]
    %v1189 = vlaneseq
    %v1190 = vshrl.u32 %v1189, 7
    %v1191 = vsub.s32 0, %v1190
    %v1192 = vrot.slane %v1187, %v1191
    %v1194 = vadd.f32 %v1184, %v1192
    %v1195 = vadd.f32 %v1185, %v1192
    %v1196 = vmax.f32 %v1194, 0.0
    %v1197 = vmax.f32 %v1195, 0.0
    %s1198 = scalar_lea.vmem [#allocation6], 256
    %v1199 = vld [vmem:[%s1198] sm:$0xff]
    %v1200 = vld [vmem:[%s1198 + $0x8] sm:$0xff]
    %v1201 = vld [vmem:[%s1198 + $0x10] sm:$0xff]
    %v1202 = vld [vmem:[%s1198 + $0x18] sm:$0xff]
    %v1203 = vld [vmem:[%s1198 + $0x20] sm:$0xff]
    %v1204 = vld [vmem:[%s1198 + $0x28] sm:$0xff]
    %v1205 = vld [vmem:[%s1198 + $0x30] sm:$0xff]
    %v1206 = vld [vmem:[%s1198 + $0x38] sm:$0xff]
    %v1207 = vld [vmem:[%s1198 + $0x40] sm:$0xff]
    %v1208 = vld [vmem:[%s1198 + $0x48] sm:$0xff]
    %v1209 = vld [vmem:[%s1198 + $0x50] sm:$0xff]
    %v1210 = vld [vmem:[%s1198 + $0x58] sm:$0xff]
    %v1211 = vld [vmem:[%s1198 + $0x60] sm:$0xff]
    %v1212 = vld [vmem:[%s1198 + $0x68] sm:$0xff]
    %v1213 = vld [vmem:[%s1198 + $0x70] sm:$0xff]
    %v1214 = vld [vmem:[%s1198 + $0x78] sm:$0xff]
    %s1215 = scalar_lea.vmem [#allocation7], 2
    %v1216 = vld [vmem:[%s1215] sm:$0x1]
    %v1218 = vlaneseq
    %v1219 = vshrl.u32 %v1218, 7
    %v1220 = vsub.s32 0, %v1219
    %v1221 = vrot.slane %v1216, %v1220
    %1223 = vmatprep.subr.mxu0 0.0
    %1224 = vmatpush1.msra.mxu0 %v1199
    %1225 = vmatprep.subr.mxu0 0.0
    %1226 = vmatpush1.msra.mxu0 %v1200
    %1227 = vmatprep.subr.mxu0 0.0
    %1228 = vmatpush1.msra.mxu0 %v1201
    %1229 = vmatprep.subr.mxu0 0.0
    %1230 = vmatpush1.msra.mxu0 %v1202
    %1231 = vmatprep.subr.mxu0 0.0
    %1232 = vmatpush1.msra.mxu0 %v1203
    %1233 = vmatprep.subr.mxu0 0.0
    %1234 = vmatpush1.msra.mxu0 %v1204
    %1235 = vmatprep.subr.mxu0 0.0
    %1236 = vmatpush1.msra.mxu0 %v1205
    %1237 = vmatprep.subr.mxu0 0.0
    %1238 = vmatpush1.msra.mxu0 %v1206
    %1239 = vmatprep.subr.mxu0 0.0
    %1240 = vmatpush1.msra.mxu0 %v1207
    %1241 = vmatprep.subr.mxu0 0.0
    %1242 = vmatpush1.msra.mxu0 %v1208
    %1243 = vmatprep.subr.mxu0 0.0
    %1244 = vmatpush1.msra.mxu0 %v1209
    %1245 = vmatprep.subr.mxu0 0.0
    %1246 = vmatpush1.msra.mxu0 %v1210
    %1247 = vmatprep.subr.mxu0 0.0
    %1248 = vmatpush1.msra.mxu0 %v1211
    %1249 = vmatprep.subr.mxu0 0.0
    %1250 = vmatpush1.msra.mxu0 %v1212
    %1251 = vmatprep.subr.mxu0 0.0
    %1252 = vmatpush1.msra.mxu0 %v1213
    %1253 = vmatprep.subr.mxu0 0.0
    %1254 = vmatpush1.msra.mxu0 %v1214
    %1255 = vmatprep.subr.mxu0 0.0
    %1256 = vmatpush1.msra.mxu0 0.0
    %1257 = vmatprep.subr.mxu0 0.0
    %1258 = vmatpush1.msra.mxu0 0.0
    %1259 = vmatprep.subr.mxu0 0.0
    %1260 = vmatpush1.msra.mxu0 0.0
    %1261 = vmatprep.subr.mxu0 0.0
    %1262 = vmatpush1.msra.mxu0 0.0
    %1263 = vmatprep.subr.mxu0 0.0
    %1264 = vmatpush1.msra.mxu0 0.0
    %1265 = vmatprep.subr.mxu0 0.0
    %1266 = vmatpush1.msra.mxu0 0.0
    %1267 = vmatprep.subr.mxu0 0.0
    %1268 = vmatpush1.msra.mxu0 0.0
    %1269 = vmatprep.subr.mxu0 0.0
    %1270 = vmatpush1.msra.mxu0 0.0
    %1271 = vmatprep.subr.mxu0 0.0
    %1272 = vmatpush1.msra.mxu0 0.0
    %1273 = vmatprep.subr.mxu0 0.0
    %1274 = vmatpush1.msra.mxu0 0.0
    %1275 = vmatprep.subr.mxu0 0.0
    %1276 = vmatpush1.msra.mxu0 0.0
    %1277 = vmatprep.subr.mxu0 0.0
    %1278 = vmatpush1.msra.mxu0 0.0
    %1279 = vmatprep.subr.mxu0 0.0
    %1280 = vmatpush1.msra.mxu0 0.0
    %1281 = vmatprep.subr.mxu0 0.0
    %1282 = vmatpush1.msra.mxu0 0.0
    %1283 = vmatprep.subr.mxu0 0.0
    %1284 = vmatpush1.msra.mxu0 0.0
    %1285 = vmatprep.subr.mxu0 0.0
    %1286 = vmatpush1.msra.mxu0 0.0
    %1287 = vmatprep.mubr.f32.mxu0 0.0
    %1288 = vmatmul.mubr.f32.gmra.mrb[0].mxu0 %v1196
    %v1289 = vpop.f32.mrb[0].mxu0
    %v1290 = vadd.f32 %v1221, %v1289
    %v1291 = vpop.f32.mrb[0].mxu0
    %1292 = vmatprep.mubr.f32.mxu0 0.0
    %1293 = vmatmul.mubr.f32.gmra.mrb[0].mxu0 %v1197
    %v1294 = vpop.f32.mrb[0].mxu0
    %v1295 = vadd.f32 %v1221, %v1294
    %v1296 = vpop.f32.mrb[0].mxu0
    %1297 = vdwg.mxu0
    %v1298 = vadd.f32 %v892, %v1290
    %v1299 = vadd.f32 %v893, %v1295
    %v1300 = vmax.f32 %v1298, 0.0
    %v1301 = vmax.f32 %v1299, 0.0
    %v1302 = vrot.slane %v1300, 7
    %v1303 = vrot.slane %v1301, 7
    %v1304 = vsel %vm88, %v1302, %v1303
    %v1305 = vsel %vm88, %v1303, %v1302
    %v1306 = vsel %vm78, %v1305, 0.0
    %v1307 = vsel %vm79, %v1304, 0.0
    %v1308 = vrot.slane %v1300, 1
    %v1309 = vrot.slane %v1301, 1
    %v1310 = vsel %vm95, %v1308, %v1309
    %v1311 = vsel %vm95, %v1309, %v1308
    %v1312 = vsel %vm80, %v1310, 0.0
    %v1313 = vsel %vm81, %v1311, 0.0
    %s1314 = scalar_lea.vmem [#allocation2], 1152
    %v1315 = vld [vmem:[%s1314] sm:$0xff]
    %v1316 = vld [vmem:[%s1314 + $0x8] sm:$0xff]
    %v1317 = vld [vmem:[%s1314 + $0x10] sm:$0xff]
    %v1318 = vld [vmem:[%s1314 + $0x18] sm:$0xff]
    %v1319 = vld [vmem:[%s1314 + $0x20] sm:$0xff]
    %v1320 = vld [vmem:[%s1314 + $0x28] sm:$0xff]
    %v1321 = vld [vmem:[%s1314 + $0x30] sm:$0xff]
    %v1322 = vld [vmem:[%s1314 + $0x38] sm:$0xff]
    %v1323 = vld [vmem:[%s1314 + $0x40] sm:$0xff]
    %v1324 = vld [vmem:[%s1314 + $0x48] sm:$0xff]
    %v1325 = vld [vmem:[%s1314 + $0x50] sm:$0xff]
    %v1326 = vld [vmem:[%s1314 + $0x58] sm:$0xff]
    %v1327 = vld [vmem:[%s1314 + $0x60] sm:$0xff]
    %v1328 = vld [vmem:[%s1314 + $0x68] sm:$0xff]
    %v1329 = vld [vmem:[%s1314 + $0x70] sm:$0xff]
    %v1330 = vld [vmem:[%s1314 + $0x78] sm:$0xff]
    %s1331 = scalar_lea.vmem [#allocation2], 1280
    %v1332 = vld [vmem:[%s1331] sm:$0xff]
    %v1333 = vld [vmem:[%s1331 + $0x8] sm:$0xff]
    %v1334 = vld [vmem:[%s1331 + $0x10] sm:$0xff]
    %v1335 = vld [vmem:[%s1331 + $0x18] sm:$0xff]
    %v1336 = vld [vmem:[%s1331 + $0x20] sm:$0xff]
    %v1337 = vld [vmem:[%s1331 + $0x28] sm:$0xff]
    %v1338 = vld [vmem:[%s1331 + $0x30] sm:$0xff]
    %v1339 = vld [vmem:[%s1331 + $0x38] sm:$0xff]
    %v1340 = vld [vmem:[%s1331 + $0x40] sm:$0xff]
    %v1341 = vld [vmem:[%s1331 + $0x48] sm:$0xff]
    %v1342 = vld [vmem:[%s1331 + $0x50] sm:$0xff]
    %v1343 = vld [vmem:[%s1331 + $0x58] sm:$0xff]
    %v1344 = vld [vmem:[%s1331 + $0x60] sm:$0xff]
    %v1345 = vld [vmem:[%s1331 + $0x68] sm:$0xff]
    %v1346 = vld [vmem:[%s1331 + $0x70] sm:$0xff]
    %v1347 = vld [vmem:[%s1331 + $0x78] sm:$0xff]
    %1348 = vmatprep.subr.mxu0 0.0
    %1349 = vmatpush1.msra.mxu0 %v1332
    %1350 = vmatprep.subr.mxu0 0.0
    %1351 = vmatpush1.msra.mxu0 %v1333
    %1352 = vmatprep.subr.mxu0 0.0
    %1353 = vmatpush1.msra.mxu0 %v1334
    %1354 = vmatprep.subr.mxu0 0.0
    %1355 = vmatpush1.msra.mxu0 %v1335
    %1356 = vmatprep.subr.mxu0 0.0
    %1357 = vmatpush1.msra.mxu0 %v1336
    %1358 = vmatprep.subr.mxu0 0.0
    %1359 = vmatpush1.msra.mxu0 %v1337
    %1360 = vmatprep.subr.mxu0 0.0
    %1361 = vmatpush1.msra.mxu0 %v1338
    %1362 = vmatprep.subr.mxu0 0.0
    %1363 = vmatpush1.msra.mxu0 %v1339
    %1364 = vmatprep.subr.mxu0 0.0
    %1365 = vmatpush1.msra.mxu0 %v1340
    %1366 = vmatprep.subr.mxu0 0.0
    %1367 = vmatpush1.msra.mxu0 %v1341
    %1368 = vmatprep.subr.mxu0 0.0
    %1369 = vmatpush1.msra.mxu0 %v1342
    %1370 = vmatprep.subr.mxu0 0.0
    %1371 = vmatpush1.msra.mxu0 %v1343
    %1372 = vmatprep.subr.mxu0 0.0
    %1373 = vmatpush1.msra.mxu0 %v1344
    %1374 = vmatprep.subr.mxu0 0.0
    %1375 = vmatpush1.msra.mxu0 %v1345
    %1376 = vmatprep.subr.mxu0 0.0
    %1377 = vmatpush1.msra.mxu0 %v1346
    %1378 = vmatprep.subr.mxu0 0.0
    %1379 = vmatpush1.msra.mxu0 %v1347
    %1380 = vmatprep.subr.mxu0 0.0
    %1381 = vmatpush1.msra.mxu0 0.0
    %1382 = vmatprep.subr.mxu0 0.0
    %1383 = vmatpush1.msra.mxu0 0.0
    %1384 = vmatprep.subr.mxu0 0.0
    %1385 = vmatpush1.msra.mxu0 0.0
    %1386 = vmatprep.subr.mxu0 0.0
    %1387 = vmatpush1.msra.mxu0 0.0
    %1388 = vmatprep.subr.mxu0 0.0
    %1389 = vmatpush1.msra.mxu0 0.0
    %1390 = vmatprep.subr.mxu0 0.0
    %1391 = vmatpush1.msra.mxu0 0.0
    %1392 = vmatprep.subr.mxu0 0.0
    %1393 = vmatpush1.msra.mxu0 0.0
    %1394 = vmatprep.subr.mxu0 0.0
    %1395 = vmatpush1.msra.mxu0 0.0
    %1396 = vmatprep.subr.mxu0 0.0
    %1397 = vmatpush1.msra.mxu0 0.0
    %1398 = vmatprep.subr.mxu0 0.0
    %1399 = vmatpush1.msra.mxu0 0.0
    %1400 = vmatprep.subr.mxu0 0.0
    %1401 = vmatpush1.msra.mxu0 0.0
    %1402 = vmatprep.subr.mxu0 0.0
    %1403 = vmatpush1.msra.mxu0 0.0
    %1404 = vmatprep.subr.mxu0 0.0
    %1405 = vmatpush1.msra.mxu0 0.0
    %1406 = vmatprep.subr.mxu0 0.0
    %1407 = vmatpush1.msra.mxu0 0.0
    %1408 = vmatprep.subr.mxu0 0.0
    %1409 = vmatpush1.msra.mxu0 0.0
    %1410 = vmatprep.subr.mxu0 0.0
    %1411 = vmatpush1.msra.mxu0 0.0
    %1412 = vmatprep.mubr.f32.mxu0 0.0
    %1413 = vmatmul.mubr.f32.gmra.mrb[0].mxu0 %v1300
    %v1414 = vpop.f32.mrb[0].mxu0
    %v1415 = vadd.f32 0.0, %v1414
    %v1416 = vpop.f32.mrb[0].mxu0
    %1417 = vmatprep.mubr.f32.mxu0 0.0
    %1418 = vmatmul.mubr.f32.gmra.mrb[0].mxu0 %v1301
    %v1419 = vpop.f32.mrb[0].mxu0
    %v1420 = vadd.f32 0.0, %v1419
    %v1421 = vpop.f32.mrb[0].mxu0
    %1422 = vdwg.mxu0
    %1423 = vmatprep.subr.mxu0 0.0
    %1424 = vmatpush1.msra.mxu0 %v1315
    %1425 = vmatprep.subr.mxu0 0.0
    %1426 = vmatpush1.msra.mxu0 %v1316
    %1427 = vmatprep.subr.mxu0 0.0
    %1428 = vmatpush1.msra.mxu0 %v1317
    %1429 = vmatprep.subr.mxu0 0.0
    %1430 = vmatpush1.msra.mxu0 %v1318
    %1431 = vmatprep.subr.mxu0 0.0
    %1432 = vmatpush1.msra.mxu0 %v1319
    %1433 = vmatprep.subr.mxu0 0.0
    %1434 = vmatpush1.msra.mxu0 %v1320
    %1435 = vmatprep.subr.mxu0 0.0
    %1436 = vmatpush1.msra.mxu0 %v1321
    %1437 = vmatprep.subr.mxu0 0.0
    %1438 = vmatpush1.msra.mxu0 %v1322
    %1439 = vmatprep.subr.mxu0 0.0
    %1440 = vmatpush1.msra.mxu0 %v1323
    %1441 = vmatprep.subr.mxu0 0.0
    %1442 = vmatpush1.msra.mxu0 %v1324
    %1443 = vmatprep.subr.mxu0 0.0
    %1444 = vmatpush1.msra.mxu0 %v1325
    %1445 = vmatprep.subr.mxu0 0.0
    %1446 = vmatpush1.msra.mxu0 %v1326
    %1447 = vmatprep.subr.mxu0 0.0
    %1448 = vmatpush1.msra.mxu0 %v1327
    %1449 = vmatprep.subr.mxu0 0.0
    %1450 = vmatpush1.msra.mxu0 %v1328
    %1451 = vmatprep.subr.mxu0 0.0
    %1452 = vmatpush1.msra.mxu0 %v1329
    %1453 = vmatprep.subr.mxu0 0.0
    %1454 = vmatpush1.msra.mxu0 %v1330
    %1455 = vmatprep.subr.mxu0 0.0
    %1456 = vmatpush1.msra.mxu0 0.0
    %1457 = vmatprep.subr.mxu0 0.0
    %1458 = vmatpush1.msra.mxu0 0.0
    %1459 = vmatprep.subr.mxu0 0.0
    %1460 = vmatpush1.msra.mxu0 0.0
    %1461 = vmatprep.subr.mxu0 0.0
    %1462 = vmatpush1.msra.mxu0 0.0
    %1463 = vmatprep.subr.mxu0 0.0
    %1464 = vmatpush1.msra.mxu0 0.0
    %1465 = vmatprep.subr.mxu0 0.0
    %1466 = vmatpush1.msra.mxu0 0.0
    %1467 = vmatprep.subr.mxu0 0.0
    %1468 = vmatpush1.msra.mxu0 0.0
    %1469 = vmatprep.subr.mxu0 0.0
    %1470 = vmatpush1.msra.mxu0 0.0
    %1471 = vmatprep.subr.mxu0 0.0
    %1472 = vmatpush1.msra.mxu0 0.0
    %1473 = vmatprep.subr.mxu0 0.0
    %1474 = vmatpush1.msra.mxu0 0.0
    %1475 = vmatprep.subr.mxu0 0.0
    %1476 = vmatpush1.msra.mxu0 0.0
    %1477 = vmatprep.subr.mxu0 0.0
    %1478 = vmatpush1.msra.mxu0 0.0
    %1479 = vmatprep.subr.mxu0 0.0
    %1480 = vmatpush1.msra.mxu0 0.0
    %1481 = vmatprep.subr.mxu0 0.0
    %1482 = vmatpush1.msra.mxu0 0.0
    %1483 = vmatprep.subr.mxu0 0.0
    %1484 = vmatpush1.msra.mxu0 0.0
    %1485 = vmatprep.subr.mxu0 0.0
    %1486 = vmatpush1.msra.mxu0 0.0
    %1487 = vmatprep.mubr.f32.mxu0 0.0
    %1488 = vmatmul.mubr.f32.gmra.mrb[0].mxu0 %v1306
    %v1489 = vpop.f32.mrb[0].mxu0
    %v1490 = vadd.f32 %v1415, %v1489
    %v1491 = vpop.f32.mrb[0].mxu0
    %1492 = vmatprep.mubr.f32.mxu0 0.0
    %1493 = vmatmul.mubr.f32.gmra.mrb[0].mxu0 %v1307
    %v1494 = vpop.f32.mrb[0].mxu0
    %v1495 = vadd.f32 %v1420, %v1494
    %v1496 = vpop.f32.mrb[0].mxu0
    %1497 = vdwg.mxu0
    %s1498 = scalar_lea.vmem [#allocation2], 1408
    %v1499 = vld [vmem:[%s1498] sm:$0xff]
    %v1500 = vld [vmem:[%s1498 + $0x8] sm:$0xff]
    %v1501 = vld [vmem:[%s1498 + $0x10] sm:$0xff]
    %v1502 = vld [vmem:[%s1498 + $0x18] sm:$0xff]
    %v1503 = vld [vmem:[%s1498 + $0x20] sm:$0xff]
    %v1504 = vld [vmem:[%s1498 + $0x28] sm:$0xff]
    %v1505 = vld [vmem:[%s1498 + $0x30] sm:$0xff]
    %v1506 = vld [vmem:[%s1498 + $0x38] sm:$0xff]
    %v1507 = vld [vmem:[%s1498 + $0x40] sm:$0xff]
    %v1508 = vld [vmem:[%s1498 + $0x48] sm:$0xff]
    %v1509 = vld [vmem:[%s1498 + $0x50] sm:$0xff]
    %v1510 = vld [vmem:[%s1498 + $0x58] sm:$0xff]
    %v1511 = vld [vmem:[%s1498 + $0x60] sm:$0xff]
    %v1512 = vld [vmem:[%s1498 + $0x68] sm:$0xff]
    %v1513 = vld [vmem:[%s1498 + $0x70] sm:$0xff]
    %v1514 = vld [vmem:[%s1498 + $0x78] sm:$0xff]
    %1515 = vmatprep.subr.mxu0 0.0
    %1516 = vmatpush1.msra.mxu0 %v1499
    %1517 = vmatprep.subr.mxu0 0.0
    %1518 = vmatpush1.msra.mxu0 %v1500
    %1519 = vmatprep.subr.mxu0 0.0
    %1520 = vmatpush1.msra.mxu0 %v1501
    %1521 = vmatprep.subr.mxu0 0.0
    %1522 = vmatpush1.msra.mxu0 %v1502
    %1523 = vmatprep.subr.mxu0 0.0
    %1524 = vmatpush1.msra.mxu0 %v1503
    %1525 = vmatprep.subr.mxu0 0.0
    %1526 = vmatpush1.msra.mxu0 %v1504
    %1527 = vmatprep.subr.mxu0 0.0
    %1528 = vmatpush1.msra.mxu0 %v1505
    %1529 = vmatprep.subr.mxu0 0.0
    %1530 = vmatpush1.msra.mxu0 %v1506
    %1531 = vmatprep.subr.mxu0 0.0
    %1532 = vmatpush1.msra.mxu0 %v1507
    %1533 = vmatprep.subr.mxu0 0.0
    %1534 = vmatpush1.msra.mxu0 %v1508
    %1535 = vmatprep.subr.mxu0 0.0
    %1536 = vmatpush1.msra.mxu0 %v1509
    %1537 = vmatprep.subr.mxu0 0.0
    %1538 = vmatpush1.msra.mxu0 %v1510
    %1539 = vmatprep.subr.mxu0 0.0
    %1540 = vmatpush1.msra.mxu0 %v1511
    %1541 = vmatprep.subr.mxu0 0.0
    %1542 = vmatpush1.msra.mxu0 %v1512
    %1543 = vmatprep.subr.mxu0 0.0
    %1544 = vmatpush1.msra.mxu0 %v1513
    %1545 = vmatprep.subr.mxu0 0.0
    %1546 = vmatpush1.msra.mxu0 %v1514
    %1547 = vmatprep.subr.mxu0 0.0
    %1548 = vmatpush1.msra.mxu0 0.0
    %1549 = vmatprep.subr.mxu0 0.0
    %1550 = vmatpush1.msra.mxu0 0.0
    %1551 = vmatprep.subr.mxu0 0.0
    %1552 = vmatpush1.msra.mxu0 0.0
    %1553 = vmatprep.subr.mxu0 0.0
    %1554 = vmatpush1.msra.mxu0 0.0
    %1555 = vmatprep.subr.mxu0 0.0
    %1556 = vmatpush1.msra.mxu0 0.0
    %1557 = vmatprep.subr.mxu0 0.0
    %1558 = vmatpush1.msra.mxu0 0.0
    %1559 = vmatprep.subr.mxu0 0.0
    %1560 = vmatpush1.msra.mxu0 0.0
    %1561 = vmatprep.subr.mxu0 0.0
    %1562 = vmatpush1.msra.mxu0 0.0
    %1563 = vmatprep.subr.mxu0 0.0
    %1564 = vmatpush1.msra.mxu0 0.0
    %1565 = vmatprep.subr.mxu0 0.0
    %1566 = vmatpush1.msra.mxu0 0.0
    %1567 = vmatprep.subr.mxu0 0.0
    %1568 = vmatpush1.msra.mxu0 0.0
    %1569 = vmatprep.subr.mxu0 0.0
    %1570 = vmatpush1.msra.mxu0 0.0
    %1571 = vmatprep.subr.mxu0 0.0
    %1572 = vmatpush1.msra.mxu0 0.0
    %1573 = vmatprep.subr.mxu0 0.0
    %1574 = vmatpush1.msra.mxu0 0.0
    %1575 = vmatprep.subr.mxu0 0.0
    %1576 = vmatpush1.msra.mxu0 0.0
    %1577 = vmatprep.subr.mxu0 0.0
    %1578 = vmatpush1.msra.mxu0 0.0
    %1579 = vmatprep.mubr.f32.mxu0 0.0
    %1580 = vmatmul.mubr.f32.gmra.mrb[0].mxu0 %v1312
    %v1581 = vpop.f32.mrb[0].mxu0
    %v1582 = vadd.f32 0.0, %v1581
    %v1583 = vpop.f32.mrb[0].mxu0
    %1584 = vmatprep.mubr.f32.mxu0 0.0
    %1585 = vmatmul.mubr.f32.gmra.mrb[0].mxu0 %v1313
    %v1586 = vpop.f32.mrb[0].mxu0
    %v1587 = vadd.f32 0.0, %v1586
    %v1588 = vpop.f32.mrb[0].mxu0
    %1589 = vdwg.mxu0
    %v1590 = vadd.f32 %v1490, %v1582
    %v1591 = vadd.f32 %v1495, %v1587
    %s1592 = scalar_lea.vmem [#allocation4], 3
    %v1593 = vld [vmem:[%s1592] sm:$0x1]
    %v1595 = vlaneseq
    %v1596 = vshrl.u32 %v1595, 7
    %v1597 = vsub.s32 0, %v1596
    %v1598 = vrot.slane %v1593, %v1597
    %v1600 = vadd.f32 %v1590, %v1598
    %v1601 = vadd.f32 %v1591, %v1598
    %v1602 = vmax.f32 %v1600, 0.0
    %v1603 = vmax.f32 %v1601, 0.0
    %s1604 = scalar_lea.vmem [#allocation6], 384
    %v1605 = vld [vmem:[%s1604] sm:$0xff]
    %v1606 = vld [vmem:[%s1604 + $0x8] sm:$0xff]
    %v1607 = vld [vmem:[%s1604 + $0x10] sm:$0xff]
    %v1608 = vld [vmem:[%s1604 + $0x18] sm:$0xff]
    %v1609 = vld [vmem:[%s1604 + $0x20] sm:$0xff]
    %v1610 = vld [vmem:[%s1604 + $0x28] sm:$0xff]
    %v1611 = vld [vmem:[%s1604 + $0x30] sm:$0xff]
    %v1612 = vld [vmem:[%s1604 + $0x38] sm:$0xff]
    %v1613 = vld [vmem:[%s1604 + $0x40] sm:$0xff]
    %v1614 = vld [vmem:[%s1604 + $0x48] sm:$0xff]
    %v1615 = vld [vmem:[%s1604 + $0x50] sm:$0xff]
    %v1616 = vld [vmem:[%s1604 + $0x58] sm:$0xff]
    %v1617 = vld [vmem:[%s1604 + $0x60] sm:$0xff]
    %v1618 = vld [vmem:[%s1604 + $0x68] sm:$0xff]
    %v1619 = vld [vmem:[%s1604 + $0x70] sm:$0xff]
    %v1620 = vld [vmem:[%s1604 + $0x78] sm:$0xff]
    %s1621 = scalar_lea.vmem [#allocation7], 3
    %v1622 = vld [vmem:[%s1621] sm:$0x1]
    %v1624 = vlaneseq
    %v1625 = vshrl.u32 %v1624, 7
    %v1626 = vsub.s32 0, %v1625
    %v1627 = vrot.slane %v1622, %v1626
    %1629 = vmatprep.subr.mxu0 0.0
    %1630 = vmatpush1.msra.mxu0 %v1605
    %1631 = vmatprep.subr.mxu0 0.0
    %1632 = vmatpush1.msra.mxu0 %v1606
    %1633 = vmatprep.subr.mxu0 0.0
    %1634 = vmatpush1.msra.mxu0 %v1607
    %1635 = vmatprep.subr.mxu0 0.0
    %1636 = vmatpush1.msra.mxu0 %v1608
    %1637 = vmatprep.subr.mxu0 0.0
    %1638 = vmatpush1.msra.mxu0 %v1609
    %1639 = vmatprep.subr.mxu0 0.0
    %1640 = vmatpush1.msra.mxu0 %v1610
    %1641 = vmatprep.subr.mxu0 0.0
    %1642 = vmatpush1.msra.mxu0 %v1611
    %1643 = vmatprep.subr.mxu0 0.0
    %1644 = vmatpush1.msra.mxu0 %v1612
    %1645 = vmatprep.subr.mxu0 0.0
    %1646 = vmatpush1.msra.mxu0 %v1613
    %1647 = vmatprep.subr.mxu0 0.0
    %1648 = vmatpush1.msra.mxu0 %v1614
    %1649 = vmatprep.subr.mxu0 0.0
    %1650 = vmatpush1.msra.mxu0 %v1615
    %1651 = vmatprep.subr.mxu0 0.0
    %1652 = vmatpush1.msra.mxu0 %v1616
    %1653 = vmatprep.subr.mxu0 0.0
    %1654 = vmatpush1.msra.mxu0 %v1617
    %1655 = vmatprep.subr.mxu0 0.0
    %1656 = vmatpush1.msra.mxu0 %v1618
    %1657 = vmatprep.subr.mxu0 0.0
    %1658 = vmatpush1.msra.mxu0 %v1619
    %1659 = vmatprep.subr.mxu0 0.0
    %1660 = vmatpush1.msra.mxu0 %v1620
    %1661 = vmatprep.subr.mxu0 0.0
    %1662 = vmatpush1.msra.mxu0 0.0
    %1663 = vmatprep.subr.mxu0 0.0
    %1664 = vmatpush1.msra.mxu0 0.0
    %1665 = vmatprep.subr.mxu0 0.0
    %1666 = vmatpush1.msra.mxu0 0.0
    %1667 = vmatprep.subr.mxu0 0.0
    %1668 = vmatpush1.msra.mxu0 0.0
    %1669 = vmatprep.subr.mxu0 0.0
    %1670 = vmatpush1.msra.mxu0 0.0
    %1671 = vmatprep.subr.mxu0 0.0
    %1672 = vmatpush1.msra.mxu0 0.0
    %1673 = vmatprep.subr.mxu0 0.0
    %1674 = vmatpush1.msra.mxu0 0.0
    %1675 = vmatprep.subr.mxu0 0.0
    %1676 = vmatpush1.msra.mxu0 0.0
    %1677 = vmatprep.subr.mxu0 0.0
    %1678 = vmatpush1.msra.mxu0 0.0
    %1679 = vmatprep.subr.mxu0 0.0
    %1680 = vmatpush1.msra.mxu0 0.0
    %1681 = vmatprep.subr.mxu0 0.0
    %1682 = vmatpush1.msra.mxu0 0.0
    %1683 = vmatprep.subr.mxu0 0.0
    %1684 = vmatpush1.msra.mxu0 0.0
    %1685 = vmatprep.subr.mxu0 0.0
    %1686 = vmatpush1.msra.mxu0 0.0
    %1687 = vmatprep.subr.mxu0 0.0
    %1688 = vmatpush1.msra.mxu0 0.0
    %1689 = vmatprep.subr.mxu0 0.0
    %1690 = vmatpush1.msra.mxu0 0.0
    %1691 = vmatprep.subr.mxu0 0.0
    %1692 = vmatpush1.msra.mxu0 0.0
    %1693 = vmatprep.mubr.f32.mxu0 0.0
    %1694 = vmatmul.mubr.f32.gmra.mrb[0].mxu0 %v1602
    %v1695 = vpop.f32.mrb[0].mxu0
    %v1696 = vadd.f32 %v1627, %v1695
    %v1697 = vpop.f32.mrb[0].mxu0
    %1698 = vmatprep.mubr.f32.mxu0 0.0
    %1699 = vmatmul.mubr.f32.gmra.mrb[0].mxu0 %v1603
    %v1700 = vpop.f32.mrb[0].mxu0
    %v1701 = vadd.f32 %v1627, %v1700
    %v1702 = vpop.f32.mrb[0].mxu0
    %1703 = vdwg.mxu0
    %v1704 = vadd.f32 %v1298, %v1696
    %v1705 = vadd.f32 %v1299, %v1701
    %v1706 = vmax.f32 %v1704, 0.0
    %v1707 = vmax.f32 %v1705, 0.0
    %v1708 = vrot.slane %v1706, 7
    %v1709 = vrot.slane %v1707, 7
    %v1710 = vsel %vm88, %v1708, %v1709
    %v1711 = vsel %vm88, %v1709, %v1708
    %v1712 = vsel %vm78, %v1711, 0.0
    %v1713 = vsel %vm79, %v1710, 0.0
    %v1714 = vrot.slane %v1706, 1
    %v1715 = vrot.slane %v1707, 1
    %v1716 = vsel %vm95, %v1714, %v1715
    %v1717 = vsel %vm95, %v1715, %v1714
    %v1718 = vsel %vm80, %v1716, 0.0
    %v1719 = vsel %vm81, %v1717, 0.0
    %s1720 = scalar_lea.vmem [#allocation2], 1536
    %v1721 = vld [vmem:[%s1720] sm:$0xff]
    %v1722 = vld [vmem:[%s1720 + $0x8] sm:$0xff]
    %v1723 = vld [vmem:[%s1720 + $0x10] sm:$0xff]
    %v1724 = vld [vmem:[%s1720 + $0x18] sm:$0xff]
    %v1725 = vld [vmem:[%s1720 + $0x20] sm:$0xff]
    %v1726 = vld [vmem:[%s1720 + $0x28] sm:$0xff]
    %v1727 = vld [vmem:[%s1720 + $0x30] sm:$0xff]
    %v1728 = vld [vmem:[%s1720 + $0x38] sm:$0xff]
    %v1729 = vld [vmem:[%s1720 + $0x40] sm:$0xff]
    %v1730 = vld [vmem:[%s1720 + $0x48] sm:$0xff]
    %v1731 = vld [vmem:[%s1720 + $0x50] sm:$0xff]
    %v1732 = vld [vmem:[%s1720 + $0x58] sm:$0xff]
    %v1733 = vld [vmem:[%s1720 + $0x60] sm:$0xff]
    %v1734 = vld [vmem:[%s1720 + $0x68] sm:$0xff]
    %v1735 = vld [vmem:[%s1720 + $0x70] sm:$0xff]
    %v1736 = vld [vmem:[%s1720 + $0x78] sm:$0xff]
    %s1737 = scalar_lea.vmem [#allocation2], 1664
    %v1738 = vld [vmem:[%s1737] sm:$0xff]
    %v1739 = vld [vmem:[%s1737 + $0x8] sm:$0xff]
    %v1740 = vld [vmem:[%s1737 + $0x10] sm:$0xff]
    %v1741 = vld [vmem:[%s1737 + $0x18] sm:$0xff]
    %v1742 = vld [vmem:[%s1737 + $0x20] sm:$0xff]
    %v1743 = vld [vmem:[%s1737 + $0x28] sm:$0xff]
    %v1744 = vld [vmem:[%s1737 + $0x30] sm:$0xff]
    %v1745 = vld [vmem:[%s1737 + $0x38] sm:$0xff]
    %v1746 = vld [vmem:[%s1737 + $0x40] sm:$0xff]
    %v1747 = vld [vmem:[%s1737 + $0x48] sm:$0xff]
    %v1748 = vld [vmem:[%s1737 + $0x50] sm:$0xff]
    %v1749 = vld [vmem:[%s1737 + $0x58] sm:$0xff]
    %v1750 = vld [vmem:[%s1737 + $0x60] sm:$0xff]
    %v1751 = vld [vmem:[%s1737 + $0x68] sm:$0xff]
    %v1752 = vld [vmem:[%s1737 + $0x70] sm:$0xff]
    %v1753 = vld [vmem:[%s1737 + $0x78] sm:$0xff]
    %1754 = vmatprep.subr.mxu0 0.0
    %1755 = vmatpush1.msra.mxu0 %v1738
    %1756 = vmatprep.subr.mxu0 0.0
    %1757 = vmatpush1.msra.mxu0 %v1739
    %1758 = vmatprep.subr.mxu0 0.0
    %1759 = vmatpush1.msra.mxu0 %v1740
    %1760 = vmatprep.subr.mxu0 0.0
    %1761 = vmatpush1.msra.mxu0 %v1741
    %1762 = vmatprep.subr.mxu0 0.0
    %1763 = vmatpush1.msra.mxu0 %v1742
    %1764 = vmatprep.subr.mxu0 0.0
    %1765 = vmatpush1.msra.mxu0 %v1743
    %1766 = vmatprep.subr.mxu0 0.0
    %1767 = vmatpush1.msra.mxu0 %v1744
    %1768 = vmatprep.subr.mxu0 0.0
    %1769 = vmatpush1.msra.mxu0 %v1745
    %1770 = vmatprep.subr.mxu0 0.0
    %1771 = vmatpush1.msra.mxu0 %v1746
    %1772 = vmatprep.subr.mxu0 0.0
    %1773 = vmatpush1.msra.mxu0 %v1747
    %1774 = vmatprep.subr.mxu0 0.0
    %1775 = vmatpush1.msra.mxu0 %v1748
    %1776 = vmatprep.subr.mxu0 0.0
    %1777 = vmatpush1.msra.mxu0 %v1749
    %1778 = vmatprep.subr.mxu0 0.0
    %1779 = vmatpush1.msra.mxu0 %v1750
    %1780 = vmatprep.subr.mxu0 0.0
    %1781 = vmatpush1.msra.mxu0 %v1751
    %1782 = vmatprep.subr.mxu0 0.0
    %1783 = vmatpush1.msra.mxu0 %v1752
    %1784 = vmatprep.subr.mxu0 0.0
    %1785 = vmatpush1.msra.mxu0 %v1753
    %1786 = vmatprep.subr.mxu0 0.0
    %1787 = vmatpush1.msra.mxu0 0.0
    %1788 = vmatprep.subr.mxu0 0.0
    %1789 = vmatpush1.msra.mxu0 0.0
    %1790 = vmatprep.subr.mxu0 0.0
    %1791 = vmatpush1.msra.mxu0 0.0
    %1792 = vmatprep.subr.mxu0 0.0
    %1793 = vmatpush1.msra.mxu0 0.0
    %1794 = vmatprep.subr.mxu0 0.0
    %1795 = vmatpush1.msra.mxu0 0.0
    %1796 = vmatprep.subr.mxu0 0.0
    %1797 = vmatpush1.msra.mxu0 0.0
    %1798 = vmatprep.subr.mxu0 0.0
    %1799 = vmatpush1.msra.mxu0 0.0
    %1800 = vmatprep.subr.mxu0 0.0
    %1801 = vmatpush1.msra.mxu0 0.0
    %1802 = vmatprep.subr.mxu0 0.0
    %1803 = vmatpush1.msra.mxu0 0.0
    %1804 = vmatprep.subr.mxu0 0.0
    %1805 = vmatpush1.msra.mxu0 0.0
    %1806 = vmatprep.subr.mxu0 0.0
    %1807 = vmatpush1.msra.mxu0 0.0
    %1808 = vmatprep.subr.mxu0 0.0
    %1809 = vmatpush1.msra.mxu0 0.0
    %1810 = vmatprep.subr.mxu0 0.0
    %1811 = vmatpush1.msra.mxu0 0.0
    %1812 = vmatprep.subr.mxu0 0.0
    %1813 = vmatpush1.msra.mxu0 0.0
    %1814 = vmatprep.subr.mxu0 0.0
    %1815 = vmatpush1.msra.mxu0 0.0
    %1816 = vmatprep.subr.mxu0 0.0
    %1817 = vmatpush1.msra.mxu0 0.0
    %1818 = vmatprep.mubr.f32.mxu0 0.0
    %1819 = vmatmul.mubr.f32.gmra.mrb[0].mxu0 %v1706
    %v1820 = vpop.f32.mrb[0].mxu0
    %v1821 = vadd.f32 0.0, %v1820
    %v1822 = vpop.f32.mrb[0].mxu0
    %1823 = vmatprep.mubr.f32.mxu0 0.0
    %1824 = vmatmul.mubr.f32.gmra.mrb[0].mxu0 %v1707
    %v1825 = vpop.f32.mrb[0].mxu0
    %v1826 = vadd.f32 0.0, %v1825
    %v1827 = vpop.f32.mrb[0].mxu0
    %1828 = vdwg.mxu0
    %1829 = vmatprep.subr.mxu0 0.0
    %1830 = vmatpush1.msra.mxu0 %v1721
    %1831 = vmatprep.subr.mxu0 0.0
    %1832 = vmatpush1.msra.mxu0 %v1722
    %1833 = vmatprep.subr.mxu0 0.0
    %1834 = vmatpush1.msra.mxu0 %v1723
    %1835 = vmatprep.subr.mxu0 0.0
    %1836 = vmatpush1.msra.mxu0 %v1724
    %1837 = vmatprep.subr.mxu0 0.0
    %1838 = vmatpush1.msra.mxu0 %v1725
    %1839 = vmatprep.subr.mxu0 0.0
    %1840 = vmatpush1.msra.mxu0 %v1726
    %1841 = vmatprep.subr.mxu0 0.0
    %1842 = vmatpush1.msra.mxu0 %v1727
    %1843 = vmatprep.subr.mxu0 0.0
    %1844 = vmatpush1.msra.mxu0 %v1728
    %1845 = vmatprep.subr.mxu0 0.0
    %1846 = vmatpush1.msra.mxu0 %v1729
    %1847 = vmatprep.subr.mxu0 0.0
    %1848 = vmatpush1.msra.mxu0 %v1730
    %1849 = vmatprep.subr.mxu0 0.0
    %1850 = vmatpush1.msra.mxu0 %v1731
    %1851 = vmatprep.subr.mxu0 0.0
    %1852 = vmatpush1.msra.mxu0 %v1732
    %1853 = vmatprep.subr.mxu0 0.0
    %1854 = vmatpush1.msra.mxu0 %v1733
    %1855 = vmatprep.subr.mxu0 0.0
    %1856 = vmatpush1.msra.mxu0 %v1734
    %1857 = vmatprep.subr.mxu0 0.0
    %1858 = vmatpush1.msra.mxu0 %v1735
    %1859 = vmatprep.subr.mxu0 0.0
    %1860 = vmatpush1.msra.mxu0 %v1736
    %1861 = vmatprep.subr.mxu0 0.0
    %1862 = vmatpush1.msra.mxu0 0.0
    %1863 = vmatprep.subr.mxu0 0.0
    %1864 = vmatpush1.msra.mxu0 0.0
    %1865 = vmatprep.subr.mxu0 0.0
    %1866 = vmatpush1.msra.mxu0 0.0
    %1867 = vmatprep.subr.mxu0 0.0
    %1868 = vmatpush1.msra.mxu0 0.0
    %1869 = vmatprep.subr.mxu0 0.0
    %1870 = vmatpush1.msra.mxu0 0.0
    %1871 = vmatprep.subr.mxu0 0.0
    %1872 = vmatpush1.msra.mxu0 0.0
    %1873 = vmatprep.subr.mxu0 0.0
    %1874 = vmatpush1.msra.mxu0 0.0
    %1875 = vmatprep.subr.mxu0 0.0
    %1876 = vmatpush1.msra.mxu0 0.0
    %1877 = vmatprep.subr.mxu0 0.0
    %1878 = vmatpush1.msra.mxu0 0.0
    %1879 = vmatprep.subr.mxu0 0.0
    %1880 = vmatpush1.msra.mxu0 0.0
    %1881 = vmatprep.subr.mxu0 0.0
    %1882 = vmatpush1.msra.mxu0 0.0
    %1883 = vmatprep.subr.mxu0 0.0
    %1884 = vmatpush1.msra.mxu0 0.0
    %1885 = vmatprep.subr.mxu0 0.0
    %1886 = vmatpush1.msra.mxu0 0.0
    %1887 = vmatprep.subr.mxu0 0.0
    %1888 = vmatpush1.msra.mxu0 0.0
    %1889 = vmatprep.subr.mxu0 0.0
    %1890 = vmatpush1.msra.mxu0 0.0
    %1891 = vmatprep.subr.mxu0 0.0
    %1892 = vmatpush1.msra.mxu0 0.0
    %1893 = vmatprep.mubr.f32.mxu0 0.0
    %1894 = vmatmul.mubr.f32.gmra.mrb[0].mxu0 %v1712
    %v1895 = vpop.f32.mrb[0].mxu0
    %v1896 = vadd.f32 %v1821, %v1895
    %v1897 = vpop.f32.mrb[0].mxu0
    %1898 = vmatprep.mubr.f32.mxu0 0.0
    %1899 = vmatmul.mubr.f32.gmra.mrb[0].mxu0 %v1713
    %v1900 = vpop.f32.mrb[0].mxu0
    %v1901 = vadd.f32 %v1826, %v1900
    %v1902 = vpop.f32.mrb[0].mxu0
    %1903 = vdwg.mxu0
    %s1904 = scalar_lea.vmem [#allocation2], 1792
    %v1905 = vld [vmem:[%s1904] sm:$0xff]
    %v1906 = vld [vmem:[%s1904 + $0x8] sm:$0xff]
    %v1907 = vld [vmem:[%s1904 + $0x10] sm:$0xff]
    %v1908 = vld [vmem:[%s1904 + $0x18] sm:$0xff]
    %v1909 = vld [vmem:[%s1904 + $0x20] sm:$0xff]
    %v1910 = vld [vmem:[%s1904 + $0x28] sm:$0xff]
    %v1911 = vld [vmem:[%s1904 + $0x30] sm:$0xff]
    %v1912 = vld [vmem:[%s1904 + $0x38] sm:$0xff]
    %v1913 = vld [vmem:[%s1904 + $0x40] sm:$0xff]
    %v1914 = vld [vmem:[%s1904 + $0x48] sm:$0xff]
    %v1915 = vld [vmem:[%s1904 + $0x50] sm:$0xff]
    %v1916 = vld [vmem:[%s1904 + $0x58] sm:$0xff]
    %v1917 = vld [vmem:[%s1904 + $0x60] sm:$0xff]
    %v1918 = vld [vmem:[%s1904 + $0x68] sm:$0xff]
    %v1919 = vld [vmem:[%s1904 + $0x70] sm:$0xff]
    %v1920 = vld [vmem:[%s1904 + $0x78] sm:$0xff]
    %1921 = vmatprep.subr.mxu0 0.0
    %1922 = vmatpush1.msra.mxu0 %v1905
    %1923 = vmatprep.subr.mxu0 0.0
    %1924 = vmatpush1.msra.mxu0 %v1906
    %1925 = vmatprep.subr.mxu0 0.0
    %1926 = vmatpush1.msra.mxu0 %v1907
    %1927 = vmatprep.subr.mxu0 0.0
    %1928 = vmatpush1.msra.mxu0 %v1908
    %1929 = vmatprep.subr.mxu0 0.0
    %1930 = vmatpush1.msra.mxu0 %v1909
    %1931 = vmatprep.subr.mxu0 0.0
    %1932 = vmatpush1.msra.mxu0 %v1910
    %1933 = vmatprep.subr.mxu0 0.0
    %1934 = vmatpush1.msra.mxu0 %v1911
    %1935 = vmatprep.subr.mxu0 0.0
    %1936 = vmatpush1.msra.mxu0 %v1912
    %1937 = vmatprep.subr.mxu0 0.0
    %1938 = vmatpush1.msra.mxu0 %v1913
    %1939 = vmatprep.subr.mxu0 0.0
    %1940 = vmatpush1.msra.mxu0 %v1914
    %1941 = vmatprep.subr.mxu0 0.0
    %1942 = vmatpush1.msra.mxu0 %v1915
    %1943 = vmatprep.subr.mxu0 0.0
    %1944 = vmatpush1.msra.mxu0 %v1916
    %1945 = vmatprep.subr.mxu0 0.0
    %1946 = vmatpush1.msra.mxu0 %v1917
    %1947 = vmatprep.subr.mxu0 0.0
    %1948 = vmatpush1.msra.mxu0 %v1918
    %1949 = vmatprep.subr.mxu0 0.0
    %1950 = vmatpush1.msra.mxu0 %v1919
    %1951 = vmatprep.subr.mxu0 0.0
    %1952 = vmatpush1.msra.mxu0 %v1920
    %1953 = vmatprep.subr.mxu0 0.0
    %1954 = vmatpush1.msra.mxu0 0.0
    %1955 = vmatprep.subr.mxu0 0.0
    %1956 = vmatpush1.msra.mxu0 0.0
    %1957 = vmatprep.subr.mxu0 0.0
    %1958 = vmatpush1.msra.mxu0 0.0
    %1959 = vmatprep.subr.mxu0 0.0
    %1960 = vmatpush1.msra.mxu0 0.0
    %1961 = vmatprep.subr.mxu0 0.0
    %1962 = vmatpush1.msra.mxu0 0.0
    %1963 = vmatprep.subr.mxu0 0.0
    %1964 = vmatpush1.msra.mxu0 0.0
    %1965 = vmatprep.subr.mxu0 0.0
    %1966 = vmatpush1.msra.mxu0 0.0
    %1967 = vmatprep.subr.mxu0 0.0
    %1968 = vmatpush1.msra.mxu0 0.0
    %1969 = vmatprep.subr.mxu0 0.0
    %1970 = vmatpush1.msra.mxu0 0.0
    %1971 = vmatprep.subr.mxu0 0.0
    %1972 = vmatpush1.msra.mxu0 0.0
    %1973 = vmatprep.subr.mxu0 0.0
    %1974 = vmatpush1.msra.mxu0 0.0
    %1975 = vmatprep.subr.mxu0 0.0
    %1976 = vmatpush1.msra.mxu0 0.0
    %1977 = vmatprep.subr.mxu0 0.0
    %1978 = vmatpush1.msra.mxu0 0.0
    %1979 = vmatprep.subr.mxu0 0.0
    %1980 = vmatpush1.msra.mxu0 0.0
    %1981 = vmatprep.subr.mxu0 0.0
    %1982 = vmatpush1.msra.mxu0 0.0
    %1983 = vmatprep.subr.mxu0 0.0
    %1984 = vmatpush1.msra.mxu0 0.0
    %1985 = vmatprep.mubr.f32.mxu0 0.0
    %1986 = vmatmul.mubr.f32.gmra.mrb[0].mxu0 %v1718
    %v1987 = vpop.f32.mrb[0].mxu0
    %v1988 = vadd.f32 0.0, %v1987
    %v1989 = vpop.f32.mrb[0].mxu0
    %1990 = vmatprep.mubr.f32.mxu0 0.0
    %1991 = vmatmul.mubr.f32.gmra.mrb[0].mxu0 %v1719
    %v1992 = vpop.f32.mrb[0].mxu0
    %v1993 = vadd.f32 0.0, %v1992
    %v1994 = vpop.f32.mrb[0].mxu0
    %1995 = vdwg.mxu0
    %v1996 = vadd.f32 %v1896, %v1988
    %v1997 = vadd.f32 %v1901, %v1993
    %s1998 = scalar_lea.vmem [#allocation4], 4
    %v1999 = vld [vmem:[%s1998] sm:$0x1]
    %v2001 = vlaneseq
    %v2002 = vshrl.u32 %v2001, 7
    %v2003 = vsub.s32 0, %v2002
    %v2004 = vrot.slane %v1999, %v2003
    %v2006 = vadd.f32 %v1996, %v2004
    %v2007 = vadd.f32 %v1997, %v2004
    %v2008 = vmax.f32 %v2006, 0.0
    %v2009 = vmax.f32 %v2007, 0.0
    %s2010 = scalar_lea.vmem [#allocation6], 512
    %v2011 = vld [vmem:[%s2010] sm:$0xff]
    %v2012 = vld [vmem:[%s2010 + $0x8] sm:$0xff]
    %v2013 = vld [vmem:[%s2010 + $0x10] sm:$0xff]
    %v2014 = vld [vmem:[%s2010 + $0x18] sm:$0xff]
    %v2015 = vld [vmem:[%s2010 + $0x20] sm:$0xff]
    %v2016 = vld [vmem:[%s2010 + $0x28] sm:$0xff]
    %v2017 = vld [vmem:[%s2010 + $0x30] sm:$0xff]
    %v2018 = vld [vmem:[%s2010 + $0x38] sm:$0xff]
    %v2019 = vld [vmem:[%s2010 + $0x40] sm:$0xff]
    %v2020 = vld [vmem:[%s2010 + $0x48] sm:$0xff]
    %v2021 = vld [vmem:[%s2010 + $0x50] sm:$0xff]
    %v2022 = vld [vmem:[%s2010 + $0x58] sm:$0xff]
    %v2023 = vld [vmem:[%s2010 + $0x60] sm:$0xff]
    %v2024 = vld [vmem:[%s2010 + $0x68] sm:$0xff]
    %v2025 = vld [vmem:[%s2010 + $0x70] sm:$0xff]
    %v2026 = vld [vmem:[%s2010 + $0x78] sm:$0xff]
    %s2027 = scalar_lea.vmem [#allocation7], 4
    %v2028 = vld [vmem:[%s2027] sm:$0x1]
    %v2030 = vlaneseq
    %v2031 = vshrl.u32 %v2030, 7
    %v2032 = vsub.s32 0, %v2031
    %v2033 = vrot.slane %v2028, %v2032
    %2035 = vmatprep.subr.mxu0 0.0
    %2036 = vmatpush1.msra.mxu0 %v2011
    %2037 = vmatprep.subr.mxu0 0.0
    %2038 = vmatpush1.msra.mxu0 %v2012
    %2039 = vmatprep.subr.mxu0 0.0
    %2040 = vmatpush1.msra.mxu0 %v2013
    %2041 = vmatprep.subr.mxu0 0.0
    %2042 = vmatpush1.msra.mxu0 %v2014
    %2043 = vmatprep.subr.mxu0 0.0
    %2044 = vmatpush1.msra.mxu0 %v2015
    %2045 = vmatprep.subr.mxu0 0.0
    %2046 = vmatpush1.msra.mxu0 %v2016
    %2047 = vmatprep.subr.mxu0 0.0
    %2048 = vmatpush1.msra.mxu0 %v2017
    %2049 = vmatprep.subr.mxu0 0.0
    %2050 = vmatpush1.msra.mxu0 %v2018
    %2051 = vmatprep.subr.mxu0 0.0
    %2052 = vmatpush1.msra.mxu0 %v2019
    %2053 = vmatprep.subr.mxu0 0.0
    %2054 = vmatpush1.msra.mxu0 %v2020
    %2055 = vmatprep.subr.mxu0 0.0
    %2056 = vmatpush1.msra.mxu0 %v2021
    %2057 = vmatprep.subr.mxu0 0.0
    %2058 = vmatpush1.msra.mxu0 %v2022
    %2059 = vmatprep.subr.mxu0 0.0
    %2060 = vmatpush1.msra.mxu0 %v2023
    %2061 = vmatprep.subr.mxu0 0.0
    %2062 = vmatpush1.msra.mxu0 %v2024
    %2063 = vmatprep.subr.mxu0 0.0
    %2064 = vmatpush1.msra.mxu0 %v2025
    %2065 = vmatprep.subr.mxu0 0.0
    %2066 = vmatpush1.msra.mxu0 %v2026
    %2067 = vmatprep.subr.mxu0 0.0
    %2068 = vmatpush1.msra.mxu0 0.0
    %2069 = vmatprep.subr.mxu0 0.0
    %2070 = vmatpush1.msra.mxu0 0.0
    %2071 = vmatprep.subr.mxu0 0.0
    %2072 = vmatpush1.msra.mxu0 0.0
    %2073 = vmatprep.subr.mxu0 0.0
    %2074 = vmatpush1.msra.mxu0 0.0
    %2075 = vmatprep.subr.mxu0 0.0
    %2076 = vmatpush1.msra.mxu0 0.0
    %2077 = vmatprep.subr.mxu0 0.0
    %2078 = vmatpush1.msra.mxu0 0.0
    %2079 = vmatprep.subr.mxu0 0.0
    %2080 = vmatpush1.msra.mxu0 0.0
    %2081 = vmatprep.subr.mxu0 0.0
    %2082 = vmatpush1.msra.mxu0 0.0
    %2083 = vmatprep.subr.mxu0 0.0
    %2084 = vmatpush1.msra.mxu0 0.0
    %2085 = vmatprep.subr.mxu0 0.0
    %2086 = vmatpush1.msra.mxu0 0.0
    %2087 = vmatprep.subr.mxu0 0.0
    %2088 = vmatpush1.msra.mxu0 0.0
    %2089 = vmatprep.subr.mxu0 0.0
    %2090 = vmatpush1.msra.mxu0 0.0
    %2091 = vmatprep.subr.mxu0 0.0
    %2092 = vmatpush1.msra.mxu0 0.0
    %2093 = vmatprep.subr.mxu0 0.0
    %2094 = vmatpush1.msra.mxu0 0.0
    %2095 = vmatprep.subr.mxu0 0.0
    %2096 = vmatpush1.msra.mxu0 0.0
    %2097 = vmatprep.subr.mxu0 0.0
    %2098 = vmatpush1.msra.mxu0 0.0
    %2099 = vmatprep.mubr.f32.mxu0 0.0
    %2100 = vmatmul.mubr.f32.gmra.mrb[0].mxu0 %v2008
    %v2101 = vpop.f32.mrb[0].mxu0
    %v2102 = vadd.f32 %v2033, %v2101
    %v2103 = vpop.f32.mrb[0].mxu0
    %2104 = vmatprep.mubr.f32.mxu0 0.0
    %2105 = vmatmul.mubr.f32.gmra.mrb[0].mxu0 %v2009
    %v2106 = vpop.f32.mrb[0].mxu0
    %v2107 = vadd.f32 %v2033, %v2106
    %v2108 = vpop.f32.mrb[0].mxu0
    %2109 = vdwg.mxu0
    %v2110 = vadd.f32 %v1704, %v2102
    %v2111 = vadd.f32 %v1705, %v2107
    %v2112 = vmax.f32 %v2110, 0.0
    %v2113 = vmax.f32 %v2111, 0.0
    %v2114 = vrot.slane %v2112, 7
    %v2115 = vrot.slane %v2113, 7
    %v2116 = vsel %vm88, %v2114, %v2115
    %v2117 = vsel %vm88, %v2115, %v2114
    %v2118 = vsel %vm78, %v2117, 0.0
    %v2119 = vsel %vm79, %v2116, 0.0
    %v2120 = vrot.slane %v2112, 1
    %v2121 = vrot.slane %v2113, 1
    %v2122 = vsel %vm95, %v2120, %v2121
    %v2123 = vsel %vm95, %v2121, %v2120
    %v2124 = vsel %vm80, %v2122, 0.0
    %v2125 = vsel %vm81, %v2123, 0.0
    %s2126 = scalar_lea.vmem [#allocation2], 1920
    %v2127 = vld [vmem:[%s2126] sm:$0xff]
    %v2128 = vld [vmem:[%s2126 + $0x8] sm:$0xff]
    %v2129 = vld [vmem:[%s2126 + $0x10] sm:$0xff]
    %v2130 = vld [vmem:[%s2126 + $0x18] sm:$0xff]
    %v2131 = vld [vmem:[%s2126 + $0x20] sm:$0xff]
    %v2132 = vld [vmem:[%s2126 + $0x28] sm:$0xff]
    %v2133 = vld [vmem:[%s2126 + $0x30] sm:$0xff]
    %v2134 = vld [vmem:[%s2126 + $0x38] sm:$0xff]
    %v2135 = vld [vmem:[%s2126 + $0x40] sm:$0xff]
    %v2136 = vld [vmem:[%s2126 + $0x48] sm:$0xff]
    %v2137 = vld [vmem:[%s2126 + $0x50] sm:$0xff]
    %v2138 = vld [vmem:[%s2126 + $0x58] sm:$0xff]
    %v2139 = vld [vmem:[%s2126 + $0x60] sm:$0xff]
    %v2140 = vld [vmem:[%s2126 + $0x68] sm:$0xff]
    %v2141 = vld [vmem:[%s2126 + $0x70] sm:$0xff]
    %v2142 = vld [vmem:[%s2126 + $0x78] sm:$0xff]
    %s2143 = scalar_lea.vmem [#allocation2], 2048
    %v2144 = vld [vmem:[%s2143] sm:$0xff]
    %v2145 = vld [vmem:[%s2143 + $0x8] sm:$0xff]
    %v2146 = vld [vmem:[%s2143 + $0x10] sm:$0xff]
    %v2147 = vld [vmem:[%s2143 + $0x18] sm:$0xff]
    %v2148 = vld [vmem:[%s2143 + $0x20] sm:$0xff]
    %v2149 = vld [vmem:[%s2143 + $0x28] sm:$0xff]
    %v2150 = vld [vmem:[%s2143 + $0x30] sm:$0xff]
    %v2151 = vld [vmem:[%s2143 + $0x38] sm:$0xff]
    %v2152 = vld [vmem:[%s2143 + $0x40] sm:$0xff]
    %v2153 = vld [vmem:[%s2143 + $0x48] sm:$0xff]
    %v2154 = vld [vmem:[%s2143 + $0x50] sm:$0xff]
    %v2155 = vld [vmem:[%s2143 + $0x58] sm:$0xff]
    %v2156 = vld [vmem:[%s2143 + $0x60] sm:$0xff]
    %v2157 = vld [vmem:[%s2143 + $0x68] sm:$0xff]
    %v2158 = vld [vmem:[%s2143 + $0x70] sm:$0xff]
    %v2159 = vld [vmem:[%s2143 + $0x78] sm:$0xff]
    %2160 = vmatprep.subr.mxu0 0.0
    %2161 = vmatpush1.msra.mxu0 %v2144
    %2162 = vmatprep.subr.mxu0 0.0
    %2163 = vmatpush1.msra.mxu0 %v2145
    %2164 = vmatprep.subr.mxu0 0.0
    %2165 = vmatpush1.msra.mxu0 %v2146
    %2166 = vmatprep.subr.mxu0 0.0
    %2167 = vmatpush1.msra.mxu0 %v2147
    %2168 = vmatprep.subr.mxu0 0.0
    %2169 = vmatpush1.msra.mxu0 %v2148
    %2170 = vmatprep.subr.mxu0 0.0
    %2171 = vmatpush1.msra.mxu0 %v2149
    %2172 = vmatprep.subr.mxu0 0.0
    %2173 = vmatpush1.msra.mxu0 %v2150
    %2174 = vmatprep.subr.mxu0 0.0
    %2175 = vmatpush1.msra.mxu0 %v2151
    %2176 = vmatprep.subr.mxu0 0.0
    %2177 = vmatpush1.msra.mxu0 %v2152
    %2178 = vmatprep.subr.mxu0 0.0
    %2179 = vmatpush1.msra.mxu0 %v2153
    %2180 = vmatprep.subr.mxu0 0.0
    %2181 = vmatpush1.msra.mxu0 %v2154
    %2182 = vmatprep.subr.mxu0 0.0
    %2183 = vmatpush1.msra.mxu0 %v2155
    %2184 = vmatprep.subr.mxu0 0.0
    %2185 = vmatpush1.msra.mxu0 %v2156
    %2186 = vmatprep.subr.mxu0 0.0
    %2187 = vmatpush1.msra.mxu0 %v2157
    %2188 = vmatprep.subr.mxu0 0.0
    %2189 = vmatpush1.msra.mxu0 %v2158
    %2190 = vmatprep.subr.mxu0 0.0
    %2191 = vmatpush1.msra.mxu0 %v2159
    %2192 = vmatprep.subr.mxu0 0.0
    %2193 = vmatpush1.msra.mxu0 0.0
    %2194 = vmatprep.subr.mxu0 0.0
    %2195 = vmatpush1.msra.mxu0 0.0
    %2196 = vmatprep.subr.mxu0 0.0
    %2197 = vmatpush1.msra.mxu0 0.0
    %2198 = vmatprep.subr.mxu0 0.0
    %2199 = vmatpush1.msra.mxu0 0.0
    %2200 = vmatprep.subr.mxu0 0.0
    %2201 = vmatpush1.msra.mxu0 0.0
    %2202 = vmatprep.subr.mxu0 0.0
    %2203 = vmatpush1.msra.mxu0 0.0
    %2204 = vmatprep.subr.mxu0 0.0
    %2205 = vmatpush1.msra.mxu0 0.0
    %2206 = vmatprep.subr.mxu0 0.0
    %2207 = vmatpush1.msra.mxu0 0.0
    %2208 = vmatprep.subr.mxu0 0.0
    %2209 = vmatpush1.msra.mxu0 0.0
    %2210 = vmatprep.subr.mxu0 0.0
    %2211 = vmatpush1.msra.mxu0 0.0
    %2212 = vmatprep.subr.mxu0 0.0
    %2213 = vmatpush1.msra.mxu0 0.0
    %2214 = vmatprep.subr.mxu0 0.0
    %2215 = vmatpush1.msra.mxu0 0.0
    %2216 = vmatprep.subr.mxu0 0.0
    %2217 = vmatpush1.msra.mxu0 0.0
    %2218 = vmatprep.subr.mxu0 0.0
    %2219 = vmatpush1.msra.mxu0 0.0
    %2220 = vmatprep.subr.mxu0 0.0
    %2221 = vmatpush1.msra.mxu0 0.0
    %2222 = vmatprep.subr.mxu0 0.0
    %2223 = vmatpush1.msra.mxu0 0.0
    %2224 = vmatprep.mubr.f32.mxu0 0.0
    %2225 = vmatmul.mubr.f32.gmra.mrb[0].mxu0 %v2112
    %v2226 = vpop.f32.mrb[0].mxu0
    %v2227 = vadd.f32 0.0, %v2226
    %v2228 = vpop.f32.mrb[0].mxu0
    %2229 = vmatprep.mubr.f32.mxu0 0.0
    %2230 = vmatmul.mubr.f32.gmra.mrb[0].mxu0 %v2113
    %v2231 = vpop.f32.mrb[0].mxu0
    %v2232 = vadd.f32 0.0, %v2231
    %v2233 = vpop.f32.mrb[0].mxu0
    %2234 = vdwg.mxu0
    %2235 = vmatprep.subr.mxu0 0.0
    %2236 = vmatpush1.msra.mxu0 %v2127
    %2237 = vmatprep.subr.mxu0 0.0
    %2238 = vmatpush1.msra.mxu0 %v2128
    %2239 = vmatprep.subr.mxu0 0.0
    %2240 = vmatpush1.msra.mxu0 %v2129
    %2241 = vmatprep.subr.mxu0 0.0
    %2242 = vmatpush1.msra.mxu0 %v2130
    %2243 = vmatprep.subr.mxu0 0.0
    %2244 = vmatpush1.msra.mxu0 %v2131
    %2245 = vmatprep.subr.mxu0 0.0
    %2246 = vmatpush1.msra.mxu0 %v2132
    %2247 = vmatprep.subr.mxu0 0.0
    %2248 = vmatpush1.msra.mxu0 %v2133
    %2249 = vmatprep.subr.mxu0 0.0
    %2250 = vmatpush1.msra.mxu0 %v2134
    %2251 = vmatprep.subr.mxu0 0.0
    %2252 = vmatpush1.msra.mxu0 %v2135
    %2253 = vmatprep.subr.mxu0 0.0
    %2254 = vmatpush1.msra.mxu0 %v2136
    %2255 = vmatprep.subr.mxu0 0.0
    %2256 = vmatpush1.msra.mxu0 %v2137
    %2257 = vmatprep.subr.mxu0 0.0
    %2258 = vmatpush1.msra.mxu0 %v2138
    %2259 = vmatprep.subr.mxu0 0.0
    %2260 = vmatpush1.msra.mxu0 %v2139
    %2261 = vmatprep.subr.mxu0 0.0
    %2262 = vmatpush1.msra.mxu0 %v2140
    %2263 = vmatprep.subr.mxu0 0.0
    %2264 = vmatpush1.msra.mxu0 %v2141
    %2265 = vmatprep.subr.mxu0 0.0
    %2266 = vmatpush1.msra.mxu0 %v2142
    %2267 = vmatprep.subr.mxu0 0.0
    %2268 = vmatpush1.msra.mxu0 0.0
    %2269 = vmatprep.subr.mxu0 0.0
    %2270 = vmatpush1.msra.mxu0 0.0
    %2271 = vmatprep.subr.mxu0 0.0
    %2272 = vmatpush1.msra.mxu0 0.0
    %2273 = vmatprep.subr.mxu0 0.0
    %2274 = vmatpush1.msra.mxu0 0.0
    %2275 = vmatprep.subr.mxu0 0.0
    %2276 = vmatpush1.msra.mxu0 0.0
    %2277 = vmatprep.subr.mxu0 0.0
    %2278 = vmatpush1.msra.mxu0 0.0
    %2279 = vmatprep.subr.mxu0 0.0
    %2280 = vmatpush1.msra.mxu0 0.0
    %2281 = vmatprep.subr.mxu0 0.0
    %2282 = vmatpush1.msra.mxu0 0.0
    %2283 = vmatprep.subr.mxu0 0.0
    %2284 = vmatpush1.msra.mxu0 0.0
    %2285 = vmatprep.subr.mxu0 0.0
    %2286 = vmatpush1.msra.mxu0 0.0
    %2287 = vmatprep.subr.mxu0 0.0
    %2288 = vmatpush1.msra.mxu0 0.0
    %2289 = vmatprep.subr.mxu0 0.0
    %2290 = vmatpush1.msra.mxu0 0.0
    %2291 = vmatprep.subr.mxu0 0.0
    %2292 = vmatpush1.msra.mxu0 0.0
    %2293 = vmatprep.subr.mxu0 0.0
    %2294 = vmatpush1.msra.mxu0 0.0
    %2295 = vmatprep.subr.mxu0 0.0
    %2296 = vmatpush1.msra.mxu0 0.0
    %2297 = vmatprep.subr.mxu0 0.0
    %2298 = vmatpush1.msra.mxu0 0.0
    %2299 = vmatprep.mubr.f32.mxu0 0.0
    %2300 = vmatmul.mubr.f32.gmra.mrb[0].mxu0 %v2118
    %v2301 = vpop.f32.mrb[0].mxu0
    %v2302 = vadd.f32 %v2227, %v2301
    %v2303 = vpop.f32.mrb[0].mxu0
    %2304 = vmatprep.mubr.f32.mxu0 0.0
    %2305 = vmatmul.mubr.f32.gmra.mrb[0].mxu0 %v2119
    %v2306 = vpop.f32.mrb[0].mxu0
    %v2307 = vadd.f32 %v2232, %v2306
    %v2308 = vpop.f32.mrb[0].mxu0
    %2309 = vdwg.mxu0
    %s2310 = scalar_lea.vmem [#allocation2], 2176
    %v2311 = vld [vmem:[%s2310] sm:$0xff]
    %v2312 = vld [vmem:[%s2310 + $0x8] sm:$0xff]
    %v2313 = vld [vmem:[%s2310 + $0x10] sm:$0xff]
    %v2314 = vld [vmem:[%s2310 + $0x18] sm:$0xff]
    %v2315 = vld [vmem:[%s2310 + $0x20] sm:$0xff]
    %v2316 = vld [vmem:[%s2310 + $0x28] sm:$0xff]
    %v2317 = vld [vmem:[%s2310 + $0x30] sm:$0xff]
    %v2318 = vld [vmem:[%s2310 + $0x38] sm:$0xff]
    %v2319 = vld [vmem:[%s2310 + $0x40] sm:$0xff]
    %v2320 = vld [vmem:[%s2310 + $0x48] sm:$0xff]
    %v2321 = vld [vmem:[%s2310 + $0x50] sm:$0xff]
    %v2322 = vld [vmem:[%s2310 + $0x58] sm:$0xff]
    %v2323 = vld [vmem:[%s2310 + $0x60] sm:$0xff]
    %v2324 = vld [vmem:[%s2310 + $0x68] sm:$0xff]
    %v2325 = vld [vmem:[%s2310 + $0x70] sm:$0xff]
    %v2326 = vld [vmem:[%s2310 + $0x78] sm:$0xff]
    %2327 = vmatprep.subr.mxu0 0.0
    %2328 = vmatpush1.msra.mxu0 %v2311
    %2329 = vmatprep.subr.mxu0 0.0
    %2330 = vmatpush1.msra.mxu0 %v2312
    %2331 = vmatprep.subr.mxu0 0.0
    %2332 = vmatpush1.msra.mxu0 %v2313
    %2333 = vmatprep.subr.mxu0 0.0
    %2334 = vmatpush1.msra.mxu0 %v2314
    %2335 = vmatprep.subr.mxu0 0.0
    %2336 = vmatpush1.msra.mxu0 %v2315
    %2337 = vmatprep.subr.mxu0 0.0
    %2338 = vmatpush1.msra.mxu0 %v2316
    %2339 = vmatprep.subr.mxu0 0.0
    %2340 = vmatpush1.msra.mxu0 %v2317
    %2341 = vmatprep.subr.mxu0 0.0
    %2342 = vmatpush1.msra.mxu0 %v2318
    %2343 = vmatprep.subr.mxu0 0.0
    %2344 = vmatpush1.msra.mxu0 %v2319
    %2345 = vmatprep.subr.mxu0 0.0
    %2346 = vmatpush1.msra.mxu0 %v2320
    %2347 = vmatprep.subr.mxu0 0.0
    %2348 = vmatpush1.msra.mxu0 %v2321
    %2349 = vmatprep.subr.mxu0 0.0
    %2350 = vmatpush1.msra.mxu0 %v2322
    %2351 = vmatprep.subr.mxu0 0.0
    %2352 = vmatpush1.msra.mxu0 %v2323
    %2353 = vmatprep.subr.mxu0 0.0
    %2354 = vmatpush1.msra.mxu0 %v2324
    %2355 = vmatprep.subr.mxu0 0.0
    %2356 = vmatpush1.msra.mxu0 %v2325
    %2357 = vmatprep.subr.mxu0 0.0
    %2358 = vmatpush1.msra.mxu0 %v2326
    %2359 = vmatprep.subr.mxu0 0.0
    %2360 = vmatpush1.msra.mxu0 0.0
    %2361 = vmatprep.subr.mxu0 0.0
    %2362 = vmatpush1.msra.mxu0 0.0
    %2363 = vmatprep.subr.mxu0 0.0
    %2364 = vmatpush1.msra.mxu0 0.0
    %2365 = vmatprep.subr.mxu0 0.0
    %2366 = vmatpush1.msra.mxu0 0.0
    %2367 = vmatprep.subr.mxu0 0.0
    %2368 = vmatpush1.msra.mxu0 0.0
    %2369 = vmatprep.subr.mxu0 0.0
    %2370 = vmatpush1.msra.mxu0 0.0
    %2371 = vmatprep.subr.mxu0 0.0
    %2372 = vmatpush1.msra.mxu0 0.0
    %2373 = vmatprep.subr.mxu0 0.0
    %2374 = vmatpush1.msra.mxu0 0.0
    %2375 = vmatprep.subr.mxu0 0.0
    %2376 = vmatpush1.msra.mxu0 0.0
    %2377 = vmatprep.subr.mxu0 0.0
    %2378 = vmatpush1.msra.mxu0 0.0
    %2379 = vmatprep.subr.mxu0 0.0
    %2380 = vmatpush1.msra.mxu0 0.0
    %2381 = vmatprep.subr.mxu0 0.0
    %2382 = vmatpush1.msra.mxu0 0.0
    %2383 = vmatprep.subr.mxu0 0.0
    %2384 = vmatpush1.msra.mxu0 0.0
    %2385 = vmatprep.subr.mxu0 0.0
    %2386 = vmatpush1.msra.mxu0 0.0
    %2387 = vmatprep.subr.mxu0 0.0
    %2388 = vmatpush1.msra.mxu0 0.0
    %2389 = vmatprep.subr.mxu0 0.0
    %2390 = vmatpush1.msra.mxu0 0.0
    %2391 = vmatprep.mubr.f32.mxu0 0.0
    %2392 = vmatmul.mubr.f32.gmra.mrb[0].mxu0 %v2124
    %v2393 = vpop.f32.mrb[0].mxu0
    %v2394 = vadd.f32 0.0, %v2393
    %v2395 = vpop.f32.mrb[0].mxu0
    %2396 = vmatprep.mubr.f32.mxu0 0.0
    %2397 = vmatmul.mubr.f32.gmra.mrb[0].mxu0 %v2125
    %v2398 = vpop.f32.mrb[0].mxu0
    %v2399 = vadd.f32 0.0, %v2398
    %v2400 = vpop.f32.mrb[0].mxu0
    %2401 = vdwg.mxu0
    %v2402 = vadd.f32 %v2302, %v2394
    %v2403 = vadd.f32 %v2307, %v2399
    %s2404 = scalar_lea.vmem [#allocation4], 5
    %v2405 = vld [vmem:[%s2404] sm:$0x1]
    %v2407 = vlaneseq
    %v2408 = vshrl.u32 %v2407, 7
    %v2409 = vsub.s32 0, %v2408
    %v2410 = vrot.slane %v2405, %v2409
    %v2412 = vadd.f32 %v2402, %v2410
    %v2413 = vadd.f32 %v2403, %v2410
    %v2414 = vmax.f32 %v2412, 0.0
    %v2415 = vmax.f32 %v2413, 0.0
    %s2416 = scalar_lea.vmem [#allocation6], 640
    %v2417 = vld [vmem:[%s2416] sm:$0xff]
    %v2418 = vld [vmem:[%s2416 + $0x8] sm:$0xff]
    %v2419 = vld [vmem:[%s2416 + $0x10] sm:$0xff]
    %v2420 = vld [vmem:[%s2416 + $0x18] sm:$0xff]
    %v2421 = vld [vmem:[%s2416 + $0x20] sm:$0xff]
    %v2422 = vld [vmem:[%s2416 + $0x28] sm:$0xff]
    %v2423 = vld [vmem:[%s2416 + $0x30] sm:$0xff]
    %v2424 = vld [vmem:[%s2416 + $0x38] sm:$0xff]
    %v2425 = vld [vmem:[%s2416 + $0x40] sm:$0xff]
    %v2426 = vld [vmem:[%s2416 + $0x48] sm:$0xff]
    %v2427 = vld [vmem:[%s2416 + $0x50] sm:$0xff]
    %v2428 = vld [vmem:[%s2416 + $0x58] sm:$0xff]
    %v2429 = vld [vmem:[%s2416 + $0x60] sm:$0xff]
    %v2430 = vld [vmem:[%s2416 + $0x68] sm:$0xff]
    %v2431 = vld [vmem:[%s2416 + $0x70] sm:$0xff]
    %v2432 = vld [vmem:[%s2416 + $0x78] sm:$0xff]
    %s2433 = scalar_lea.vmem [#allocation7], 5
    %v2434 = vld [vmem:[%s2433] sm:$0x1]
    %v2436 = vlaneseq
    %v2437 = vshrl.u32 %v2436, 7
    %v2438 = vsub.s32 0, %v2437
    %v2439 = vrot.slane %v2434, %v2438
    %2441 = vmatprep.subr.mxu0 0.0
    %2442 = vmatpush1.msra.mxu0 %v2417
    %2443 = vmatprep.subr.mxu0 0.0
    %2444 = vmatpush1.msra.mxu0 %v2418
    %2445 = vmatprep.subr.mxu0 0.0
    %2446 = vmatpush1.msra.mxu0 %v2419
    %2447 = vmatprep.subr.mxu0 0.0
    %2448 = vmatpush1.msra.mxu0 %v2420
    %2449 = vmatprep.subr.mxu0 0.0
    %2450 = vmatpush1.msra.mxu0 %v2421
    %2451 = vmatprep.subr.mxu0 0.0
    %2452 = vmatpush1.msra.mxu0 %v2422
    %2453 = vmatprep.subr.mxu0 0.0
    %2454 = vmatpush1.msra.mxu0 %v2423
    %2455 = vmatprep.subr.mxu0 0.0
    %2456 = vmatpush1.msra.mxu0 %v2424
    %2457 = vmatprep.subr.mxu0 0.0
    %2458 = vmatpush1.msra.mxu0 %v2425
    %2459 = vmatprep.subr.mxu0 0.0
    %2460 = vmatpush1.msra.mxu0 %v2426
    %2461 = vmatprep.subr.mxu0 0.0
    %2462 = vmatpush1.msra.mxu0 %v2427
    %2463 = vmatprep.subr.mxu0 0.0
    %2464 = vmatpush1.msra.mxu0 %v2428
    %2465 = vmatprep.subr.mxu0 0.0
    %2466 = vmatpush1.msra.mxu0 %v2429
    %2467 = vmatprep.subr.mxu0 0.0
    %2468 = vmatpush1.msra.mxu0 %v2430
    %2469 = vmatprep.subr.mxu0 0.0
    %2470 = vmatpush1.msra.mxu0 %v2431
    %2471 = vmatprep.subr.mxu0 0.0
    %2472 = vmatpush1.msra.mxu0 %v2432
    %2473 = vmatprep.subr.mxu0 0.0
    %2474 = vmatpush1.msra.mxu0 0.0
    %2475 = vmatprep.subr.mxu0 0.0
    %2476 = vmatpush1.msra.mxu0 0.0
    %2477 = vmatprep.subr.mxu0 0.0
    %2478 = vmatpush1.msra.mxu0 0.0
    %2479 = vmatprep.subr.mxu0 0.0
    %2480 = vmatpush1.msra.mxu0 0.0
    %2481 = vmatprep.subr.mxu0 0.0
    %2482 = vmatpush1.msra.mxu0 0.0
    %2483 = vmatprep.subr.mxu0 0.0
    %2484 = vmatpush1.msra.mxu0 0.0
    %2485 = vmatprep.subr.mxu0 0.0
    %2486 = vmatpush1.msra.mxu0 0.0
    %2487 = vmatprep.subr.mxu0 0.0
    %2488 = vmatpush1.msra.mxu0 0.0
    %2489 = vmatprep.subr.mxu0 0.0
    %2490 = vmatpush1.msra.mxu0 0.0
    %2491 = vmatprep.subr.mxu0 0.0
    %2492 = vmatpush1.msra.mxu0 0.0
    %2493 = vmatprep.subr.mxu0 0.0
    %2494 = vmatpush1.msra.mxu0 0.0
    %2495 = vmatprep.subr.mxu0 0.0
    %2496 = vmatpush1.msra.mxu0 0.0
    %2497 = vmatprep.subr.mxu0 0.0
    %2498 = vmatpush1.msra.mxu0 0.0
    %2499 = vmatprep.subr.mxu0 0.0
    %2500 = vmatpush1.msra.mxu0 0.0
    %2501 = vmatprep.subr.mxu0 0.0
    %2502 = vmatpush1.msra.mxu0 0.0
    %2503 = vmatprep.subr.mxu0 0.0
    %2504 = vmatpush1.msra.mxu0 0.0
    %2505 = vmatprep.mubr.f32.mxu0 0.0
    %2506 = vmatmul.mubr.f32.gmra.mrb[0].mxu0 %v2414
    %v2507 = vpop.f32.mrb[0].mxu0
    %v2508 = vadd.f32 %v2439, %v2507
    %v2509 = vpop.f32.mrb[0].mxu0
    %2510 = vmatprep.mubr.f32.mxu0 0.0
    %2511 = vmatmul.mubr.f32.gmra.mrb[0].mxu0 %v2415
    %v2512 = vpop.f32.mrb[0].mxu0
    %v2513 = vadd.f32 %v2439, %v2512
    %v2514 = vpop.f32.mrb[0].mxu0
    %2515 = vdwg.mxu0
    %v2516 = vadd.f32 %v2110, %v2508
    %v2517 = vadd.f32 %v2111, %v2513
    %v2518 = vmax.f32 %v2516, 0.0
    %v2519 = vmax.f32 %v2517, 0.0
    %v2520 = vrot.slane %v2518, 7
    %v2521 = vrot.slane %v2519, 7
    %v2522 = vsel %vm88, %v2520, %v2521
    %v2523 = vsel %vm88, %v2521, %v2520
    %v2524 = vsel %vm78, %v2523, 0.0
    %v2525 = vsel %vm79, %v2522, 0.0
    %v2526 = vrot.slane %v2518, 1
    %v2527 = vrot.slane %v2519, 1
    %v2528 = vsel %vm95, %v2526, %v2527
    %v2529 = vsel %vm95, %v2527, %v2526
    %v2530 = vsel %vm80, %v2528, 0.0
    %v2531 = vsel %vm81, %v2529, 0.0
    %s2532 = scalar_lea.vmem [#allocation2], 2304
    %v2533 = vld [vmem:[%s2532] sm:$0xff]
    %v2534 = vld [vmem:[%s2532 + $0x8] sm:$0xff]
    %v2535 = vld [vmem:[%s2532 + $0x10] sm:$0xff]
    %v2536 = vld [vmem:[%s2532 + $0x18] sm:$0xff]
    %v2537 = vld [vmem:[%s2532 + $0x20] sm:$0xff]
    %v2538 = vld [vmem:[%s2532 + $0x28] sm:$0xff]
    %v2539 = vld [vmem:[%s2532 + $0x30] sm:$0xff]
    %v2540 = vld [vmem:[%s2532 + $0x38] sm:$0xff]
    %v2541 = vld [vmem:[%s2532 + $0x40] sm:$0xff]
    %v2542 = vld [vmem:[%s2532 + $0x48] sm:$0xff]
    %v2543 = vld [vmem:[%s2532 + $0x50] sm:$0xff]
    %v2544 = vld [vmem:[%s2532 + $0x58] sm:$0xff]
    %v2545 = vld [vmem:[%s2532 + $0x60] sm:$0xff]
    %v2546 = vld [vmem:[%s2532 + $0x68] sm:$0xff]
    %v2547 = vld [vmem:[%s2532 + $0x70] sm:$0xff]
    %v2548 = vld [vmem:[%s2532 + $0x78] sm:$0xff]
    %s2549 = scalar_lea.vmem [#allocation2], 2432
    %v2550 = vld [vmem:[%s2549] sm:$0xff]
    %v2551 = vld [vmem:[%s2549 + $0x8] sm:$0xff]
    %v2552 = vld [vmem:[%s2549 + $0x10] sm:$0xff]
    %v2553 = vld [vmem:[%s2549 + $0x18] sm:$0xff]
    %v2554 = vld [vmem:[%s2549 + $0x20] sm:$0xff]
    %v2555 = vld [vmem:[%s2549 + $0x28] sm:$0xff]
    %v2556 = vld [vmem:[%s2549 + $0x30] sm:$0xff]
    %v2557 = vld [vmem:[%s2549 + $0x38] sm:$0xff]
    %v2558 = vld [vmem:[%s2549 + $0x40] sm:$0xff]
    %v2559 = vld [vmem:[%s2549 + $0x48] sm:$0xff]
    %v2560 = vld [vmem:[%s2549 + $0x50] sm:$0xff]
    %v2561 = vld [vmem:[%s2549 + $0x58] sm:$0xff]
    %v2562 = vld [vmem:[%s2549 + $0x60] sm:$0xff]
    %v2563 = vld [vmem:[%s2549 + $0x68] sm:$0xff]
    %v2564 = vld [vmem:[%s2549 + $0x70] sm:$0xff]
    %v2565 = vld [vmem:[%s2549 + $0x78] sm:$0xff]
    %2566 = vmatprep.subr.mxu0 0.0
    %2567 = vmatpush1.msra.mxu0 %v2550
    %2568 = vmatprep.subr.mxu0 0.0
    %2569 = vmatpush1.msra.mxu0 %v2551
    %2570 = vmatprep.subr.mxu0 0.0
    %2571 = vmatpush1.msra.mxu0 %v2552
    %2572 = vmatprep.subr.mxu0 0.0
    %2573 = vmatpush1.msra.mxu0 %v2553
    %2574 = vmatprep.subr.mxu0 0.0
    %2575 = vmatpush1.msra.mxu0 %v2554
    %2576 = vmatprep.subr.mxu0 0.0
    %2577 = vmatpush1.msra.mxu0 %v2555
    %2578 = vmatprep.subr.mxu0 0.0
    %2579 = vmatpush1.msra.mxu0 %v2556
    %2580 = vmatprep.subr.mxu0 0.0
    %2581 = vmatpush1.msra.mxu0 %v2557
    %2582 = vmatprep.subr.mxu0 0.0
    %2583 = vmatpush1.msra.mxu0 %v2558
    %2584 = vmatprep.subr.mxu0 0.0
    %2585 = vmatpush1.msra.mxu0 %v2559
    %2586 = vmatprep.subr.mxu0 0.0
    %2587 = vmatpush1.msra.mxu0 %v2560
    %2588 = vmatprep.subr.mxu0 0.0
    %2589 = vmatpush1.msra.mxu0 %v2561
    %2590 = vmatprep.subr.mxu0 0.0
    %2591 = vmatpush1.msra.mxu0 %v2562
    %2592 = vmatprep.subr.mxu0 0.0
    %2593 = vmatpush1.msra.mxu0 %v2563
    %2594 = vmatprep.subr.mxu0 0.0
    %2595 = vmatpush1.msra.mxu0 %v2564
    %2596 = vmatprep.subr.mxu0 0.0
    %2597 = vmatpush1.msra.mxu0 %v2565
    %2598 = vmatprep.subr.mxu0 0.0
    %2599 = vmatpush1.msra.mxu0 0.0
    %2600 = vmatprep.subr.mxu0 0.0
    %2601 = vmatpush1.msra.mxu0 0.0
    %2602 = vmatprep.subr.mxu0 0.0
    %2603 = vmatpush1.msra.mxu0 0.0
    %2604 = vmatprep.subr.mxu0 0.0
    %2605 = vmatpush1.msra.mxu0 0.0
    %2606 = vmatprep.subr.mxu0 0.0
    %2607 = vmatpush1.msra.mxu0 0.0
    %2608 = vmatprep.subr.mxu0 0.0
    %2609 = vmatpush1.msra.mxu0 0.0
    %2610 = vmatprep.subr.mxu0 0.0
    %2611 = vmatpush1.msra.mxu0 0.0
    %2612 = vmatprep.subr.mxu0 0.0
    %2613 = vmatpush1.msra.mxu0 0.0
    %2614 = vmatprep.subr.mxu0 0.0
    %2615 = vmatpush1.msra.mxu0 0.0
    %2616 = vmatprep.subr.mxu0 0.0
    %2617 = vmatpush1.msra.mxu0 0.0
    %2618 = vmatprep.subr.mxu0 0.0
    %2619 = vmatpush1.msra.mxu0 0.0
    %2620 = vmatprep.subr.mxu0 0.0
    %2621 = vmatpush1.msra.mxu0 0.0
    %2622 = vmatprep.subr.mxu0 0.0
    %2623 = vmatpush1.msra.mxu0 0.0
    %2624 = vmatprep.subr.mxu0 0.0
    %2625 = vmatpush1.msra.mxu0 0.0
    %2626 = vmatprep.subr.mxu0 0.0
    %2627 = vmatpush1.msra.mxu0 0.0
    %2628 = vmatprep.subr.mxu0 0.0
    %2629 = vmatpush1.msra.mxu0 0.0
    %2630 = vmatprep.mubr.f32.mxu0 0.0
    %2631 = vmatmul.mubr.f32.gmra.mrb[0].mxu0 %v2518
    %v2632 = vpop.f32.mrb[0].mxu0
    %v2633 = vadd.f32 0.0, %v2632
    %v2634 = vpop.f32.mrb[0].mxu0
    %2635 = vmatprep.mubr.f32.mxu0 0.0
    %2636 = vmatmul.mubr.f32.gmra.mrb[0].mxu0 %v2519
    %v2637 = vpop.f32.mrb[0].mxu0
    %v2638 = vadd.f32 0.0, %v2637
    %v2639 = vpop.f32.mrb[0].mxu0
    %2640 = vdwg.mxu0
    %2641 = vmatprep.subr.mxu0 0.0
    %2642 = vmatpush1.msra.mxu0 %v2533
    %2643 = vmatprep.subr.mxu0 0.0
    %2644 = vmatpush1.msra.mxu0 %v2534
    %2645 = vmatprep.subr.mxu0 0.0
    %2646 = vmatpush1.msra.mxu0 %v2535
    %2647 = vmatprep.subr.mxu0 0.0
    %2648 = vmatpush1.msra.mxu0 %v2536
    %2649 = vmatprep.subr.mxu0 0.0
    %2650 = vmatpush1.msra.mxu0 %v2537
    %2651 = vmatprep.subr.mxu0 0.0
    %2652 = vmatpush1.msra.mxu0 %v2538
    %2653 = vmatprep.subr.mxu0 0.0
    %2654 = vmatpush1.msra.mxu0 %v2539
    %2655 = vmatprep.subr.mxu0 0.0
    %2656 = vmatpush1.msra.mxu0 %v2540
    %2657 = vmatprep.subr.mxu0 0.0
    %2658 = vmatpush1.msra.mxu0 %v2541
    %2659 = vmatprep.subr.mxu0 0.0
    %2660 = vmatpush1.msra.mxu0 %v2542
    %2661 = vmatprep.subr.mxu0 0.0
    %2662 = vmatpush1.msra.mxu0 %v2543
    %2663 = vmatprep.subr.mxu0 0.0
    %2664 = vmatpush1.msra.mxu0 %v2544
    %2665 = vmatprep.subr.mxu0 0.0
    %2666 = vmatpush1.msra.mxu0 %v2545
    %2667 = vmatprep.subr.mxu0 0.0
    %2668 = vmatpush1.msra.mxu0 %v2546
    %2669 = vmatprep.subr.mxu0 0.0
    %2670 = vmatpush1.msra.mxu0 %v2547
    %2671 = vmatprep.subr.mxu0 0.0
    %2672 = vmatpush1.msra.mxu0 %v2548
    %2673 = vmatprep.subr.mxu0 0.0
    %2674 = vmatpush1.msra.mxu0 0.0
    %2675 = vmatprep.subr.mxu0 0.0
    %2676 = vmatpush1.msra.mxu0 0.0
    %2677 = vmatprep.subr.mxu0 0.0
    %2678 = vmatpush1.msra.mxu0 0.0
    %2679 = vmatprep.subr.mxu0 0.0
    %2680 = vmatpush1.msra.mxu0 0.0
    %2681 = vmatprep.subr.mxu0 0.0
    %2682 = vmatpush1.msra.mxu0 0.0
    %2683 = vmatprep.subr.mxu0 0.0
    %2684 = vmatpush1.msra.mxu0 0.0
    %2685 = vmatprep.subr.mxu0 0.0
    %2686 = vmatpush1.msra.mxu0 0.0
    %2687 = vmatprep.subr.mxu0 0.0
    %2688 = vmatpush1.msra.mxu0 0.0
    %2689 = vmatprep.subr.mxu0 0.0
    %2690 = vmatpush1.msra.mxu0 0.0
    %2691 = vmatprep.subr.mxu0 0.0
    %2692 = vmatpush1.msra.mxu0 0.0
    %2693 = vmatprep.subr.mxu0 0.0
    %2694 = vmatpush1.msra.mxu0 0.0
    %2695 = vmatprep.subr.mxu0 0.0
    %2696 = vmatpush1.msra.mxu0 0.0
    %2697 = vmatprep.subr.mxu0 0.0
    %2698 = vmatpush1.msra.mxu0 0.0
    %2699 = vmatprep.subr.mxu0 0.0
    %2700 = vmatpush1.msra.mxu0 0.0
    %2701 = vmatprep.subr.mxu0 0.0
    %2702 = vmatpush1.msra.mxu0 0.0
    %2703 = vmatprep.subr.mxu0 0.0
    %2704 = vmatpush1.msra.mxu0 0.0
    %2705 = vmatprep.mubr.f32.mxu0 0.0
    %2706 = vmatmul.mubr.f32.gmra.mrb[0].mxu0 %v2524
    %v2707 = vpop.f32.mrb[0].mxu0
    %v2708 = vadd.f32 %v2633, %v2707
    %v2709 = vpop.f32.mrb[0].mxu0
    %2710 = vmatprep.mubr.f32.mxu0 0.0
    %2711 = vmatmul.mubr.f32.gmra.mrb[0].mxu0 %v2525
    %v2712 = vpop.f32.mrb[0].mxu0
    %v2713 = vadd.f32 %v2638, %v2712
    %v2714 = vpop.f32.mrb[0].mxu0
    %2715 = vdwg.mxu0
    %s2716 = scalar_lea.vmem [#allocation2], 2560
    %v2717 = vld [vmem:[%s2716] sm:$0xff]
    %v2718 = vld [vmem:[%s2716 + $0x8] sm:$0xff]
    %v2719 = vld [vmem:[%s2716 + $0x10] sm:$0xff]
    %v2720 = vld [vmem:[%s2716 + $0x18] sm:$0xff]
    %v2721 = vld [vmem:[%s2716 + $0x20] sm:$0xff]
    %v2722 = vld [vmem:[%s2716 + $0x28] sm:$0xff]
    %v2723 = vld [vmem:[%s2716 + $0x30] sm:$0xff]
    %v2724 = vld [vmem:[%s2716 + $0x38] sm:$0xff]
    %v2725 = vld [vmem:[%s2716 + $0x40] sm:$0xff]
    %v2726 = vld [vmem:[%s2716 + $0x48] sm:$0xff]
    %v2727 = vld [vmem:[%s2716 + $0x50] sm:$0xff]
    %v2728 = vld [vmem:[%s2716 + $0x58] sm:$0xff]
    %v2729 = vld [vmem:[%s2716 + $0x60] sm:$0xff]
    %v2730 = vld [vmem:[%s2716 + $0x68] sm:$0xff]
    %v2731 = vld [vmem:[%s2716 + $0x70] sm:$0xff]
    %v2732 = vld [vmem:[%s2716 + $0x78] sm:$0xff]
    %2733 = vmatprep.subr.mxu0 0.0
    %2734 = vmatpush1.msra.mxu0 %v2717
    %2735 = vmatprep.subr.mxu0 0.0
    %2736 = vmatpush1.msra.mxu0 %v2718
    %2737 = vmatprep.subr.mxu0 0.0
    %2738 = vmatpush1.msra.mxu0 %v2719
    %2739 = vmatprep.subr.mxu0 0.0
    %2740 = vmatpush1.msra.mxu0 %v2720
    %2741 = vmatprep.subr.mxu0 0.0
    %2742 = vmatpush1.msra.mxu0 %v2721
    %2743 = vmatprep.subr.mxu0 0.0
    %2744 = vmatpush1.msra.mxu0 %v2722
    %2745 = vmatprep.subr.mxu0 0.0
    %2746 = vmatpush1.msra.mxu0 %v2723
    %2747 = vmatprep.subr.mxu0 0.0
    %2748 = vmatpush1.msra.mxu0 %v2724
    %2749 = vmatprep.subr.mxu0 0.0
    %2750 = vmatpush1.msra.mxu0 %v2725
    %2751 = vmatprep.subr.mxu0 0.0
    %2752 = vmatpush1.msra.mxu0 %v2726
    %2753 = vmatprep.subr.mxu0 0.0
    %2754 = vmatpush1.msra.mxu0 %v2727
    %2755 = vmatprep.subr.mxu0 0.0
    %2756 = vmatpush1.msra.mxu0 %v2728
    %2757 = vmatprep.subr.mxu0 0.0
    %2758 = vmatpush1.msra.mxu0 %v2729
    %2759 = vmatprep.subr.mxu0 0.0
    %2760 = vmatpush1.msra.mxu0 %v2730
    %2761 = vmatprep.subr.mxu0 0.0
    %2762 = vmatpush1.msra.mxu0 %v2731
    %2763 = vmatprep.subr.mxu0 0.0
    %2764 = vmatpush1.msra.mxu0 %v2732
    %2765 = vmatprep.subr.mxu0 0.0
    %2766 = vmatpush1.msra.mxu0 0.0
    %2767 = vmatprep.subr.mxu0 0.0
    %2768 = vmatpush1.msra.mxu0 0.0
    %2769 = vmatprep.subr.mxu0 0.0
    %2770 = vmatpush1.msra.mxu0 0.0
    %2771 = vmatprep.subr.mxu0 0.0
    %2772 = vmatpush1.msra.mxu0 0.0
    %2773 = vmatprep.subr.mxu0 0.0
    %2774 = vmatpush1.msra.mxu0 0.0
    %2775 = vmatprep.subr.mxu0 0.0
    %2776 = vmatpush1.msra.mxu0 0.0
    %2777 = vmatprep.subr.mxu0 0.0
    %2778 = vmatpush1.msra.mxu0 0.0
    %2779 = vmatprep.subr.mxu0 0.0
    %2780 = vmatpush1.msra.mxu0 0.0
    %2781 = vmatprep.subr.mxu0 0.0
    %2782 = vmatpush1.msra.mxu0 0.0
    %2783 = vmatprep.subr.mxu0 0.0
    %2784 = vmatpush1.msra.mxu0 0.0
    %2785 = vmatprep.subr.mxu0 0.0
    %2786 = vmatpush1.msra.mxu0 0.0
    %2787 = vmatprep.subr.mxu0 0.0
    %2788 = vmatpush1.msra.mxu0 0.0
    %2789 = vmatprep.subr.mxu0 0.0
    %2790 = vmatpush1.msra.mxu0 0.0
    %2791 = vmatprep.subr.mxu0 0.0
    %2792 = vmatpush1.msra.mxu0 0.0
    %2793 = vmatprep.subr.mxu0 0.0
    %2794 = vmatpush1.msra.mxu0 0.0
    %2795 = vmatprep.subr.mxu0 0.0
    %2796 = vmatpush1.msra.mxu0 0.0
    %2797 = vmatprep.mubr.f32.mxu0 0.0
    %2798 = vmatmul.mubr.f32.gmra.mrb[0].mxu0 %v2530
    %v2799 = vpop.f32.mrb[0].mxu0
    %v2800 = vadd.f32 0.0, %v2799
    %v2801 = vpop.f32.mrb[0].mxu0
    %2802 = vmatprep.mubr.f32.mxu0 0.0
    %2803 = vmatmul.mubr.f32.gmra.mrb[0].mxu0 %v2531
    %v2804 = vpop.f32.mrb[0].mxu0
    %v2805 = vadd.f32 0.0, %v2804
    %v2806 = vpop.f32.mrb[0].mxu0
    %2807 = vdwg.mxu0
    %v2808 = vadd.f32 %v2708, %v2800
    %v2809 = vadd.f32 %v2713, %v2805
    %s2810 = scalar_lea.vmem [#allocation4], 6
    %v2811 = vld [vmem:[%s2810] sm:$0x1]
    %v2813 = vlaneseq
    %v2814 = vshrl.u32 %v2813, 7
    %v2815 = vsub.s32 0, %v2814
    %v2816 = vrot.slane %v2811, %v2815
    %v2818 = vadd.f32 %v2808, %v2816
    %v2819 = vadd.f32 %v2809, %v2816
    %v2820 = vmax.f32 %v2818, 0.0
    %v2821 = vmax.f32 %v2819, 0.0
    %s2822 = scalar_lea.vmem [#allocation6], 768
    %v2823 = vld [vmem:[%s2822] sm:$0xff]
    %v2824 = vld [vmem:[%s2822 + $0x8] sm:$0xff]
    %v2825 = vld [vmem:[%s2822 + $0x10] sm:$0xff]
    %v2826 = vld [vmem:[%s2822 + $0x18] sm:$0xff]
    %v2827 = vld [vmem:[%s2822 + $0x20] sm:$0xff]
    %v2828 = vld [vmem:[%s2822 + $0x28] sm:$0xff]
    %v2829 = vld [vmem:[%s2822 + $0x30] sm:$0xff]
    %v2830 = vld [vmem:[%s2822 + $0x38] sm:$0xff]
    %v2831 = vld [vmem:[%s2822 + $0x40] sm:$0xff]
    %v2832 = vld [vmem:[%s2822 + $0x48] sm:$0xff]
    %v2833 = vld [vmem:[%s2822 + $0x50] sm:$0xff]
    %v2834 = vld [vmem:[%s2822 + $0x58] sm:$0xff]
    %v2835 = vld [vmem:[%s2822 + $0x60] sm:$0xff]
    %v2836 = vld [vmem:[%s2822 + $0x68] sm:$0xff]
    %v2837 = vld [vmem:[%s2822 + $0x70] sm:$0xff]
    %v2838 = vld [vmem:[%s2822 + $0x78] sm:$0xff]
    %s2839 = scalar_lea.vmem [#allocation7], 6
    %v2840 = vld [vmem:[%s2839] sm:$0x1]
    %v2842 = vlaneseq
    %v2843 = vshrl.u32 %v2842, 7
    %v2844 = vsub.s32 0, %v2843
    %v2845 = vrot.slane %v2840, %v2844
    %2847 = vmatprep.subr.mxu0 0.0
    %2848 = vmatpush1.msra.mxu0 %v2823
    %2849 = vmatprep.subr.mxu0 0.0
    %2850 = vmatpush1.msra.mxu0 %v2824
    %2851 = vmatprep.subr.mxu0 0.0
    %2852 = vmatpush1.msra.mxu0 %v2825
    %2853 = vmatprep.subr.mxu0 0.0
    %2854 = vmatpush1.msra.mxu0 %v2826
    %2855 = vmatprep.subr.mxu0 0.0
    %2856 = vmatpush1.msra.mxu0 %v2827
    %2857 = vmatprep.subr.mxu0 0.0
    %2858 = vmatpush1.msra.mxu0 %v2828
    %2859 = vmatprep.subr.mxu0 0.0
    %2860 = vmatpush1.msra.mxu0 %v2829
    %2861 = vmatprep.subr.mxu0 0.0
    %2862 = vmatpush1.msra.mxu0 %v2830
    %2863 = vmatprep.subr.mxu0 0.0
    %2864 = vmatpush1.msra.mxu0 %v2831
    %2865 = vmatprep.subr.mxu0 0.0
    %2866 = vmatpush1.msra.mxu0 %v2832
    %2867 = vmatprep.subr.mxu0 0.0
    %2868 = vmatpush1.msra.mxu0 %v2833
    %2869 = vmatprep.subr.mxu0 0.0
    %2870 = vmatpush1.msra.mxu0 %v2834
    %2871 = vmatprep.subr.mxu0 0.0
    %2872 = vmatpush1.msra.mxu0 %v2835
    %2873 = vmatprep.subr.mxu0 0.0
    %2874 = vmatpush1.msra.mxu0 %v2836
    %2875 = vmatprep.subr.mxu0 0.0
    %2876 = vmatpush1.msra.mxu0 %v2837
    %2877 = vmatprep.subr.mxu0 0.0
    %2878 = vmatpush1.msra.mxu0 %v2838
    %2879 = vmatprep.subr.mxu0 0.0
    %2880 = vmatpush1.msra.mxu0 0.0
    %2881 = vmatprep.subr.mxu0 0.0
    %2882 = vmatpush1.msra.mxu0 0.0
    %2883 = vmatprep.subr.mxu0 0.0
    %2884 = vmatpush1.msra.mxu0 0.0
    %2885 = vmatprep.subr.mxu0 0.0
    %2886 = vmatpush1.msra.mxu0 0.0
    %2887 = vmatprep.subr.mxu0 0.0
    %2888 = vmatpush1.msra.mxu0 0.0
    %2889 = vmatprep.subr.mxu0 0.0
    %2890 = vmatpush1.msra.mxu0 0.0
    %2891 = vmatprep.subr.mxu0 0.0
    %2892 = vmatpush1.msra.mxu0 0.0
    %2893 = vmatprep.subr.mxu0 0.0
    %2894 = vmatpush1.msra.mxu0 0.0
    %2895 = vmatprep.subr.mxu0 0.0
    %2896 = vmatpush1.msra.mxu0 0.0
    %2897 = vmatprep.subr.mxu0 0.0
    %2898 = vmatpush1.msra.mxu0 0.0
    %2899 = vmatprep.subr.mxu0 0.0
    %2900 = vmatpush1.msra.mxu0 0.0
    %2901 = vmatprep.subr.mxu0 0.0
    %2902 = vmatpush1.msra.mxu0 0.0
    %2903 = vmatprep.subr.mxu0 0.0
    %2904 = vmatpush1.msra.mxu0 0.0
    %2905 = vmatprep.subr.mxu0 0.0
    %2906 = vmatpush1.msra.mxu0 0.0
    %2907 = vmatprep.subr.mxu0 0.0
    %2908 = vmatpush1.msra.mxu0 0.0
    %2909 = vmatprep.subr.mxu0 0.0
    %2910 = vmatpush1.msra.mxu0 0.0
    %2911 = vmatprep.mubr.f32.mxu0 0.0
    %2912 = vmatmul.mubr.f32.gmra.mrb[0].mxu0 %v2820
    %v2913 = vpop.f32.mrb[0].mxu0
    %v2914 = vadd.f32 %v2845, %v2913
    %v2915 = vpop.f32.mrb[0].mxu0
    %2916 = vmatprep.mubr.f32.mxu0 0.0
    %2917 = vmatmul.mubr.f32.gmra.mrb[0].mxu0 %v2821
    %v2918 = vpop.f32.mrb[0].mxu0
    %v2919 = vadd.f32 %v2845, %v2918
    %v2920 = vpop.f32.mrb[0].mxu0
    %2921 = vdwg.mxu0
    %v2922 = vadd.f32 %v2516, %v2914
    %v2923 = vadd.f32 %v2517, %v2919
    %v2924 = vmax.f32 %v2922, 0.0
    %v2925 = vmax.f32 %v2923, 0.0
    %v2926 = vrot.slane %v2924, 7
    %v2927 = vrot.slane %v2925, 7
    %v2928 = vsel %vm88, %v2926, %v2927
    %v2929 = vsel %vm88, %v2927, %v2926
    %v2930 = vsel %vm78, %v2929, 0.0
    %v2931 = vsel %vm79, %v2928, 0.0
    %v2932 = vrot.slane %v2924, 1
    %v2933 = vrot.slane %v2925, 1
    %v2934 = vsel %vm95, %v2932, %v2933
    %v2935 = vsel %vm95, %v2933, %v2932
    %v2936 = vsel %vm80, %v2934, 0.0
    %v2937 = vsel %vm81, %v2935, 0.0
    %s2938 = scalar_lea.vmem [#allocation2], 2688
    %v2939 = vld [vmem:[%s2938] sm:$0xff]
    %v2940 = vld [vmem:[%s2938 + $0x8] sm:$0xff]
    %v2941 = vld [vmem:[%s2938 + $0x10] sm:$0xff]
    %v2942 = vld [vmem:[%s2938 + $0x18] sm:$0xff]
    %v2943 = vld [vmem:[%s2938 + $0x20] sm:$0xff]
    %v2944 = vld [vmem:[%s2938 + $0x28] sm:$0xff]
    %v2945 = vld [vmem:[%s2938 + $0x30] sm:$0xff]
    %v2946 = vld [vmem:[%s2938 + $0x38] sm:$0xff]
    %v2947 = vld [vmem:[%s2938 + $0x40] sm:$0xff]
    %v2948 = vld [vmem:[%s2938 + $0x48] sm:$0xff]
    %v2949 = vld [vmem:[%s2938 + $0x50] sm:$0xff]
    %v2950 = vld [vmem:[%s2938 + $0x58] sm:$0xff]
    %v2951 = vld [vmem:[%s2938 + $0x60] sm:$0xff]
    %v2952 = vld [vmem:[%s2938 + $0x68] sm:$0xff]
    %v2953 = vld [vmem:[%s2938 + $0x70] sm:$0xff]
    %v2954 = vld [vmem:[%s2938 + $0x78] sm:$0xff]
    %s2955 = scalar_lea.vmem [#allocation2], 2816
    %v2956 = vld [vmem:[%s2955] sm:$0xff]
    %v2957 = vld [vmem:[%s2955 + $0x8] sm:$0xff]
    %v2958 = vld [vmem:[%s2955 + $0x10] sm:$0xff]
    %v2959 = vld [vmem:[%s2955 + $0x18] sm:$0xff]
    %v2960 = vld [vmem:[%s2955 + $0x20] sm:$0xff]
    %v2961 = vld [vmem:[%s2955 + $0x28] sm:$0xff]
    %v2962 = vld [vmem:[%s2955 + $0x30] sm:$0xff]
    %v2963 = vld [vmem:[%s2955 + $0x38] sm:$0xff]
    %v2964 = vld [vmem:[%s2955 + $0x40] sm:$0xff]
    %v2965 = vld [vmem:[%s2955 + $0x48] sm:$0xff]
    %v2966 = vld [vmem:[%s2955 + $0x50] sm:$0xff]
    %v2967 = vld [vmem:[%s2955 + $0x58] sm:$0xff]
    %v2968 = vld [vmem:[%s2955 + $0x60] sm:$0xff]
    %v2969 = vld [vmem:[%s2955 + $0x68] sm:$0xff]
    %v2970 = vld [vmem:[%s2955 + $0x70] sm:$0xff]
    %v2971 = vld [vmem:[%s2955 + $0x78] sm:$0xff]
    %2972 = vmatprep.subr.mxu0 0.0
    %2973 = vmatpush1.msra.mxu0 %v2956
    %2974 = vmatprep.subr.mxu0 0.0
    %2975 = vmatpush1.msra.mxu0 %v2957
    %2976 = vmatprep.subr.mxu0 0.0
    %2977 = vmatpush1.msra.mxu0 %v2958
    %2978 = vmatprep.subr.mxu0 0.0
    %2979 = vmatpush1.msra.mxu0 %v2959
    %2980 = vmatprep.subr.mxu0 0.0
    %2981 = vmatpush1.msra.mxu0 %v2960
    %2982 = vmatprep.subr.mxu0 0.0
    %2983 = vmatpush1.msra.mxu0 %v2961
    %2984 = vmatprep.subr.mxu0 0.0
    %2985 = vmatpush1.msra.mxu0 %v2962
    %2986 = vmatprep.subr.mxu0 0.0
    %2987 = vmatpush1.msra.mxu0 %v2963
    %2988 = vmatprep.subr.mxu0 0.0
    %2989 = vmatpush1.msra.mxu0 %v2964
    %2990 = vmatprep.subr.mxu0 0.0
    %2991 = vmatpush1.msra.mxu0 %v2965
    %2992 = vmatprep.subr.mxu0 0.0
    %2993 = vmatpush1.msra.mxu0 %v2966
    %2994 = vmatprep.subr.mxu0 0.0
    %2995 = vmatpush1.msra.mxu0 %v2967
    %2996 = vmatprep.subr.mxu0 0.0
    %2997 = vmatpush1.msra.mxu0 %v2968
    %2998 = vmatprep.subr.mxu0 0.0
    %2999 = vmatpush1.msra.mxu0 %v2969
    %3000 = vmatprep.subr.mxu0 0.0
    %3001 = vmatpush1.msra.mxu0 %v2970
    %3002 = vmatprep.subr.mxu0 0.0
    %3003 = vmatpush1.msra.mxu0 %v2971
    %3004 = vmatprep.subr.mxu0 0.0
    %3005 = vmatpush1.msra.mxu0 0.0
    %3006 = vmatprep.subr.mxu0 0.0
    %3007 = vmatpush1.msra.mxu0 0.0
    %3008 = vmatprep.subr.mxu0 0.0
    %3009 = vmatpush1.msra.mxu0 0.0
    %3010 = vmatprep.subr.mxu0 0.0
    %3011 = vmatpush1.msra.mxu0 0.0
    %3012 = vmatprep.subr.mxu0 0.0
    %3013 = vmatpush1.msra.mxu0 0.0
    %3014 = vmatprep.subr.mxu0 0.0
    %3015 = vmatpush1.msra.mxu0 0.0
    %3016 = vmatprep.subr.mxu0 0.0
    %3017 = vmatpush1.msra.mxu0 0.0
    %3018 = vmatprep.subr.mxu0 0.0
    %3019 = vmatpush1.msra.mxu0 0.0
    %3020 = vmatprep.subr.mxu0 0.0
    %3021 = vmatpush1.msra.mxu0 0.0
    %3022 = vmatprep.subr.mxu0 0.0
    %3023 = vmatpush1.msra.mxu0 0.0
    %3024 = vmatprep.subr.mxu0 0.0
    %3025 = vmatpush1.msra.mxu0 0.0
    %3026 = vmatprep.subr.mxu0 0.0
    %3027 = vmatpush1.msra.mxu0 0.0
    %3028 = vmatprep.subr.mxu0 0.0
    %3029 = vmatpush1.msra.mxu0 0.0
    %3030 = vmatprep.subr.mxu0 0.0
    %3031 = vmatpush1.msra.mxu0 0.0
    %3032 = vmatprep.subr.mxu0 0.0
    %3033 = vmatpush1.msra.mxu0 0.0
    %3034 = vmatprep.subr.mxu0 0.0
    %3035 = vmatpush1.msra.mxu0 0.0
    %3036 = vmatprep.mubr.f32.mxu0 0.0
    %3037 = vmatmul.mubr.f32.gmra.mrb[0].mxu0 %v2924
    %v3038 = vpop.f32.mrb[0].mxu0
    %v3039 = vadd.f32 0.0, %v3038
    %v3040 = vpop.f32.mrb[0].mxu0
    %3041 = vmatprep.mubr.f32.mxu0 0.0
    %3042 = vmatmul.mubr.f32.gmra.mrb[0].mxu0 %v2925
    %v3043 = vpop.f32.mrb[0].mxu0
    %v3044 = vadd.f32 0.0, %v3043
    %v3045 = vpop.f32.mrb[0].mxu0
    %3046 = vdwg.mxu0
    %3047 = vmatprep.subr.mxu0 0.0
    %3048 = vmatpush1.msra.mxu0 %v2939
    %3049 = vmatprep.subr.mxu0 0.0
    %3050 = vmatpush1.msra.mxu0 %v2940
    %3051 = vmatprep.subr.mxu0 0.0
    %3052 = vmatpush1.msra.mxu0 %v2941
    %3053 = vmatprep.subr.mxu0 0.0
    %3054 = vmatpush1.msra.mxu0 %v2942
    %3055 = vmatprep.subr.mxu0 0.0
    %3056 = vmatpush1.msra.mxu0 %v2943
    %3057 = vmatprep.subr.mxu0 0.0
    %3058 = vmatpush1.msra.mxu0 %v2944
    %3059 = vmatprep.subr.mxu0 0.0
    %3060 = vmatpush1.msra.mxu0 %v2945
    %3061 = vmatprep.subr.mxu0 0.0
    %3062 = vmatpush1.msra.mxu0 %v2946
    %3063 = vmatprep.subr.mxu0 0.0
    %3064 = vmatpush1.msra.mxu0 %v2947
    %3065 = vmatprep.subr.mxu0 0.0
    %3066 = vmatpush1.msra.mxu0 %v2948
    %3067 = vmatprep.subr.mxu0 0.0
    %3068 = vmatpush1.msra.mxu0 %v2949
    %3069 = vmatprep.subr.mxu0 0.0
    %3070 = vmatpush1.msra.mxu0 %v2950
    %3071 = vmatprep.subr.mxu0 0.0
    %3072 = vmatpush1.msra.mxu0 %v2951
    %3073 = vmatprep.subr.mxu0 0.0
    %3074 = vmatpush1.msra.mxu0 %v2952
    %3075 = vmatprep.subr.mxu0 0.0
    %3076 = vmatpush1.msra.mxu0 %v2953
    %3077 = vmatprep.subr.mxu0 0.0
    %3078 = vmatpush1.msra.mxu0 %v2954
    %3079 = vmatprep.subr.mxu0 0.0
    %3080 = vmatpush1.msra.mxu0 0.0
    %3081 = vmatprep.subr.mxu0 0.0
    %3082 = vmatpush1.msra.mxu0 0.0
    %3083 = vmatprep.subr.mxu0 0.0
    %3084 = vmatpush1.msra.mxu0 0.0
    %3085 = vmatprep.subr.mxu0 0.0
    %3086 = vmatpush1.msra.mxu0 0.0
    %3087 = vmatprep.subr.mxu0 0.0
    %3088 = vmatpush1.msra.mxu0 0.0
    %3089 = vmatprep.subr.mxu0 0.0
    %3090 = vmatpush1.msra.mxu0 0.0
    %3091 = vmatprep.subr.mxu0 0.0
    %3092 = vmatpush1.msra.mxu0 0.0
    %3093 = vmatprep.subr.mxu0 0.0
    %3094 = vmatpush1.msra.mxu0 0.0
    %3095 = vmatprep.subr.mxu0 0.0
    %3096 = vmatpush1.msra.mxu0 0.0
    %3097 = vmatprep.subr.mxu0 0.0
    %3098 = vmatpush1.msra.mxu0 0.0
    %3099 = vmatprep.subr.mxu0 0.0
    %3100 = vmatpush1.msra.mxu0 0.0
    %3101 = vmatprep.subr.mxu0 0.0
    %3102 = vmatpush1.msra.mxu0 0.0
    %3103 = vmatprep.subr.mxu0 0.0
    %3104 = vmatpush1.msra.mxu0 0.0
    %3105 = vmatprep.subr.mxu0 0.0
    %3106 = vmatpush1.msra.mxu0 0.0
    %3107 = vmatprep.subr.mxu0 0.0
    %3108 = vmatpush1.msra.mxu0 0.0
    %3109 = vmatprep.subr.mxu0 0.0
    %3110 = vmatpush1.msra.mxu0 0.0
    %3111 = vmatprep.mubr.f32.mxu0 0.0
    %3112 = vmatmul.mubr.f32.gmra.mrb[0].mxu0 %v2930
    %v3113 = vpop.f32.mrb[0].mxu0
    %v3114 = vadd.f32 %v3039, %v3113
    %v3115 = vpop.f32.mrb[0].mxu0
    %3116 = vmatprep.mubr.f32.mxu0 0.0
    %3117 = vmatmul.mubr.f32.gmra.mrb[0].mxu0 %v2931
    %v3118 = vpop.f32.mrb[0].mxu0
    %v3119 = vadd.f32 %v3044, %v3118
    %v3120 = vpop.f32.mrb[0].mxu0
    %3121 = vdwg.mxu0
    %s3122 = scalar_lea.vmem [#allocation2], 2944
    %v3123 = vld [vmem:[%s3122] sm:$0xff]
    %v3124 = vld [vmem:[%s3122 + $0x8] sm:$0xff]
    %v3125 = vld [vmem:[%s3122 + $0x10] sm:$0xff]
    %v3126 = vld [vmem:[%s3122 + $0x18] sm:$0xff]
    %v3127 = vld [vmem:[%s3122 + $0x20] sm:$0xff]
    %v3128 = vld [vmem:[%s3122 + $0x28] sm:$0xff]
    %v3129 = vld [vmem:[%s3122 + $0x30] sm:$0xff]
    %v3130 = vld [vmem:[%s3122 + $0x38] sm:$0xff]
    %v3131 = vld [vmem:[%s3122 + $0x40] sm:$0xff]
    %v3132 = vld [vmem:[%s3122 + $0x48] sm:$0xff]
    %v3133 = vld [vmem:[%s3122 + $0x50] sm:$0xff]
    %v3134 = vld [vmem:[%s3122 + $0x58] sm:$0xff]
    %v3135 = vld [vmem:[%s3122 + $0x60] sm:$0xff]
    %v3136 = vld [vmem:[%s3122 + $0x68] sm:$0xff]
    %v3137 = vld [vmem:[%s3122 + $0x70] sm:$0xff]
    %v3138 = vld [vmem:[%s3122 + $0x78] sm:$0xff]
    %3139 = vmatprep.subr.mxu0 0.0
    %3140 = vmatpush1.msra.mxu0 %v3123
    %3141 = vmatprep.subr.mxu0 0.0
    %3142 = vmatpush1.msra.mxu0 %v3124
    %3143 = vmatprep.subr.mxu0 0.0
    %3144 = vmatpush1.msra.mxu0 %v3125
    %3145 = vmatprep.subr.mxu0 0.0
    %3146 = vmatpush1.msra.mxu0 %v3126
    %3147 = vmatprep.subr.mxu0 0.0
    %3148 = vmatpush1.msra.mxu0 %v3127
    %3149 = vmatprep.subr.mxu0 0.0
    %3150 = vmatpush1.msra.mxu0 %v3128
    %3151 = vmatprep.subr.mxu0 0.0
    %3152 = vmatpush1.msra.mxu0 %v3129
    %3153 = vmatprep.subr.mxu0 0.0
    %3154 = vmatpush1.msra.mxu0 %v3130
    %3155 = vmatprep.subr.mxu0 0.0
    %3156 = vmatpush1.msra.mxu0 %v3131
    %3157 = vmatprep.subr.mxu0 0.0
    %3158 = vmatpush1.msra.mxu0 %v3132
    %3159 = vmatprep.subr.mxu0 0.0
    %3160 = vmatpush1.msra.mxu0 %v3133
    %3161 = vmatprep.subr.mxu0 0.0
    %3162 = vmatpush1.msra.mxu0 %v3134
    %3163 = vmatprep.subr.mxu0 0.0
    %3164 = vmatpush1.msra.mxu0 %v3135
    %3165 = vmatprep.subr.mxu0 0.0
    %3166 = vmatpush1.msra.mxu0 %v3136
    %3167 = vmatprep.subr.mxu0 0.0
    %3168 = vmatpush1.msra.mxu0 %v3137
    %3169 = vmatprep.subr.mxu0 0.0
    %3170 = vmatpush1.msra.mxu0 %v3138
    %3171 = vmatprep.subr.mxu0 0.0
    %3172 = vmatpush1.msra.mxu0 0.0
    %3173 = vmatprep.subr.mxu0 0.0
    %3174 = vmatpush1.msra.mxu0 0.0
    %3175 = vmatprep.subr.mxu0 0.0
    %3176 = vmatpush1.msra.mxu0 0.0
    %3177 = vmatprep.subr.mxu0 0.0
    %3178 = vmatpush1.msra.mxu0 0.0
    %3179 = vmatprep.subr.mxu0 0.0
    %3180 = vmatpush1.msra.mxu0 0.0
    %3181 = vmatprep.subr.mxu0 0.0
    %3182 = vmatpush1.msra.mxu0 0.0
    %3183 = vmatprep.subr.mxu0 0.0
    %3184 = vmatpush1.msra.mxu0 0.0
    %3185 = vmatprep.subr.mxu0 0.0
    %3186 = vmatpush1.msra.mxu0 0.0
    %3187 = vmatprep.subr.mxu0 0.0
    %3188 = vmatpush1.msra.mxu0 0.0
    %3189 = vmatprep.subr.mxu0 0.0
    %3190 = vmatpush1.msra.mxu0 0.0
    %3191 = vmatprep.subr.mxu0 0.0
    %3192 = vmatpush1.msra.mxu0 0.0
    %3193 = vmatprep.subr.mxu0 0.0
    %3194 = vmatpush1.msra.mxu0 0.0
    %3195 = vmatprep.subr.mxu0 0.0
    %3196 = vmatpush1.msra.mxu0 0.0
    %3197 = vmatprep.subr.mxu0 0.0
    %3198 = vmatpush1.msra.mxu0 0.0
    %3199 = vmatprep.subr.mxu0 0.0
    %3200 = vmatpush1.msra.mxu0 0.0
    %3201 = vmatprep.subr.mxu0 0.0
    %3202 = vmatpush1.msra.mxu0 0.0
    %3203 = vmatprep.mubr.f32.mxu0 0.0
    %3204 = vmatmul.mubr.f32.gmra.mrb[0].mxu0 %v2936
    %v3205 = vpop.f32.mrb[0].mxu0
    %v3206 = vadd.f32 0.0, %v3205
    %v3207 = vpop.f32.mrb[0].mxu0
    %3208 = vmatprep.mubr.f32.mxu0 0.0
    %3209 = vmatmul.mubr.f32.gmra.mrb[0].mxu0 %v2937
    %v3210 = vpop.f32.mrb[0].mxu0
    %v3211 = vadd.f32 0.0, %v3210
    %v3212 = vpop.f32.mrb[0].mxu0
    %3213 = vdwg.mxu0
    %v3214 = vadd.f32 %v3114, %v3206
    %v3215 = vadd.f32 %v3119, %v3211
    %s3216 = scalar_lea.vmem [#allocation4], 7
    %v3217 = vld [vmem:[%s3216] sm:$0x1]
    %v3219 = vlaneseq
    %v3220 = vshrl.u32 %v3219, 7
    %v3221 = vsub.s32 0, %v3220
    %v3222 = vrot.slane %v3217, %v3221
    %v3224 = vadd.f32 %v3214, %v3222
    %v3225 = vadd.f32 %v3215, %v3222
    %v3226 = vmax.f32 %v3224, 0.0
    %v3227 = vmax.f32 %v3225, 0.0
    %s3228 = scalar_lea.vmem [#allocation6], 896
    %v3229 = vld [vmem:[%s3228] sm:$0xff]
    %v3230 = vld [vmem:[%s3228 + $0x8] sm:$0xff]
    %v3231 = vld [vmem:[%s3228 + $0x10] sm:$0xff]
    %v3232 = vld [vmem:[%s3228 + $0x18] sm:$0xff]
    %v3233 = vld [vmem:[%s3228 + $0x20] sm:$0xff]
    %v3234 = vld [vmem:[%s3228 + $0x28] sm:$0xff]
    %v3235 = vld [vmem:[%s3228 + $0x30] sm:$0xff]
    %v3236 = vld [vmem:[%s3228 + $0x38] sm:$0xff]
    %v3237 = vld [vmem:[%s3228 + $0x40] sm:$0xff]
    %v3238 = vld [vmem:[%s3228 + $0x48] sm:$0xff]
    %v3239 = vld [vmem:[%s3228 + $0x50] sm:$0xff]
    %v3240 = vld [vmem:[%s3228 + $0x58] sm:$0xff]
    %v3241 = vld [vmem:[%s3228 + $0x60] sm:$0xff]
    %v3242 = vld [vmem:[%s3228 + $0x68] sm:$0xff]
    %v3243 = vld [vmem:[%s3228 + $0x70] sm:$0xff]
    %v3244 = vld [vmem:[%s3228 + $0x78] sm:$0xff]
    %s3245 = scalar_lea.vmem [#allocation7], 7
    %v3246 = vld [vmem:[%s3245] sm:$0x1]
    %v3248 = vlaneseq
    %v3249 = vshrl.u32 %v3248, 7
    %v3250 = vsub.s32 0, %v3249
    %v3251 = vrot.slane %v3246, %v3250
    %3253 = vmatprep.subr.mxu0 0.0
    %3254 = vmatpush1.msra.mxu0 %v3229
    %3255 = vmatprep.subr.mxu0 0.0
    %3256 = vmatpush1.msra.mxu0 %v3230
    %3257 = vmatprep.subr.mxu0 0.0
    %3258 = vmatpush1.msra.mxu0 %v3231
    %3259 = vmatprep.subr.mxu0 0.0
    %3260 = vmatpush1.msra.mxu0 %v3232
    %3261 = vmatprep.subr.mxu0 0.0
    %3262 = vmatpush1.msra.mxu0 %v3233
    %3263 = vmatprep.subr.mxu0 0.0
    %3264 = vmatpush1.msra.mxu0 %v3234
    %3265 = vmatprep.subr.mxu0 0.0
    %3266 = vmatpush1.msra.mxu0 %v3235
    %3267 = vmatprep.subr.mxu0 0.0
    %3268 = vmatpush1.msra.mxu0 %v3236
    %3269 = vmatprep.subr.mxu0 0.0
    %3270 = vmatpush1.msra.mxu0 %v3237
    %3271 = vmatprep.subr.mxu0 0.0
    %3272 = vmatpush1.msra.mxu0 %v3238
    %3273 = vmatprep.subr.mxu0 0.0
    %3274 = vmatpush1.msra.mxu0 %v3239
    %3275 = vmatprep.subr.mxu0 0.0
    %3276 = vmatpush1.msra.mxu0 %v3240
    %3277 = vmatprep.subr.mxu0 0.0
    %3278 = vmatpush1.msra.mxu0 %v3241
    %3279 = vmatprep.subr.mxu0 0.0
    %3280 = vmatpush1.msra.mxu0 %v3242
    %3281 = vmatprep.subr.mxu0 0.0
    %3282 = vmatpush1.msra.mxu0 %v3243
    %3283 = vmatprep.subr.mxu0 0.0
    %3284 = vmatpush1.msra.mxu0 %v3244
    %3285 = vmatprep.subr.mxu0 0.0
    %3286 = vmatpush1.msra.mxu0 0.0
    %3287 = vmatprep.subr.mxu0 0.0
    %3288 = vmatpush1.msra.mxu0 0.0
    %3289 = vmatprep.subr.mxu0 0.0
    %3290 = vmatpush1.msra.mxu0 0.0
    %3291 = vmatprep.subr.mxu0 0.0
    %3292 = vmatpush1.msra.mxu0 0.0
    %3293 = vmatprep.subr.mxu0 0.0
    %3294 = vmatpush1.msra.mxu0 0.0
    %3295 = vmatprep.subr.mxu0 0.0
    %3296 = vmatpush1.msra.mxu0 0.0
    %3297 = vmatprep.subr.mxu0 0.0
    %3298 = vmatpush1.msra.mxu0 0.0
    %3299 = vmatprep.subr.mxu0 0.0
    %3300 = vmatpush1.msra.mxu0 0.0
    %3301 = vmatprep.subr.mxu0 0.0
    %3302 = vmatpush1.msra.mxu0 0.0
    %3303 = vmatprep.subr.mxu0 0.0
    %3304 = vmatpush1.msra.mxu0 0.0
    %3305 = vmatprep.subr.mxu0 0.0
    %3306 = vmatpush1.msra.mxu0 0.0
    %3307 = vmatprep.subr.mxu0 0.0
    %3308 = vmatpush1.msra.mxu0 0.0
    %3309 = vmatprep.subr.mxu0 0.0
    %3310 = vmatpush1.msra.mxu0 0.0
    %3311 = vmatprep.subr.mxu0 0.0
    %3312 = vmatpush1.msra.mxu0 0.0
    %3313 = vmatprep.subr.mxu0 0.0
    %3314 = vmatpush1.msra.mxu0 0.0
    %3315 = vmatprep.subr.mxu0 0.0
    %3316 = vmatpush1.msra.mxu0 0.0
    %3317 = vmatprep.mubr.f32.mxu0 0.0
    %3318 = vmatmul.mubr.f32.gmra.mrb[0].mxu0 %v3226
    %v3319 = vpop.f32.mrb[0].mxu0
    %v3320 = vadd.f32 %v3251, %v3319
    %v3321 = vpop.f32.mrb[0].mxu0
    %3322 = vmatprep.mubr.f32.mxu0 0.0
    %3323 = vmatmul.mubr.f32.gmra.mrb[0].mxu0 %v3227
    %v3324 = vpop.f32.mrb[0].mxu0
    %v3325 = vadd.f32 %v3251, %v3324
    %v3326 = vpop.f32.mrb[0].mxu0
    %3327 = vdwg.mxu0
    %v3328 = vadd.f32 %v2922, %v3320
    %v3329 = vadd.f32 %v2923, %v3325
    %3330 = vst [vmem:[%s5] sm:$0xff] %v3328
    %3331 = vst [vmem:[%s5 + $0x8] sm:$0xff] %v3329
    // Predicated region
    $region38: #{dblock_forward.1} parent=1 // pred_check
      _
    $region39: #{dblock_forward.1} parent=1 // pred_check_branch
      %3333 = sbr.rel (0) target = $region41
    $region40: #{dblock_forward.1} parent=1 // pred_region
      _
    $region41: #{dblock_forward.1} parent=1 // pred_fallthru
      _
    // Predicated region
    $region42: #{dblock_forward.1} parent=1 // pred_check
      _
    $region43: #{dblock_forward.1} parent=1 // pred_check_branch
      %3335 = sbr.rel (0) target = $region45
    $region44: #{dblock_forward.1} parent=1 // pred_region
      _
    $region45: #{dblock_forward.1} parent=1 // pred_fallthru
      _
    %3336 = vsyncpa [#allocation3], 1
    %3337 = vsyncpa [#allocation5], 1
    %3338 = vsyncpa [#allocation8], 1

</llo_original>
